<compile_context>
chip_gen: v6e
topology: v6e:2x2x1
jax: 0.10.0
libtpu: 0.0.40
codegen_flags: <defaults>
</compile_context>

<pallas_src>
import jax
import jax.numpy as jnp
from jax.experimental import pallas as pl
from jax.experimental.pallas import tpu as pltpu

# ---- module hyper-parameters (from the PyTorch file) ----
n_embd = 64 * 3               # 192
block_size = 32 * 4           # 128 (max seq len for the causal mask)
n_head = 4 * 3                # 12
head_size = n_embd // n_head  # 16
LN_EPS = 1e-5
NEG_INF = -1e9                # finite masked logit; exp() underflows to exactly 0 in f32


def _layernorm(x, gamma, beta):
    # PyTorch nn.LayerNorm: biased variance, eps=1e-5
    mean = jnp.mean(x, axis=-1, keepdims=True)
    var = jnp.mean((x - mean) ** 2, axis=-1, keepdims=True)
    return (x - mean) * jax.lax.rsqrt(var + LN_EPS) * gamma + beta


# ----------------------- fused transformer-block kernel -----------------------
def _make_kernel(Bb, T):
    C, H, hs = n_embd, n_head, head_size
    M = Bb * T

    def fused_block_kernel(x_ref,
                           g1_ref, b1_ref, wqkv_ref, bqkv_ref, wo_ref, bo_ref,
                           g2_ref, b2_ref, w1_ref, bf1_ref, w2_ref, bf2_ref,
                           out_ref):
        # flatten the (Bb, T, C) tile to (M, C) so all dense matmuls see M rows
        x = x_ref[...].reshape(M, C)

        # ---- LN1 + fused QKV projection (one lane-dense (M, 3C) matmul) ----
        xln = _layernorm(x, g1_ref[...], b1_ref[...])
        qkv = jnp.dot(xln, wqkv_ref[...],
                      preferred_element_type=jnp.float32) + bqkv_ref[...]    # (M, 3C)

        # Packed column order is head-major: [head h | q(16) k(16) v(16)].
        # One (T, 3*hs) slab per (batch, head) -> (Bb*H, T, 3*hs).
        slabs = []
        for b in range(Bb):
            qb = qkv[b * T:(b + 1) * T] if Bb > 1 else qkv
            for h in range(H):
                slabs.append(qb[:, h * 3 * hs:(h + 1) * 3 * hs])
        ph = jnp.stack(slabs, axis=0)                 # (Bb*H, T, 3*hs)
        q = ph[:, :, 0 * hs:1 * hs]                   # scale already folded into W_q
        k = ph[:, :, 1 * hs:2 * hs]
        v = ph[:, :, 2 * hs:3 * hs]

        # ---- in-kernel causal additive bias (no HBM mask input) ----
        row = jax.lax.broadcasted_iota(jnp.int32, (T, T), 0)
        col = jax.lax.broadcasted_iota(jnp.int32, (T, T), 1)
        bias = jnp.where(col <= row, 0.0, NEG_INF).astype(jnp.float32)

        # ---- head-batched attention ----
        s = jnp.einsum('htd,hsd->hts', q, k,
                       preferred_element_type=jnp.float32)                  # (BbH,T,T)
        s = s + bias                                   # broadcast over batch*head
        s = s - jnp.max(s, axis=-1, keepdims=True)
        p = jnp.exp(s)
        denom = jnp.sum(p, axis=-1, keepdims=True)
        r = pl.reciprocal(denom, approx=True)          # EUP vrcp (free slot)
        r = r * (2.0 - denom * r)                      # one Newton step -> ~f32 exact
        att = p * r
        o = jnp.einsum('hts,hsd->htd', att, v,
                       preferred_element_type=jnp.float32)                  # (BbH,T,hs)

        # ---- merge heads along lanes, then ONE dense W_o matmul ----
        rows_out = []
        for b in range(Bb):
            rows_out.append(jnp.concatenate([o[b * H + h] for h in range(H)],
                                            axis=-1))                       # (T, C)
        merged = rows_out[0] if Bb == 1 else jnp.concatenate(rows_out, axis=0)
        x = x + jnp.dot(merged, wo_ref[...],
                        preferred_element_type=jnp.float32) + bo_ref[...]   # residual 1

        # ---- LN2 + FeedForward ----
        xln2 = _layernorm(x, g2_ref[...], b2_ref[...])
        h1 = jnp.dot(xln2, w1_ref[...],
                     preferred_element_type=jnp.float32) + bf1_ref[...]
        h1 = jnp.maximum(h1, 0.0)                      # ReLU
        y2 = jnp.dot(h1, w2_ref[...],
                     preferred_element_type=jnp.float32) + bf2_ref[...]
        out_ref[...] = (x + y2).reshape(Bb, T, C)      # residual 2

    return fused_block_kernel


# ------------------------------ host-side wrapper ------------------------------
def _const_map(ndim):
    return lambda i: (0,) * ndim


def _pack_qkv(p, scale):
    """Pack W_q|W_k|W_v into one (C, 3C) matrix, head-major, q-scale folded in."""
    C, H, hs = n_embd, n_head, head_size
    wq = (p["wq"] * scale).reshape(C, H, hs)
    wk = p["wk"].reshape(C, H, hs)
    wv = p["wv"].reshape(C, H, hs)
    wqkv = jnp.stack([wq, wk, wv], axis=2).reshape(C, 3 * C)   # cols: h, then q|k|v, then d
    bq = (p["bq"] * scale).reshape(H, hs)
    bk = p["bk"].reshape(H, hs)
    bv = p["bv"].reshape(H, hs)
    bqkv = jnp.stack([bq, bk, bv], axis=1).reshape(1, 3 * C)
    return wqkv, bqkv


def _choose_bb(B, T):
    """Batch-block size: fill the MXU M dim (>=256 rows if possible) while
    keeping >=2 grid steps and a conservative per-step VMEM estimate."""
    C, H = n_embd, n_head
    best = 1
    for bb in range(1, B + 1):
        if B % bb:
            continue
        if B >= 2 and B // bb < 2:          # keep >=2 steps (megacore / v7x dual-TC)
            continue
        rows = bb * T
        est = 4 * (4 * rows * C + rows * 3 * C + bb * H * T * T
                   + rows * 4 * C + 2 * rows * C)      # rough f32 bytes per step
        if est > 24 * 1024 * 1024:           # conservative: fits v7x's smaller VMEM
            continue
        best = bb
        if rows >= 256:
            break
    return best


def transformer_block(x, params):
    """x: (B, T, C) float32, T <= block_size."""
    B, T, C = x.shape
    assert C == n_embd and T <= block_size
    scale = float(C) ** -0.5                      # reference scales by C**-0.5 (C = n_embd)
    wqkv, bqkv = _pack_qkv(params, scale)
    Bb = _choose_bb(B, T)

    weights = (params["ln1_g"], params["ln1_b"], wqkv, bqkv,
               params["wo"], params["bo"],
               params["ln2_g"], params["ln2_b"],
               params["w1"], params["b1"], params["w2"], params["b2"])

    in_specs = [pl.BlockSpec((Bb, T, C), lambda i: (i, 0, 0))]
    in_specs += [pl.BlockSpec(w.shape, _const_map(w.ndim)) for w in weights]

    return pl.pallas_call(
        _make_kernel(Bb, T),
        out_shape=jax.ShapeDtypeStruct((B, T, C), jnp.float32),
        grid=(B // Bb,),
        in_specs=in_specs,
        out_specs=pl.BlockSpec((Bb, T, C), lambda i: (i, 0, 0)),
        compiler_params=pltpu.CompilerParams(
            dimension_semantics=("parallel",),
            vmem_limit_bytes=32 * 1024 * 1024),
    )(x, *weights)


def init_params(key):
    ks = jax.random.split(key, 8)

    def w(k, shape):
        return jax.random.normal(k, shape, jnp.float32) * 0.02

    C = n_embd
    return {
        "ln1_g": jnp.ones((1, C), jnp.float32),
        "ln1_b": jnp.zeros((1, C), jnp.float32),
        # per-head q/k/v Linears packed along the output dim (head order preserved)
        "wq": w(ks[0], (C, C)), "bq": jnp.zeros((1, C), jnp.float32),
        "wk": w(ks[1], (C, C)), "bk": jnp.zeros((1, C), jnp.float32),
        "wv": w(ks[2], (C, C)), "bv": jnp.zeros((1, C), jnp.float32),
        "wo": w(ks[3], (C, C)), "bo": jnp.zeros((1, C), jnp.float32),
        "ln2_g": jnp.ones((1, C), jnp.float32),
        "ln2_b": jnp.zeros((1, C), jnp.float32),
        "w1": w(ks[4], (C, 4 * C)), "b1": jnp.zeros((1, 4 * C), jnp.float32),
        "w2": w(ks[5], (4 * C, C)), "b2": jnp.zeros((1, C), jnp.float32),
    }


# ------------------------------ pure-JAX reference ------------------------------
def reference_block(x, p):
    B, T, C = x.shape
    xln = _layernorm(x, p["ln1_g"], p["ln1_b"])
    q = xln @ p["wq"] + p["bq"]
    k = xln @ p["wk"] + p["bk"]
    v = xln @ p["wv"] + p["bv"]
    q = q.reshape(B, T, n_head, head_size).transpose(0, 2, 1, 3)
    k = k.reshape(B, T, n_head, head_size).transpose(0, 2, 1, 3)
    v = v.reshape(B, T, n_head, head_size).transpose(0, 2, 1, 3)
    s = jnp.einsum("bhtd,bhsd->bhts", q, k) * (C ** -0.5)
    mask = jnp.tril(jnp.ones((T, T), bool))
    s = jnp.where(mask, s, -jnp.inf)
    w = jax.nn.softmax(s, axis=-1)
    o = jnp.einsum("bhts,bhsd->bhtd", w, v).transpose(0, 2, 1, 3).reshape(B, T, C)
    x = x + (o @ p["wo"] + p["bo"])
    xln2 = _layernorm(x, p["ln2_g"], p["ln2_b"])
    h = jnp.maximum(xln2 @ p["w1"] + p["b1"], 0.0)
    x = x + (h @ p["w2"] + p["b2"])
    return x


if __name__ == "__main__":
    key = jax.random.PRNGKey(0)
    kx, kp = jax.random.split(key)
    B, T, C = 2, 8, n_embd                         # small seq; C fixed by module (192)
    x = jax.random.normal(kx, (B, T, C), jnp.float32)
    params = init_params(kp)

    block_fn = jax.jit(transformer_block)
    out = block_fn(x, params)
    out = jax.block_until_ready(out)

    ref = reference_block(x, params)
    assert out.shape == (B, T, C)
    assert jnp.allclose(out, ref, atol=2e-4, rtol=2e-4), "mismatch vs JAX reference"
    print("KERNEL_OK")
</pallas_src>

<mosaic_0001>
module attributes {stable_mosaic.version = 11 : i64} {
  func.func @fused_block_kernel(%arg0: i32, %arg1: memref<1x8x192xf32, #tpu.memory_space<vmem>>, %arg2: memref<1x192xf32, #tpu.memory_space<vmem>>, %arg3: memref<1x192xf32, #tpu.memory_space<vmem>>, %arg4: memref<192x576xf32, #tpu.memory_space<vmem>>, %arg5: memref<1x576xf32, #tpu.memory_space<vmem>>, %arg6: memref<192x192xf32, #tpu.memory_space<vmem>>, %arg7: memref<1x192xf32, #tpu.memory_space<vmem>>, %arg8: memref<1x192xf32, #tpu.memory_space<vmem>>, %arg9: memref<1x192xf32, #tpu.memory_space<vmem>>, %arg10: memref<192x768xf32, #tpu.memory_space<vmem>>, %arg11: memref<1x768xf32, #tpu.memory_space<vmem>>, %arg12: memref<768x192xf32, #tpu.memory_space<vmem>>, %arg13: memref<1x192xf32, #tpu.memory_space<vmem>>, %arg14: memref<1x8x192xf32, #tpu.memory_space<vmem>>) attributes {dimension_semantics = [#tpu.dimension_semantics<parallel>], iteration_bounds = array<i64: 2>, scalar_prefetch = 0 : i64, scratch_operands = 0 : i64, tpu.core_type = #tpu.core_type<tc>, window_params = [{transform_indices = @transform_0, window_bounds = array<i64: 1, 8, 192>}, {pipeline_mode = #tpu.pipeline_mode<synchronous>, transform_indices = @transform_1, window_bounds = array<i64: 1, 192>}, {pipeline_mode = #tpu.pipeline_mode<synchronous>, transform_indices = @transform_2, window_bounds = array<i64: 1, 192>}, {pipeline_mode = #tpu.pipeline_mode<synchronous>, transform_indices = @transform_3, window_bounds = array<i64: 192, 576>}, {pipeline_mode = #tpu.pipeline_mode<synchronous>, transform_indices = @transform_4, window_bounds = array<i64: 1, 576>}, {pipeline_mode = #tpu.pipeline_mode<synchronous>, transform_indices = @transform_5, window_bounds = array<i64: 192, 192>}, {pipeline_mode = #tpu.pipeline_mode<synchronous>, transform_indices = @transform_6, window_bounds = array<i64: 1, 192>}, {pipeline_mode = #tpu.pipeline_mode<synchronous>, transform_indices = @transform_7, window_bounds = array<i64: 1, 192>}, {pipeline_mode = #tpu.pipeline_mode<synchronous>, transform_indices = @transform_8, window_bounds = array<i64: 1, 192>}, {pipeline_mode = #tpu.pipeline_mode<synchronous>, transform_indices = @transform_9, window_bounds = array<i64: 192, 768>}, {pipeline_mode = #tpu.pipeline_mode<synchronous>, transform_indices = @transform_10, window_bounds = array<i64: 1, 768>}, {pipeline_mode = #tpu.pipeline_mode<synchronous>, transform_indices = @transform_11, window_bounds = array<i64: 768, 192>}, {pipeline_mode = #tpu.pipeline_mode<synchronous>, transform_indices = @transform_12, window_bounds = array<i64: 1, 192>}, {transform_indices = @transform_13, window_bounds = array<i64: 1, 8, 192>}]} {
    %c0 = arith.constant 0 : index
    %c0_0 = arith.constant 0 : index
    %c0_1 = arith.constant 0 : index
    %0 = vector.load %arg1[%c0, %c0_0, %c0_1] : memref<1x8x192xf32, #tpu.memory_space<vmem>>, vector<1x8x192xf32>
    %1 = vector.shape_cast %0 : vector<1x8x192xf32> to vector<8x192xf32>
    %c0_2 = arith.constant 0 : index
    %c0_3 = arith.constant 0 : index
    %2 = vector.load %arg2[%c0_2, %c0_3] : memref<1x192xf32, #tpu.memory_space<vmem>>, vector<1x192xf32>
    %c0_4 = arith.constant 0 : index
    %c0_5 = arith.constant 0 : index
    %3 = vector.load %arg3[%c0_4, %c0_5] : memref<1x192xf32, #tpu.memory_space<vmem>>, vector<1x192xf32>
    %cst = arith.constant dense<0.000000e+00> : vector<8xf32>
    %4 = vector.multi_reduction <add>, %1, %cst [1] : vector<8x192xf32> to vector<8xf32>
    %5 = vector.shape_cast %4 : vector<8xf32> to vector<8x1xf32>
    %cst_6 = arith.constant 1.920000e+02 : f32
    %6 = vector.broadcast %cst_6 : f32 to vector<8x1xf32>
    %7 = arith.divf %5, %6 : vector<8x1xf32>
    %8 = vector.broadcast %7 : vector<8x1xf32> to vector<8x192xf32>
    %9 = arith.subf %1, %8 : vector<8x192xf32>
    %10 = arith.mulf %9, %9 : vector<8x192xf32>
    %cst_7 = arith.constant dense<0.000000e+00> : vector<8xf32>
    %11 = vector.multi_reduction <add>, %10, %cst_7 [1] : vector<8x192xf32> to vector<8xf32>
    %12 = vector.shape_cast %11 : vector<8xf32> to vector<8x1xf32>
    %cst_8 = arith.constant 1.920000e+02 : f32
    %13 = vector.broadcast %cst_8 : f32 to vector<8x1xf32>
    %14 = arith.divf %12, %13 : vector<8x1xf32>
    %15 = vector.broadcast %7 : vector<8x1xf32> to vector<8x192xf32>
    %16 = arith.subf %1, %15 : vector<8x192xf32>
    %cst_9 = arith.constant 9.99999974E-6 : f32
    %17 = vector.broadcast %cst_9 : f32 to vector<8x1xf32>
    %18 = arith.addf %14, %17 : vector<8x1xf32>
    %19 = math.rsqrt %18 : vector<8x1xf32>
    %20 = vector.broadcast %19 : vector<8x1xf32> to vector<8x192xf32>
    %21 = arith.mulf %16, %20 : vector<8x192xf32>
    %22 = vector.broadcast %2 : vector<1x192xf32> to vector<8x192xf32>
    %23 = arith.mulf %21, %22 : vector<8x192xf32>
    %24 = vector.broadcast %3 : vector<1x192xf32> to vector<8x192xf32>
    %25 = arith.addf %23, %24 : vector<8x192xf32>
    %c0_10 = arith.constant 0 : index
    %c0_11 = arith.constant 0 : index
    %26 = vector.load %arg4[%c0_10, %c0_11] : memref<192x576xf32, #tpu.memory_space<vmem>>, vector<192x576xf32>
    %cst_12 = arith.constant dense<0.000000e+00> : vector<8x576xf32>
    %27 = tpu.matmul %25, %26, %cst_12 {dimension_numbers = #tpu.dot_dimension_numbers<[1], [0], [0], [1], [0, 0, 1, 1], [], []>} : vector<8x192xf32>, vector<192x576xf32>, vector<8x576xf32> -> vector<8x576xf32>
    %c0_13 = arith.constant 0 : index
    %c0_14 = arith.constant 0 : index
    %28 = vector.load %arg5[%c0_13, %c0_14] : memref<1x576xf32, #tpu.memory_space<vmem>>, vector<1x576xf32>
    %29 = vector.broadcast %28 : vector<1x576xf32> to vector<8x576xf32>
    %30 = arith.addf %27, %29 : vector<8x576xf32>
    %31 = vector.extract_strided_slice %30 {offsets = [0, 0], sizes = [8, 48], strides = [1, 1]} : vector<8x576xf32> to vector<8x48xf32>
    %32 = vector.extract_strided_slice %30 {offsets = [0, 48], sizes = [8, 48], strides = [1, 1]} : vector<8x576xf32> to vector<8x48xf32>
    %33 = vector.extract_strided_slice %30 {offsets = [0, 96], sizes = [8, 48], strides = [1, 1]} : vector<8x576xf32> to vector<8x48xf32>
    %34 = vector.extract_strided_slice %30 {offsets = [0, 144], sizes = [8, 48], strides = [1, 1]} : vector<8x576xf32> to vector<8x48xf32>
    %35 = vector.extract_strided_slice %30 {offsets = [0, 192], sizes = [8, 48], strides = [1, 1]} : vector<8x576xf32> to vector<8x48xf32>
    %36 = vector.extract_strided_slice %30 {offsets = [0, 240], sizes = [8, 48], strides = [1, 1]} : vector<8x576xf32> to vector<8x48xf32>
    %37 = vector.extract_strided_slice %30 {offsets = [0, 288], sizes = [8, 48], strides = [1, 1]} : vector<8x576xf32> to vector<8x48xf32>
    %38 = vector.extract_strided_slice %30 {offsets = [0, 336], sizes = [8, 48], strides = [1, 1]} : vector<8x576xf32> to vector<8x48xf32>
    %39 = vector.extract_strided_slice %30 {offsets = [0, 384], sizes = [8, 48], strides = [1, 1]} : vector<8x576xf32> to vector<8x48xf32>
    %40 = vector.extract_strided_slice %30 {offsets = [0, 432], sizes = [8, 48], strides = [1, 1]} : vector<8x576xf32> to vector<8x48xf32>
    %41 = vector.extract_strided_slice %30 {offsets = [0, 480], sizes = [8, 48], strides = [1, 1]} : vector<8x576xf32> to vector<8x48xf32>
    %42 = vector.extract_strided_slice %30 {offsets = [0, 528], sizes = [8, 48], strides = [1, 1]} : vector<8x576xf32> to vector<8x48xf32>
    %43 = vector.shape_cast %31 : vector<8x48xf32> to vector<1x8x48xf32>
    %44 = vector.shape_cast %32 : vector<8x48xf32> to vector<1x8x48xf32>
    %45 = vector.shape_cast %33 : vector<8x48xf32> to vector<1x8x48xf32>
    %46 = vector.shape_cast %34 : vector<8x48xf32> to vector<1x8x48xf32>
    %47 = vector.shape_cast %35 : vector<8x48xf32> to vector<1x8x48xf32>
    %48 = vector.shape_cast %36 : vector<8x48xf32> to vector<1x8x48xf32>
    %49 = vector.shape_cast %37 : vector<8x48xf32> to vector<1x8x48xf32>
    %50 = vector.shape_cast %38 : vector<8x48xf32> to vector<1x8x48xf32>
    %51 = vector.shape_cast %39 : vector<8x48xf32> to vector<1x8x48xf32>
    %52 = vector.shape_cast %40 : vector<8x48xf32> to vector<1x8x48xf32>
    %53 = vector.shape_cast %41 : vector<8x48xf32> to vector<1x8x48xf32>
    %54 = vector.shape_cast %42 : vector<8x48xf32> to vector<1x8x48xf32>
    %55 = tpu.concatenate %43, %44, %45, %46, %47, %48, %49, %50, %51, %52, %53, %54 in 0 : vector<1x8x48xf32>, vector<1x8x48xf32>, vector<1x8x48xf32>, vector<1x8x48xf32>, vector<1x8x48xf32>, vector<1x8x48xf32>, vector<1x8x48xf32>, vector<1x8x48xf32>, vector<1x8x48xf32>, vector<1x8x48xf32>, vector<1x8x48xf32>, vector<1x8x48xf32> -> vector<12x8x48xf32>
    %56 = vector.extract_strided_slice %55 {offsets = [0, 0, 0], sizes = [12, 8, 16], strides = [1, 1, 1]} : vector<12x8x48xf32> to vector<12x8x16xf32>
    %57 = vector.extract_strided_slice %55 {offsets = [0, 0, 16], sizes = [12, 8, 16], strides = [1, 1, 1]} : vector<12x8x48xf32> to vector<12x8x16xf32>
    %58 = vector.extract_strided_slice %55 {offsets = [0, 0, 32], sizes = [12, 8, 16], strides = [1, 1, 1]} : vector<12x8x48xf32> to vector<12x8x16xf32>
    %59 = tpu.iota {dimensions = array<i32: 0>} : vector<8x8xi32>
    %60 = tpu.iota {dimensions = array<i32: 1>} : vector<8x8xi32>
    %61 = arith.cmpi sle, %60, %59 : vector<8x8xi32>
    %cst_15 = arith.constant 0.000000e+00 : f32
    %cst_16 = arith.constant -1.000000e+09 : f32
    %62 = vector.broadcast %cst_15 : f32 to vector<8x8xf32>
    %63 = vector.broadcast %cst_16 : f32 to vector<8x8xf32>
    %64 = arith.select %61, %62, %63 : vector<8x8xi1>, vector<8x8xf32>
    "tpu.trace_start"() <{level = 10 : i32, message = "htd,hsd->hts"}> : () -> ()
    %cst_17 = arith.constant dense<0.000000e+00> : vector<12x8x8xf32>
    %65 = tpu.matmul %56, %57, %cst_17 {dimension_numbers = #tpu.dot_dimension_numbers<[2], [2], [1], [1], [0, 0, 0, 1, 1, 1], [0], [0]>} : vector<12x8x16xf32>, vector<12x8x16xf32>, vector<12x8x8xf32> -> vector<12x8x8xf32>
    "tpu.trace_stop"() : () -> ()
    %66 = vector.shape_cast %64 : vector<8x8xf32> to vector<1x8x8xf32>
    %67 = vector.broadcast %66 : vector<1x8x8xf32> to vector<12x8x8xf32>
    %68 = arith.addf %65, %67 : vector<12x8x8xf32>
    %cst_18 = arith.constant dense<0xFF800000> : vector<12x8xf32>
    %69 = vector.multi_reduction <maximumf>, %68, %cst_18 [2] : vector<12x8x8xf32> to vector<12x8xf32>
    %70 = vector.shape_cast %69 : vector<12x8xf32> to vector<12x8x1xf32>
    %71 = vector.broadcast %70 : vector<12x8x1xf32> to vector<12x8x8xf32>
    %72 = arith.subf %68, %71 : vector<12x8x8xf32>
    %73 = math.exp %72 : vector<12x8x8xf32>
    %cst_19 = arith.constant dense<0.000000e+00> : vector<12x8xf32>
    %74 = vector.multi_reduction <add>, %73, %cst_19 [2] : vector<12x8x8xf32> to vector<12x8xf32>
    %75 = vector.shape_cast %74 : vector<12x8xf32> to vector<12x8x1xf32>
    %76 = tpu.reciprocal %75 {approx = true} : vector<12x8x1xf32> -> vector<12x8x1xf32>
    %77 = arith.mulf %75, %76 : vector<12x8x1xf32>
    %cst_20 = arith.constant 2.000000e+00 : f32
    %78 = vector.broadcast %cst_20 : f32 to vector<12x8x1xf32>
    %79 = arith.subf %78, %77 : vector<12x8x1xf32>
    %80 = arith.mulf %76, %79 : vector<12x8x1xf32>
    %81 = vector.broadcast %80 : vector<12x8x1xf32> to vector<12x8x8xf32>
    %82 = arith.mulf %73, %81 : vector<12x8x8xf32>
    "tpu.trace_start"() <{level = 10 : i32, message = "hts,hsd->htd"}> : () -> ()
    %cst_21 = arith.constant dense<0.000000e+00> : vector<12x8x16xf32>
    %83 = tpu.matmul %82, %58, %cst_21 {dimension_numbers = #tpu.dot_dimension_numbers<[2], [1], [1], [2], [0, 0, 0, 1, 1, 2], [0], [0]>} : vector<12x8x8xf32>, vector<12x8x16xf32>, vector<12x8x16xf32> -> vector<12x8x16xf32>
    "tpu.trace_stop"() : () -> ()
    %84 = vector.extract_strided_slice %83 {offsets = [0, 0, 0], sizes = [1, 8, 16], strides = [1, 1, 1]} : vector<12x8x16xf32> to vector<1x8x16xf32>
    %85 = vector.shape_cast %84 : vector<1x8x16xf32> to vector<8x16xf32>
    %86 = vector.extract_strided_slice %83 {offsets = [1, 0, 0], sizes = [1, 8, 16], strides = [1, 1, 1]} : vector<12x8x16xf32> to vector<1x8x16xf32>
    %87 = vector.shape_cast %86 : vector<1x8x16xf32> to vector<8x16xf32>
    %88 = vector.extract_strided_slice %83 {offsets = [2, 0, 0], sizes = [1, 8, 16], strides = [1, 1, 1]} : vector<12x8x16xf32> to vector<1x8x16xf32>
    %89 = vector.shape_cast %88 : vector<1x8x16xf32> to vector<8x16xf32>
    %90 = vector.extract_strided_slice %83 {offsets = [3, 0, 0], sizes = [1, 8, 16], strides = [1, 1, 1]} : vector<12x8x16xf32> to vector<1x8x16xf32>
    %91 = vector.shape_cast %90 : vector<1x8x16xf32> to vector<8x16xf32>
    %92 = vector.extract_strided_slice %83 {offsets = [4, 0, 0], sizes = [1, 8, 16], strides = [1, 1, 1]} : vector<12x8x16xf32> to vector<1x8x16xf32>
    %93 = vector.shape_cast %92 : vector<1x8x16xf32> to vector<8x16xf32>
    %94 = vector.extract_strided_slice %83 {offsets = [5, 0, 0], sizes = [1, 8, 16], strides = [1, 1, 1]} : vector<12x8x16xf32> to vector<1x8x16xf32>
    %95 = vector.shape_cast %94 : vector<1x8x16xf32> to vector<8x16xf32>
    %96 = vector.extract_strided_slice %83 {offsets = [6, 0, 0], sizes = [1, 8, 16], strides = [1, 1, 1]} : vector<12x8x16xf32> to vector<1x8x16xf32>
    %97 = vector.shape_cast %96 : vector<1x8x16xf32> to vector<8x16xf32>
    %98 = vector.extract_strided_slice %83 {offsets = [7, 0, 0], sizes = [1, 8, 16], strides = [1, 1, 1]} : vector<12x8x16xf32> to vector<1x8x16xf32>
    %99 = vector.shape_cast %98 : vector<1x8x16xf32> to vector<8x16xf32>
    %100 = vector.extract_strided_slice %83 {offsets = [8, 0, 0], sizes = [1, 8, 16], strides = [1, 1, 1]} : vector<12x8x16xf32> to vector<1x8x16xf32>
    %101 = vector.shape_cast %100 : vector<1x8x16xf32> to vector<8x16xf32>
    %102 = vector.extract_strided_slice %83 {offsets = [9, 0, 0], sizes = [1, 8, 16], strides = [1, 1, 1]} : vector<12x8x16xf32> to vector<1x8x16xf32>
    %103 = vector.shape_cast %102 : vector<1x8x16xf32> to vector<8x16xf32>
    %104 = vector.extract_strided_slice %83 {offsets = [10, 0, 0], sizes = [1, 8, 16], strides = [1, 1, 1]} : vector<12x8x16xf32> to vector<1x8x16xf32>
    %105 = vector.shape_cast %104 : vector<1x8x16xf32> to vector<8x16xf32>
    %106 = vector.extract_strided_slice %83 {offsets = [11, 0, 0], sizes = [1, 8, 16], strides = [1, 1, 1]} : vector<12x8x16xf32> to vector<1x8x16xf32>
    %107 = vector.shape_cast %106 : vector<1x8x16xf32> to vector<8x16xf32>
    %108 = tpu.concatenate %85, %87, %89, %91, %93, %95, %97, %99, %101, %103, %105, %107 in 1 : vector<8x16xf32>, vector<8x16xf32>, vector<8x16xf32>, vector<8x16xf32>, vector<8x16xf32>, vector<8x16xf32>, vector<8x16xf32>, vector<8x16xf32>, vector<8x16xf32>, vector<8x16xf32>, vector<8x16xf32>, vector<8x16xf32> -> vector<8x192xf32>
    %c0_22 = arith.constant 0 : index
    %c0_23 = arith.constant 0 : index
    %109 = vector.load %arg6[%c0_22, %c0_23] : memref<192x192xf32, #tpu.memory_space<vmem>>, vector<192x192xf32>
    %cst_24 = arith.constant dense<0.000000e+00> : vector<8x192xf32>
    %110 = tpu.matmul %108, %109, %cst_24 {dimension_numbers = #tpu.dot_dimension_numbers<[1], [0], [0], [1], [0, 0, 1, 1], [], []>} : vector<8x192xf32>, vector<192x192xf32>, vector<8x192xf32> -> vector<8x192xf32>
    %111 = arith.addf %1, %110 : vector<8x192xf32>
    %c0_25 = arith.constant 0 : index
    %c0_26 = arith.constant 0 : index
    %112 = vector.load %arg7[%c0_25, %c0_26] : memref<1x192xf32, #tpu.memory_space<vmem>>, vector<1x192xf32>
    %113 = vector.broadcast %112 : vector<1x192xf32> to vector<8x192xf32>
    %114 = arith.addf %111, %113 : vector<8x192xf32>
    %c0_27 = arith.constant 0 : index
    %c0_28 = arith.constant 0 : index
    %115 = vector.load %arg8[%c0_27, %c0_28] : memref<1x192xf32, #tpu.memory_space<vmem>>, vector<1x192xf32>
    %c0_29 = arith.constant 0 : index
    %c0_30 = arith.constant 0 : index
    %116 = vector.load %arg9[%c0_29, %c0_30] : memref<1x192xf32, #tpu.memory_space<vmem>>, vector<1x192xf32>
    %cst_31 = arith.constant dense<0.000000e+00> : vector<8xf32>
    %117 = vector.multi_reduction <add>, %114, %cst_31 [1] : vector<8x192xf32> to vector<8xf32>
    %118 = vector.shape_cast %117 : vector<8xf32> to vector<8x1xf32>
    %cst_32 = arith.constant 1.920000e+02 : f32
    %119 = vector.broadcast %cst_32 : f32 to vector<8x1xf32>
    %120 = arith.divf %118, %119 : vector<8x1xf32>
    %121 = vector.broadcast %120 : vector<8x1xf32> to vector<8x192xf32>
    %122 = arith.subf %114, %121 : vector<8x192xf32>
    %123 = arith.mulf %122, %122 : vector<8x192xf32>
    %cst_33 = arith.constant dense<0.000000e+00> : vector<8xf32>
    %124 = vector.multi_reduction <add>, %123, %cst_33 [1] : vector<8x192xf32> to vector<8xf32>
    %125 = vector.shape_cast %124 : vector<8xf32> to vector<8x1xf32>
    %cst_34 = arith.constant 1.920000e+02 : f32
    %126 = vector.broadcast %cst_34 : f32 to vector<8x1xf32>
    %127 = arith.divf %125, %126 : vector<8x1xf32>
    %128 = vector.broadcast %120 : vector<8x1xf32> to vector<8x192xf32>
    %129 = arith.subf %114, %128 : vector<8x192xf32>
    %cst_35 = arith.constant 9.99999974E-6 : f32
    %130 = vector.broadcast %cst_35 : f32 to vector<8x1xf32>
    %131 = arith.addf %127, %130 : vector<8x1xf32>
    %132 = math.rsqrt %131 : vector<8x1xf32>
    %133 = vector.broadcast %132 : vector<8x1xf32> to vector<8x192xf32>
    %134 = arith.mulf %129, %133 : vector<8x192xf32>
    %135 = vector.broadcast %115 : vector<1x192xf32> to vector<8x192xf32>
    %136 = arith.mulf %134, %135 : vector<8x192xf32>
    %137 = vector.broadcast %116 : vector<1x192xf32> to vector<8x192xf32>
    %138 = arith.addf %136, %137 : vector<8x192xf32>
    %c0_36 = arith.constant 0 : index
    %c0_37 = arith.constant 0 : index
    %139 = vector.load %arg10[%c0_36, %c0_37] : memref<192x768xf32, #tpu.memory_space<vmem>>, vector<192x768xf32>
    %cst_38 = arith.constant dense<0.000000e+00> : vector<8x768xf32>
    %140 = tpu.matmul %138, %139, %cst_38 {dimension_numbers = #tpu.dot_dimension_numbers<[1], [0], [0], [1], [0, 0, 1, 1], [], []>} : vector<8x192xf32>, vector<192x768xf32>, vector<8x768xf32> -> vector<8x768xf32>
    %c0_39 = arith.constant 0 : index
    %c0_40 = arith.constant 0 : index
    %141 = vector.load %arg11[%c0_39, %c0_40] : memref<1x768xf32, #tpu.memory_space<vmem>>, vector<1x768xf32>
    %142 = vector.broadcast %141 : vector<1x768xf32> to vector<8x768xf32>
    %143 = arith.addf %140, %142 : vector<8x768xf32>
    %cst_41 = arith.constant 0.000000e+00 : f32
    %144 = vector.broadcast %cst_41 : f32 to vector<8x768xf32>
    %145 = arith.maximumf %143, %144 : vector<8x768xf32>
    %c0_42 = arith.constant 0 : index
    %c0_43 = arith.constant 0 : index
    %146 = vector.load %arg12[%c0_42, %c0_43] : memref<768x192xf32, #tpu.memory_space<vmem>>, vector<768x192xf32>
    %cst_44 = arith.constant dense<0.000000e+00> : vector<8x192xf32>
    %147 = tpu.matmul %145, %146, %cst_44 {dimension_numbers = #tpu.dot_dimension_numbers<[1], [0], [0], [1], [0, 0, 1, 1], [], []>} : vector<8x768xf32>, vector<768x192xf32>, vector<8x192xf32> -> vector<8x192xf32>
    %c0_45 = arith.constant 0 : index
    %c0_46 = arith.constant 0 : index
    %148 = vector.load %arg13[%c0_45, %c0_46] : memref<1x192xf32, #tpu.memory_space<vmem>>, vector<1x192xf32>
    %149 = vector.broadcast %148 : vector<1x192xf32> to vector<8x192xf32>
    %150 = arith.addf %147, %149 : vector<8x192xf32>
    %151 = arith.addf %114, %150 : vector<8x192xf32>
    %152 = vector.shape_cast %151 : vector<8x192xf32> to vector<1x8x192xf32>
    %c0_47 = arith.constant 0 : index
    %c0_48 = arith.constant 0 : index
    %c0_49 = arith.constant 0 : index
    %153 = vector.load %arg14[%c0_47, %c0_48, %c0_49] : memref<1x8x192xf32, #tpu.memory_space<vmem>>, vector<1x8x192xf32>
    tpu.vector_store %arg14[%c0_47, %c0_48, %c0_49], %152 {strides = array<i32>} : memref<1x8x192xf32, #tpu.memory_space<vmem>>, vector<1x8x192xf32>,
    return
  }
  func.func @transform_0(%arg0: i32) -> (i32, i32, i32) {
    %c0_i32 = arith.constant 0 : i32
    %c0_i32_0 = arith.constant 0 : i32
    %c0_i32_1 = arith.constant 0 : i32
    return %arg0, %c0_i32, %c0_i32_0 : i32, i32, i32
  }
  func.func @transform_1(%arg0: i32) -> (i32, i32) {
    %c0_i32 = arith.constant 0 : i32
    %c0_i32_0 = arith.constant 0 : i32
    %c0_i32_1 = arith.constant 0 : i32
    return %c0_i32, %c0_i32_0 : i32, i32
  }
  func.func @transform_2(%arg0: i32) -> (i32, i32) {
    %c0_i32 = arith.constant 0 : i32
    %c0_i32_0 = arith.constant 0 : i32
    %c0_i32_1 = arith.constant 0 : i32
    return %c0_i32, %c0_i32_0 : i32, i32
  }
  func.func @transform_3(%arg0: i32) -> (i32, i32) {
    %c0_i32 = arith.constant 0 : i32
    %c0_i32_0 = arith.constant 0 : i32
    %c0_i32_1 = arith.constant 0 : i32
    return %c0_i32, %c0_i32_0 : i32, i32
  }
  func.func @transform_4(%arg0: i32) -> (i32, i32) {
    %c0_i32 = arith.constant 0 : i32
    %c0_i32_0 = arith.constant 0 : i32
    %c0_i32_1 = arith.constant 0 : i32
    return %c0_i32, %c0_i32_0 : i32, i32
  }
  func.func @transform_5(%arg0: i32) -> (i32, i32) {
    %c0_i32 = arith.constant 0 : i32
    %c0_i32_0 = arith.constant 0 : i32
    %c0_i32_1 = arith.constant 0 : i32
    return %c0_i32, %c0_i32_0 : i32, i32
  }
  func.func @transform_6(%arg0: i32) -> (i32, i32) {
    %c0_i32 = arith.constant 0 : i32
    %c0_i32_0 = arith.constant 0 : i32
    %c0_i32_1 = arith.constant 0 : i32
    return %c0_i32, %c0_i32_0 : i32, i32
  }
  func.func @transform_7(%arg0: i32) -> (i32, i32) {
    %c0_i32 = arith.constant 0 : i32
    %c0_i32_0 = arith.constant 0 : i32
    %c0_i32_1 = arith.constant 0 : i32
    return %c0_i32, %c0_i32_0 : i32, i32
  }
  func.func @transform_8(%arg0: i32) -> (i32, i32) {
    %c0_i32 = arith.constant 0 : i32
    %c0_i32_0 = arith.constant 0 : i32
    %c0_i32_1 = arith.constant 0 : i32
    return %c0_i32, %c0_i32_0 : i32, i32
  }
  func.func @transform_9(%arg0: i32) -> (i32, i32) {
    %c0_i32 = arith.constant 0 : i32
    %c0_i32_0 = arith.constant 0 : i32
    %c0_i32_1 = arith.constant 0 : i32
    return %c0_i32, %c0_i32_0 : i32, i32
  }
  func.func @transform_10(%arg0: i32) -> (i32, i32) {
    %c0_i32 = arith.constant 0 : i32
    %c0_i32_0 = arith.constant 0 : i32
    %c0_i32_1 = arith.constant 0 : i32
    return %c0_i32, %c0_i32_0 : i32, i32
  }
  func.func @transform_11(%arg0: i32) -> (i32, i32) {
    %c0_i32 = arith.constant 0 : i32
    %c0_i32_0 = arith.constant 0 : i32
    %c0_i32_1 = arith.constant 0 : i32
    return %c0_i32, %c0_i32_0 : i32, i32
  }
  func.func @transform_12(%arg0: i32) -> (i32, i32) {
    %c0_i32 = arith.constant 0 : i32
    %c0_i32_0 = arith.constant 0 : i32
    %c0_i32_1 = arith.constant 0 : i32
    return %c0_i32, %c0_i32_0 : i32, i32
  }
  func.func @transform_13(%arg0: i32) -> (i32, i32, i32) {
    %c0_i32 = arith.constant 0 : i32
    %c0_i32_0 = arith.constant 0 : i32
    %c0_i32_1 = arith.constant 0 : i32
    return %arg0, %c0_i32, %c0_i32_0 : i32, i32, i32
  }
}

</mosaic_0001>

<llo_original>
// kernel: transformer_block.1
$region0: #{transformer_block.1}
  #allocation0 [shape = 'u32[]', space=smem, size = 0x4, offset = 0x4, fixed_abs, tag = 'smem constant byte address 0x4 - core index']
  #allocation1 [shape = 'u32[144,128]{1,0:T(1,128)}', space=vmem, size = 0x12000, scoped, tag = 'internal scratch']
  %s0 = inlined_call_operand.vmem [shape: f32[2,8,192], index: 0, kind: input, shape index: {}]
  %s1 = inlined_call_operand.vmem [shape: f32[1,192], index: 1, kind: input, shape index: {}]
  %s2 = inlined_call_operand.vmem [shape: f32[1,192], index: 2, kind: input, shape index: {}]
  %s3 = inlined_call_operand.vmem [shape: f32[192,576], index: 3, kind: input, shape index: {}]
  %s4 = inlined_call_operand.vmem [shape: f32[1,576], index: 4, kind: input, shape index: {}]
  %s5 = inlined_call_operand.vmem [shape: f32[192,192], index: 5, kind: input, shape index: {}]
  %s6 = inlined_call_operand.vmem [shape: f32[1,192], index: 6, kind: input, shape index: {}]
  %s7 = inlined_call_operand.vmem [shape: f32[1,192], index: 7, kind: input, shape index: {}]
  %s8 = inlined_call_operand.vmem [shape: f32[1,192], index: 8, kind: input, shape index: {}]
  %s9 = inlined_call_operand.vmem [shape: f32[192,768], index: 9, kind: input, shape index: {}]
  %s10 = inlined_call_operand.vmem [shape: f32[1,768], index: 10, kind: input, shape index: {}]
  %s11 = inlined_call_operand.vmem [shape: f32[768,192], index: 11, kind: input, shape index: {}]
  %s12 = inlined_call_operand.vmem [shape: f32[1,192], index: 12, kind: input, shape index: {}]
  %s13 = inlined_call_operand.hbm [shape: f32[2,8,192], index: 13, kind: output, shape index: {}]
  %s14 = sld [smem:[#allocation0]]
  $region85: #{transformer_block.1} parent=0
    _
  %s16 = ssub.s32 1, %s14
  %s17 = scalar_select 0, %s16, %s14
  $region1: #{transformer_block.1} parent=0
    #allocation2 [shape = 'u8[16384]{0}', space=vmem, size = 0x4000, scoped, tag = 'output window, operand 0']
    #allocation3 [shape = 's32[2]{0}', space=sflag, size = 0x8, scoped, tag = 'scoped memory for transformer_block.1']
    %18 = vsyncpa [#allocation3], 0
    %s19 = scalar_lea.sflag [#allocation3], 1
    %20 = vsyncpa %s19, 0
    loop: start=0, step=1, limit=4
    $region2: #{transformer_block.1} parent=1 // loop_pre_header
      _
    $region3: #{transformer_block.1} parent=1 // loop_header
      %s22 = sphi 0, %s26
      %p23 = scmp.ge.s32.totalorder %s22, 4
      %s32 = sphi 0, %s34
      %s35 = sphi 0, %s32
      %s36 = sphi 0, %s35
      %s52 = sphi 0, %s36
      %s56 = sphi 0, %s56
      %s58 = sphi 0, %s56
      %s59 = sphi 0, %s58
      %s73 = sphi 0, %s59
      %s77 = sphi 0, %s77
      %s79 = sphi 0, %s77
      %s80 = sphi 0, %s79
      %s94 = sphi 0, %s80
      %s98 = sphi 0, %s98
      %s100 = sphi 0, %s98
      %s101 = sphi 0, %s100
      %s115 = sphi 0, %s101
      %s119 = sphi 0, %s119
      %s121 = sphi 0, %s119
      %s122 = sphi 0, %s121
      %s136 = sphi 0, %s122
      %s140 = sphi 0, %s140
      %s142 = sphi 0, %s140
      %s143 = sphi 0, %s142
      %s157 = sphi 0, %s143
      %s161 = sphi 0, %s161
      %s163 = sphi 0, %s161
      %s164 = sphi 0, %s163
      %s178 = sphi 0, %s164
      %s182 = sphi 0, %s182
      %s184 = sphi 0, %s182
      %s185 = sphi 0, %s184
      %s199 = sphi 0, %s185
      %s203 = sphi 0, %s203
      %s205 = sphi 0, %s203
      %s206 = sphi 0, %s205
      %s220 = sphi 0, %s206
      %s224 = sphi 0, %s224
      %s226 = sphi 0, %s224
      %s227 = sphi 0, %s226
      %s241 = sphi 0, %s227
      %s245 = sphi 0, %s245
      %s247 = sphi 0, %s245
      %s248 = sphi 0, %s247
      %s262 = sphi 0, %s248
      %s266 = sphi 0, %s266
      %s268 = sphi 0, %s266
      %s269 = sphi 0, %s268
      %s283 = sphi 0, %s269
      %s287 = sphi 0, %s287
      %s289 = sphi 0, %s287
      %s290 = sphi 0, %s289
      %s304 = sphi 0, %s290
      %s310 = sphi 0, %s312
      %s313 = sphi 0, %s310
      %s314 = sphi 0, %s313
      %s330 = sphi 0, %s314
    $region4: #{transformer_block.1} parent=1 // loop_header_branch
      %25 = sbr.rel (%p23) target = $region8
    $region5: #{transformer_block.1} parent=1 // loop_body
      %s27 = ssub.s32 %s22, 1
      %s28 = ssub.s32 %s22, 2
      %s29 = sadd.s32 %s22, 1
      %s30 = ssub.s32 %s22, %s29
      %p31 = scmp.eq.s32.totalorder %s30, 0
      %s33 = sadd.s32 %s32, 1
      %s34 = scalar_select %p31, %s32, %s33
      %p37 = pneg %p31
      %p38 = scmp.eq.s32.totalorder %s22, 1
      %p39 = por %p37, %p38
      %p40 = scmp.ne.s32.totalorder %s32, %s35
      %p41 = scmp.eq.s32.totalorder %s22, 0
      %p42 = por %p40, %p41
      %p43 = scmp.ne.s32.totalorder %s32, %s35
      %p44 = scmp.eq.s32.totalorder %s27, 1
      %p45 = por %p43, %p44
      %p46 = scmp.ne.s32.totalorder %s35, %s36
      %p47 = scmp.eq.s32.totalorder %s27, 0
      %p48 = por %p46, %p47
      %p49 = scmp.ne.s32.totalorder %s35, %s36
      %p50 = scmp.eq.s32.totalorder %s28, 1
      %p51 = por %p49, %p50
      %p53 = scmp.ne.s32.totalorder %s36, %s52
      %p54 = scmp.eq.s32.totalorder %s28, 0
      %p55 = por %p53, %p54
      %s57 = sadd.s32 %s56, 1
      %p60 = scmp.eq.s32.totalorder %s22, 1
      %p61 = scmp.ne.s32.totalorder %s56, %s58
      %p62 = scmp.eq.s32.totalorder %s22, 0
      %p63 = por %p61, %p62
      %p64 = scmp.ne.s32.totalorder %s56, %s58
      %p65 = scmp.eq.s32.totalorder %s27, 1
      %p66 = por %p64, %p65
      %p67 = scmp.ne.s32.totalorder %s58, %s59
      %p68 = scmp.eq.s32.totalorder %s27, 0
      %p69 = por %p67, %p68
      %p70 = scmp.ne.s32.totalorder %s58, %s59
      %p71 = scmp.eq.s32.totalorder %s28, 1
      %p72 = por %p70, %p71
      %p74 = scmp.ne.s32.totalorder %s59, %s73
      %p75 = scmp.eq.s32.totalorder %s28, 0
      %p76 = por %p74, %p75
      %s78 = sadd.s32 %s77, 1
      %p81 = scmp.eq.s32.totalorder %s22, 1
      %p82 = scmp.ne.s32.totalorder %s77, %s79
      %p83 = scmp.eq.s32.totalorder %s22, 0
      %p84 = por %p82, %p83
      %p85 = scmp.ne.s32.totalorder %s77, %s79
      %p86 = scmp.eq.s32.totalorder %s27, 1
      %p87 = por %p85, %p86
      %p88 = scmp.ne.s32.totalorder %s79, %s80
      %p89 = scmp.eq.s32.totalorder %s27, 0
      %p90 = por %p88, %p89
      %p91 = scmp.ne.s32.totalorder %s79, %s80
      %p92 = scmp.eq.s32.totalorder %s28, 1
      %p93 = por %p91, %p92
      %p95 = scmp.ne.s32.totalorder %s80, %s94
      %p96 = scmp.eq.s32.totalorder %s28, 0
      %p97 = por %p95, %p96
      %s99 = sadd.s32 %s98, 1
      %p102 = scmp.eq.s32.totalorder %s22, 1
      %p103 = scmp.ne.s32.totalorder %s98, %s100
      %p104 = scmp.eq.s32.totalorder %s22, 0
      %p105 = por %p103, %p104
      %p106 = scmp.ne.s32.totalorder %s98, %s100
      %p107 = scmp.eq.s32.totalorder %s27, 1
      %p108 = por %p106, %p107
      %p109 = scmp.ne.s32.totalorder %s100, %s101
      %p110 = scmp.eq.s32.totalorder %s27, 0
      %p111 = por %p109, %p110
      %p112 = scmp.ne.s32.totalorder %s100, %s101
      %p113 = scmp.eq.s32.totalorder %s28, 1
      %p114 = por %p112, %p113
      %p116 = scmp.ne.s32.totalorder %s101, %s115
      %p117 = scmp.eq.s32.totalorder %s28, 0
      %p118 = por %p116, %p117
      %s120 = sadd.s32 %s119, 1
      %p123 = scmp.eq.s32.totalorder %s22, 1
      %p124 = scmp.ne.s32.totalorder %s119, %s121
      %p125 = scmp.eq.s32.totalorder %s22, 0
      %p126 = por %p124, %p125
      %p127 = scmp.ne.s32.totalorder %s119, %s121
      %p128 = scmp.eq.s32.totalorder %s27, 1
      %p129 = por %p127, %p128
      %p130 = scmp.ne.s32.totalorder %s121, %s122
      %p131 = scmp.eq.s32.totalorder %s27, 0
      %p132 = por %p130, %p131
      %p133 = scmp.ne.s32.totalorder %s121, %s122
      %p134 = scmp.eq.s32.totalorder %s28, 1
      %p135 = por %p133, %p134
      %p137 = scmp.ne.s32.totalorder %s122, %s136
      %p138 = scmp.eq.s32.totalorder %s28, 0
      %p139 = por %p137, %p138
      %s141 = sadd.s32 %s140, 1
      %p144 = scmp.eq.s32.totalorder %s22, 1
      %p145 = scmp.ne.s32.totalorder %s140, %s142
      %p146 = scmp.eq.s32.totalorder %s22, 0
      %p147 = por %p145, %p146
      %p148 = scmp.ne.s32.totalorder %s140, %s142
      %p149 = scmp.eq.s32.totalorder %s27, 1
      %p150 = por %p148, %p149
      %p151 = scmp.ne.s32.totalorder %s142, %s143
      %p152 = scmp.eq.s32.totalorder %s27, 0
      %p153 = por %p151, %p152
      %p154 = scmp.ne.s32.totalorder %s142, %s143
      %p155 = scmp.eq.s32.totalorder %s28, 1
      %p156 = por %p154, %p155
      %p158 = scmp.ne.s32.totalorder %s143, %s157
      %p159 = scmp.eq.s32.totalorder %s28, 0
      %p160 = por %p158, %p159
      %s162 = sadd.s32 %s161, 1
      %p165 = scmp.eq.s32.totalorder %s22, 1
      %p166 = scmp.ne.s32.totalorder %s161, %s163
      %p167 = scmp.eq.s32.totalorder %s22, 0
      %p168 = por %p166, %p167
      %p169 = scmp.ne.s32.totalorder %s161, %s163
      %p170 = scmp.eq.s32.totalorder %s27, 1
      %p171 = por %p169, %p170
      %p172 = scmp.ne.s32.totalorder %s163, %s164
      %p173 = scmp.eq.s32.totalorder %s27, 0
      %p174 = por %p172, %p173
      %p175 = scmp.ne.s32.totalorder %s163, %s164
      %p176 = scmp.eq.s32.totalorder %s28, 1
      %p177 = por %p175, %p176
      %p179 = scmp.ne.s32.totalorder %s164, %s178
      %p180 = scmp.eq.s32.totalorder %s28, 0
      %p181 = por %p179, %p180
      %s183 = sadd.s32 %s182, 1
      %p186 = scmp.eq.s32.totalorder %s22, 1
      %p187 = scmp.ne.s32.totalorder %s182, %s184
      %p188 = scmp.eq.s32.totalorder %s22, 0
      %p189 = por %p187, %p188
      %p190 = scmp.ne.s32.totalorder %s182, %s184
      %p191 = scmp.eq.s32.totalorder %s27, 1
      %p192 = por %p190, %p191
      %p193 = scmp.ne.s32.totalorder %s184, %s185
      %p194 = scmp.eq.s32.totalorder %s27, 0
      %p195 = por %p193, %p194
      %p196 = scmp.ne.s32.totalorder %s184, %s185
      %p197 = scmp.eq.s32.totalorder %s28, 1
      %p198 = por %p196, %p197
      %p200 = scmp.ne.s32.totalorder %s185, %s199
      %p201 = scmp.eq.s32.totalorder %s28, 0
      %p202 = por %p200, %p201
      %s204 = sadd.s32 %s203, 1
      %p207 = scmp.eq.s32.totalorder %s22, 1
      %p208 = scmp.ne.s32.totalorder %s203, %s205
      %p209 = scmp.eq.s32.totalorder %s22, 0
      %p210 = por %p208, %p209
      %p211 = scmp.ne.s32.totalorder %s203, %s205
      %p212 = scmp.eq.s32.totalorder %s27, 1
      %p213 = por %p211, %p212
      %p214 = scmp.ne.s32.totalorder %s205, %s206
      %p215 = scmp.eq.s32.totalorder %s27, 0
      %p216 = por %p214, %p215
      %p217 = scmp.ne.s32.totalorder %s205, %s206
      %p218 = scmp.eq.s32.totalorder %s28, 1
      %p219 = por %p217, %p218
      %p221 = scmp.ne.s32.totalorder %s206, %s220
      %p222 = scmp.eq.s32.totalorder %s28, 0
      %p223 = por %p221, %p222
      %s225 = sadd.s32 %s224, 1
      %p228 = scmp.eq.s32.totalorder %s22, 1
      %p229 = scmp.ne.s32.totalorder %s224, %s226
      %p230 = scmp.eq.s32.totalorder %s22, 0
      %p231 = por %p229, %p230
      %p232 = scmp.ne.s32.totalorder %s224, %s226
      %p233 = scmp.eq.s32.totalorder %s27, 1
      %p234 = por %p232, %p233
      %p235 = scmp.ne.s32.totalorder %s226, %s227
      %p236 = scmp.eq.s32.totalorder %s27, 0
      %p237 = por %p235, %p236
      %p238 = scmp.ne.s32.totalorder %s226, %s227
      %p239 = scmp.eq.s32.totalorder %s28, 1
      %p240 = por %p238, %p239
      %p242 = scmp.ne.s32.totalorder %s227, %s241
      %p243 = scmp.eq.s32.totalorder %s28, 0
      %p244 = por %p242, %p243
      %s246 = sadd.s32 %s245, 1
      %p249 = scmp.eq.s32.totalorder %s22, 1
      %p250 = scmp.ne.s32.totalorder %s245, %s247
      %p251 = scmp.eq.s32.totalorder %s22, 0
      %p252 = por %p250, %p251
      %p253 = scmp.ne.s32.totalorder %s245, %s247
      %p254 = scmp.eq.s32.totalorder %s27, 1
      %p255 = por %p253, %p254
      %p256 = scmp.ne.s32.totalorder %s247, %s248
      %p257 = scmp.eq.s32.totalorder %s27, 0
      %p258 = por %p256, %p257
      %p259 = scmp.ne.s32.totalorder %s247, %s248
      %p260 = scmp.eq.s32.totalorder %s28, 1
      %p261 = por %p259, %p260
      %p263 = scmp.ne.s32.totalorder %s248, %s262
      %p264 = scmp.eq.s32.totalorder %s28, 0
      %p265 = por %p263, %p264
      %s267 = sadd.s32 %s266, 1
      %p270 = scmp.eq.s32.totalorder %s22, 1
      %p271 = scmp.ne.s32.totalorder %s266, %s268
      %p272 = scmp.eq.s32.totalorder %s22, 0
      %p273 = por %p271, %p272
      %p274 = scmp.ne.s32.totalorder %s266, %s268
      %p275 = scmp.eq.s32.totalorder %s27, 1
      %p276 = por %p274, %p275
      %p277 = scmp.ne.s32.totalorder %s268, %s269
      %p278 = scmp.eq.s32.totalorder %s27, 0
      %p279 = por %p277, %p278
      %p280 = scmp.ne.s32.totalorder %s268, %s269
      %p281 = scmp.eq.s32.totalorder %s28, 1
      %p282 = por %p280, %p281
      %p284 = scmp.ne.s32.totalorder %s269, %s283
      %p285 = scmp.eq.s32.totalorder %s28, 0
      %p286 = por %p284, %p285
      %s288 = sadd.s32 %s287, 1
      %p291 = scmp.eq.s32.totalorder %s22, 1
      %p292 = scmp.ne.s32.totalorder %s287, %s289
      %p293 = scmp.eq.s32.totalorder %s22, 0
      %p294 = por %p292, %p293
      %p295 = scmp.ne.s32.totalorder %s287, %s289
      %p296 = scmp.eq.s32.totalorder %s27, 1
      %p297 = por %p295, %p296
      %p298 = scmp.ne.s32.totalorder %s289, %s290
      %p299 = scmp.eq.s32.totalorder %s27, 0
      %p300 = por %p298, %p299
      %p301 = scmp.ne.s32.totalorder %s289, %s290
      %p302 = scmp.eq.s32.totalorder %s28, 1
      %p303 = por %p301, %p302
      %p305 = scmp.ne.s32.totalorder %s290, %s304
      %p306 = scmp.eq.s32.totalorder %s28, 0
      %p307 = por %p305, %p306
      %s308 = ssub.s32 %s22, %s29
      %p309 = scmp.eq.s32.totalorder %s308, 0
      %s311 = sadd.s32 %s310, 1
      %s312 = scalar_select %p309, %s310, %s311
      %p315 = pneg %p309
      %p316 = scmp.eq.s32.totalorder %s22, 1
      %p317 = por %p315, %p316
      %p318 = scmp.ne.s32.totalorder %s310, %s313
      %p319 = scmp.eq.s32.totalorder %s22, 0
      %p320 = por %p318, %p319
      %p321 = scmp.ne.s32.totalorder %s310, %s313
      %p322 = scmp.eq.s32.totalorder %s27, 1
      %p323 = por %p321, %p322
      %p324 = scmp.ne.s32.totalorder %s313, %s314
      %p325 = scmp.eq.s32.totalorder %s27, 0
      %p326 = por %p324, %p325
      %p327 = scmp.ne.s32.totalorder %s313, %s314
      %p328 = scmp.eq.s32.totalorder %s28, 1
      %p329 = por %p327, %p328
      %p331 = scmp.ne.s32.totalorder %s314, %s330
      %p332 = scmp.eq.s32.totalorder %s28, 0
      %p333 = por %p331, %p332
      %p334 = scmp.le.s32.totalorder 1, %s22
      %p335 = scmp.lt.s32.totalorder %s22, 3
      %p336 = pnand %p334, %p335
      %p337 = pneg %p336
      // Predicated region
      $region9: #{transformer_block.1} parent=5 // pred_check
        _
      $region10: #{transformer_block.1} parent=5 // pred_check_branch
        %339 = sbr.rel (%p336) target = $region12
      $region11: #{transformer_block.1} parent=5 // pred_region
        %s340 = ssub.s32 %s22, 1
        // Predicated region
        $region13: #{transformer_block.1} parent=11 // pred_check
          %p341 = pneg %p69
        $region14: #{transformer_block.1} parent=11 // pred_check_branch
          %343 = sbr.rel (%p341) target = $region16
        $region15: #{transformer_block.1} parent=11 // pred_region
          _
        $region16: #{transformer_block.1} parent=11 // pred_fallthru
          _
        // Predicated region
        $region17: #{transformer_block.1} parent=11 // pred_check
          %p344 = pneg %p90
        $region18: #{transformer_block.1} parent=11 // pred_check_branch
          %346 = sbr.rel (%p344) target = $region20
        $region19: #{transformer_block.1} parent=11 // pred_region
          _
        $region20: #{transformer_block.1} parent=11 // pred_fallthru
          _
        // Predicated region
        $region21: #{transformer_block.1} parent=11 // pred_check
          %p347 = pneg %p111
        $region22: #{transformer_block.1} parent=11 // pred_check_branch
          %349 = sbr.rel (%p347) target = $region24
        $region23: #{transformer_block.1} parent=11 // pred_region
          _
        $region24: #{transformer_block.1} parent=11 // pred_fallthru
          _
        // Predicated region
        $region25: #{transformer_block.1} parent=11 // pred_check
          %p350 = pneg %p132
        $region26: #{transformer_block.1} parent=11 // pred_check_branch
          %352 = sbr.rel (%p350) target = $region28
        $region27: #{transformer_block.1} parent=11 // pred_region
          _
        $region28: #{transformer_block.1} parent=11 // pred_fallthru
          _
        // Predicated region
        $region29: #{transformer_block.1} parent=11 // pred_check
          %p353 = pneg %p153
        $region30: #{transformer_block.1} parent=11 // pred_check_branch
          %355 = sbr.rel (%p353) target = $region32
        $region31: #{transformer_block.1} parent=11 // pred_region
          _
        $region32: #{transformer_block.1} parent=11 // pred_fallthru
          _
        // Predicated region
        $region33: #{transformer_block.1} parent=11 // pred_check
          %p356 = pneg %p174
        $region34: #{transformer_block.1} parent=11 // pred_check_branch
          %358 = sbr.rel (%p356) target = $region36
        $region35: #{transformer_block.1} parent=11 // pred_region
          _
        $region36: #{transformer_block.1} parent=11 // pred_fallthru
          _
        // Predicated region
        $region37: #{transformer_block.1} parent=11 // pred_check
          %p359 = pneg %p195
        $region38: #{transformer_block.1} parent=11 // pred_check_branch
          %361 = sbr.rel (%p359) target = $region40
        $region39: #{transformer_block.1} parent=11 // pred_region
          _
        $region40: #{transformer_block.1} parent=11 // pred_fallthru
          _
        // Predicated region
        $region41: #{transformer_block.1} parent=11 // pred_check
          %p362 = pneg %p216
        $region42: #{transformer_block.1} parent=11 // pred_check_branch
          %364 = sbr.rel (%p362) target = $region44
        $region43: #{transformer_block.1} parent=11 // pred_region
          _
        $region44: #{transformer_block.1} parent=11 // pred_fallthru
          _
        // Predicated region
        $region45: #{transformer_block.1} parent=11 // pred_check
          %p365 = pneg %p237
        $region46: #{transformer_block.1} parent=11 // pred_check_branch
          %367 = sbr.rel (%p365) target = $region48
        $region47: #{transformer_block.1} parent=11 // pred_region
          _
        $region48: #{transformer_block.1} parent=11 // pred_fallthru
          _
        // Predicated region
        $region49: #{transformer_block.1} parent=11 // pred_check
          %p368 = pneg %p258
        $region50: #{transformer_block.1} parent=11 // pred_check_branch
          %370 = sbr.rel (%p368) target = $region52
        $region51: #{transformer_block.1} parent=11 // pred_region
          _
        $region52: #{transformer_block.1} parent=11 // pred_fallthru
          _
        // Predicated region
        $region53: #{transformer_block.1} parent=11 // pred_check
          %p371 = pneg %p279
        $region54: #{transformer_block.1} parent=11 // pred_check_branch
          %373 = sbr.rel (%p371) target = $region56
        $region55: #{transformer_block.1} parent=11 // pred_region
          _
        $region56: #{transformer_block.1} parent=11 // pred_fallthru
          _
        // Predicated region
        $region57: #{transformer_block.1} parent=11 // pred_check
          %p374 = pneg %p300
        $region58: #{transformer_block.1} parent=11 // pred_check_branch
          %376 = sbr.rel (%p374) target = $region60
        $region59: #{transformer_block.1} parent=11 // pred_region
          _
        $region60: #{transformer_block.1} parent=11 // pred_fallthru
          _
      $region12: #{transformer_block.1} parent=5 // pred_fallthru
        _
      %p377 = scmp.lt.s32.totalorder %s22, 2
      // Predicated region
      $region61: #{transformer_block.1} parent=5 // pred_check
        %p378 = pneg %p377
      $region62: #{transformer_block.1} parent=5 // pred_check_branch
        %380 = sbr.rel (%p378) target = $region64
      $region63: #{transformer_block.1} parent=5 // pred_region
        // Predicated region
        $region65: #{transformer_block.1} parent=63 // pred_check
          %p381 = pneg %p42
        $region66: #{transformer_block.1} parent=63 // pred_check_branch
          %383 = sbr.rel (%p381) target = $region68
        $region67: #{transformer_block.1} parent=63 // pred_region
          %p384 = scmp.lt.s32.totalorder %s22, 1
          %s385 = scalar_select %p384, %s22, 1
          %s386 = smul.addr %s385, 2
          %s387 = smul.addr %s386, 8
          %s388 = scalar_lea.vmem %s0, %s387
        $region68: #{transformer_block.1} parent=63 // pred_fallthru
          _
      $region64: #{transformer_block.1} parent=5 // pred_fallthru
        _
      %p389 = scmp.le.s32.totalorder 1, %s22
      %p390 = scmp.lt.s32.totalorder %s22, 3
      %p391 = pnand %p389, %p390
      %p392 = pneg %p391
      // Predicated region
      $region69: #{transformer_block.1} parent=5 // pred_check
        _
      $region70: #{transformer_block.1} parent=5 // pred_check_branch
        %394 = sbr.rel (%p391) target = $region72
      $region71: #{transformer_block.1} parent=5 // pred_region
        %s395 = ssub.s32 %s22, 1
        %p396 = scmp.lt.s32.totalorder %s27, 1
        %s397 = scalar_select %p396, %s27, 1
        %s398 = smul.addr %s397, 2
        %s399 = smul.addr %s398, 8
        %s400 = scalar_lea.vmem %s0, %s399
        %p401 = pneg %p48
        %p402 = pneg %p45
        %p403 = pneg %p69
        %p404 = pneg %p66
        %p405 = pneg %p90
        %p406 = pneg %p87
        %p407 = pneg %p111
        %p408 = pneg %p108
        %p409 = pneg %p132
        %p410 = pneg %p129
        %p411 = pneg %p153
        %p412 = pneg %p150
        %p413 = pneg %p174
        %p414 = pneg %p171
        %p415 = pneg %p195
        %p416 = pneg %p192
        %p417 = pneg %p216
        %p418 = pneg %p213
        %p419 = pneg %p237
        %p420 = pneg %p234
        %p421 = pneg %p258
        %p422 = pneg %p255
        %p423 = pneg %p279
        %p424 = pneg %p276
        %p425 = pneg %p300
        %p426 = pneg %p297
        %p427 = pneg %p326
        %p428 = pneg %p323
        %s429 = sand.u32 %s313, 1
        %s430 = scalar_lea.sflag [#allocation3], %s429
        %s431 = sand.u32 %s313, 1
        %s432 = smul.addr %s431, 16
        %s433 = scalar_lea.vmem [#allocation2], %s432
        %p434 = scmp.lt.s32.totalorder %s27, 1
        %s435 = scalar_select %p434, %s27, 1
        %s436 = smul.addr %s435, 2
        %s437 = smul.addr %s436, 8
        %s438 = scalar_lea.vmem %s0, %s437
        %v439 = vld [vmem:[%s438] sm:$0xff]
        %v440 = vld [vmem:[%s438 + $0x8] sm:$0xff]
        %v441 = vld [vmem:[%s1] sm:$0x3]
        %v442 = vld [vmem:[%s2] sm:$0x3]
        %vm443 = vcmask 523264
        %v444 = vsel %vm443, %v440, 0.0
        %v445 = vadd.f32 %v439, %v444
        %446 = vadd.xlane.f32.xlu0 %v445
        %v447 = vpop.xlane.xlu0 %446
        %v448 = vrcp.pop 192.0
        %v449 = vmul.f32 %v447, %v448
        %v450 = vsub.f32 %v439, %v449
        %v451 = vsub.f32 %v440, %v449
        %v452 = vmul.f32 %v450, %v450
        %v453 = vmul.f32 %v451, %v451
        %v454 = vsel %vm443, %v453, 0.0
        %v455 = vadd.f32 %v452, %v454
        %456 = vadd.xlane.f32.xlu0 %v455
        %v457 = vpop.xlane.xlu0 %456
        %v458 = vmul.f32 %v457, %v448
        %v459 = vadd.f32 %v458, 1e-05
        %v460 = vrsqrt.pop %v459
        %v461 = vmul.f32 %v450, %v460
        %v462 = vmul.f32 %v451, %v460
        %v464 = vlaneseq
        %v465 = vshrl.u32 %v464, 7
        %v466 = vsub.s32 0, %v465
        %v467 = vrot.slane %v441, %v466
        %v468 = vlaneseq
        %v469 = vshrl.u32 %v468, 7
        %v470 = vsub.s32 1, %v469
        %v471 = vrot.slane %v441, %v470
        %v474 = vmul.f32 %v461, %v467
        %v475 = vmul.f32 %v462, %v471
        %v477 = vlaneseq
        %v478 = vshrl.u32 %v477, 7
        %v479 = vsub.s32 0, %v478
        %v480 = vrot.slane %v442, %v479
        %v481 = vlaneseq
        %v482 = vshrl.u32 %v481, 7
        %v483 = vsub.s32 1, %v482
        %v484 = vrot.slane %v442, %v483
        %v487 = vadd.f32 %v474, %v480
        %v488 = vadd.f32 %v475, %v484
        %v489 = vld [vmem:[%s3] sm:$0xff]
        %v490 = vld [vmem:[%s3 + $0x8] sm:$0xff]
        %v491 = vld [vmem:[%s3 + $0x10] sm:$0xff]
        %v492 = vld [vmem:[%s3 + $0x18] sm:$0xff]
        %v493 = vld [vmem:[%s3 + $0x20] sm:$0xff]
        %v494 = vld [vmem:[%s3 + $0x28] sm:$0xff]
        %v495 = vld [vmem:[%s3 + $0x30] sm:$0xff]
        %v496 = vld [vmem:[%s3 + $0x38] sm:$0xff]
        %v497 = vld [vmem:[%s3 + $0x40] sm:$0xff]
        %v498 = vld [vmem:[%s3 + $0x48] sm:$0xff]
        %v499 = vld [vmem:[%s3 + $0x50] sm:$0xff]
        %v500 = vld [vmem:[%s3 + $0x58] sm:$0xff]
        %v501 = vld [vmem:[%s3 + $0x60] sm:$0xff]
        %v502 = vld [vmem:[%s3 + $0x68] sm:$0xff]
        %v503 = vld [vmem:[%s3 + $0x70] sm:$0xff]
        %v504 = vld [vmem:[%s3 + $0x78] sm:$0xff]
        %v505 = vld [vmem:[%s3 + $0x80] sm:$0xff]
        %v506 = vld [vmem:[%s3 + $0x88] sm:$0xff]
        %v507 = vld [vmem:[%s3 + $0x90] sm:$0xff]
        %v508 = vld [vmem:[%s3 + $0x98] sm:$0xff]
        %v509 = vld [vmem:[%s3 + $0xa0] sm:$0xff]
        %v510 = vld [vmem:[%s3 + $0xa8] sm:$0xff]
        %v511 = vld [vmem:[%s3 + $0xb0] sm:$0xff]
        %v512 = vld [vmem:[%s3 + $0xb8] sm:$0xff]
        %v513 = vld [vmem:[%s3 + $0xc0] sm:$0xff]
        %v514 = vld [vmem:[%s3 + $0xc8] sm:$0xff]
        %v515 = vld [vmem:[%s3 + $0xd0] sm:$0xff]
        %v516 = vld [vmem:[%s3 + $0xd8] sm:$0xff]
        %v517 = vld [vmem:[%s3 + $0xe0] sm:$0xff]
        %v518 = vld [vmem:[%s3 + $0xe8] sm:$0xff]
        %v519 = vld [vmem:[%s3 + $0xf0] sm:$0xff]
        %v520 = vld [vmem:[%s3 + $0xf8] sm:$0xff]
        %v521 = vld [vmem:[%s3 + $0x100] sm:$0xff]
        %v522 = vld [vmem:[%s3 + $0x108] sm:$0xff]
        %v523 = vld [vmem:[%s3 + $0x110] sm:$0xff]
        %v524 = vld [vmem:[%s3 + $0x118] sm:$0xff]
        %v525 = vld [vmem:[%s3 + $0x120] sm:$0xff]
        %v526 = vld [vmem:[%s3 + $0x128] sm:$0xff]
        %v527 = vld [vmem:[%s3 + $0x130] sm:$0xff]
        %v528 = vld [vmem:[%s3 + $0x138] sm:$0xff]
        %v529 = vld [vmem:[%s3 + $0x140] sm:$0xff]
        %v530 = vld [vmem:[%s3 + $0x148] sm:$0xff]
        %v531 = vld [vmem:[%s3 + $0x150] sm:$0xff]
        %v532 = vld [vmem:[%s3 + $0x158] sm:$0xff]
        %v533 = vld [vmem:[%s3 + $0x160] sm:$0xff]
        %v534 = vld [vmem:[%s3 + $0x168] sm:$0xff]
        %v535 = vld [vmem:[%s3 + $0x170] sm:$0xff]
        %v536 = vld [vmem:[%s3 + $0x178] sm:$0xff]
        %v537 = vld [vmem:[%s3 + $0x180] sm:$0xff]
        %v538 = vld [vmem:[%s3 + $0x188] sm:$0xff]
        %v539 = vld [vmem:[%s3 + $0x190] sm:$0xff]
        %v540 = vld [vmem:[%s3 + $0x198] sm:$0xff]
        %v541 = vld [vmem:[%s3 + $0x1a0] sm:$0xff]
        %v542 = vld [vmem:[%s3 + $0x1a8] sm:$0xff]
        %v543 = vld [vmem:[%s3 + $0x1b0] sm:$0xff]
        %v544 = vld [vmem:[%s3 + $0x1b8] sm:$0xff]
        %v545 = vld [vmem:[%s3 + $0x1c0] sm:$0xff]
        %v546 = vld [vmem:[%s3 + $0x1c8] sm:$0xff]
        %v547 = vld [vmem:[%s3 + $0x1d0] sm:$0xff]
        %v548 = vld [vmem:[%s3 + $0x1d8] sm:$0xff]
        %v549 = vld [vmem:[%s3 + $0x1e0] sm:$0xff]
        %v550 = vld [vmem:[%s3 + $0x1e8] sm:$0xff]
        %v551 = vld [vmem:[%s3 + $0x1f0] sm:$0xff]
        %v552 = vld [vmem:[%s3 + $0x1f8] sm:$0xff]
        %v553 = vld [vmem:[%s3 + $0x200] sm:$0xff]
        %v554 = vld [vmem:[%s3 + $0x208] sm:$0xff]
        %v555 = vld [vmem:[%s3 + $0x210] sm:$0xff]
        %v556 = vld [vmem:[%s3 + $0x218] sm:$0xff]
        %v557 = vld [vmem:[%s3 + $0x220] sm:$0xff]
        %v558 = vld [vmem:[%s3 + $0x228] sm:$0xff]
        %v559 = vld [vmem:[%s3 + $0x230] sm:$0xff]
        %v560 = vld [vmem:[%s3 + $0x238] sm:$0xff]
        %v561 = vld [vmem:[%s3 + $0x240] sm:$0xff]
        %v562 = vld [vmem:[%s3 + $0x248] sm:$0xff]
        %v563 = vld [vmem:[%s3 + $0x250] sm:$0xff]
        %v564 = vld [vmem:[%s3 + $0x258] sm:$0xff]
        %v565 = vld [vmem:[%s3 + $0x260] sm:$0xff]
        %v566 = vld [vmem:[%s3 + $0x268] sm:$0xff]
        %v567 = vld [vmem:[%s3 + $0x270] sm:$0xff]
        %v568 = vld [vmem:[%s3 + $0x278] sm:$0xff]
        %v569 = vld [vmem:[%s3 + $0x280] sm:$0xff]
        %v570 = vld [vmem:[%s3 + $0x288] sm:$0xff]
        %v571 = vld [vmem:[%s3 + $0x290] sm:$0xff]
        %v572 = vld [vmem:[%s3 + $0x298] sm:$0xff]
        %v573 = vld [vmem:[%s3 + $0x2a0] sm:$0xff]
        %v574 = vld [vmem:[%s3 + $0x2a8] sm:$0xff]
        %v575 = vld [vmem:[%s3 + $0x2b0] sm:$0xff]
        %v576 = vld [vmem:[%s3 + $0x2b8] sm:$0xff]
        %v577 = vld [vmem:[%s3 + $0x2c0] sm:$0xff]
        %v578 = vld [vmem:[%s3 + $0x2c8] sm:$0xff]
        %v579 = vld [vmem:[%s3 + $0x2d0] sm:$0xff]
        %v580 = vld [vmem:[%s3 + $0x2d8] sm:$0xff]
        %v581 = vld [vmem:[%s3 + $0x2e0] sm:$0xff]
        %v582 = vld [vmem:[%s3 + $0x2e8] sm:$0xff]
        %v583 = vld [vmem:[%s3 + $0x2f0] sm:$0xff]
        %v584 = vld [vmem:[%s3 + $0x2f8] sm:$0xff]
        %v585 = vld [vmem:[%s3 + $0x300] sm:$0xff]
        %v586 = vld [vmem:[%s3 + $0x308] sm:$0xff]
        %v587 = vld [vmem:[%s3 + $0x310] sm:$0xff]
        %v588 = vld [vmem:[%s3 + $0x318] sm:$0xff]
        %v589 = vld [vmem:[%s3 + $0x320] sm:$0xff]
        %v590 = vld [vmem:[%s3 + $0x328] sm:$0xff]
        %v591 = vld [vmem:[%s3 + $0x330] sm:$0xff]
        %v592 = vld [vmem:[%s3 + $0x338] sm:$0xff]
        %v593 = vld [vmem:[%s3 + $0x340] sm:$0xff]
        %v594 = vld [vmem:[%s3 + $0x348] sm:$0xff]
        %v595 = vld [vmem:[%s3 + $0x350] sm:$0xff]
        %v596 = vld [vmem:[%s3 + $0x358] sm:$0xff]
        %v597 = vld [vmem:[%s3 + $0x360] sm:$0xff]
        %v598 = vld [vmem:[%s3 + $0x368] sm:$0xff]
        %v599 = vld [vmem:[%s3 + $0x370] sm:$0xff]
        %v600 = vld [vmem:[%s3 + $0x378] sm:$0xff]
        %v601 = vld [vmem:[%s3 + $0x380] sm:$0xff]
        %v602 = vld [vmem:[%s3 + $0x388] sm:$0xff]
        %v603 = vld [vmem:[%s3 + $0x390] sm:$0xff]
        %v604 = vld [vmem:[%s3 + $0x398] sm:$0xff]
        %v605 = vld [vmem:[%s3 + $0x3a0] sm:$0xff]
        %v606 = vld [vmem:[%s3 + $0x3a8] sm:$0xff]
        %v607 = vld [vmem:[%s3 + $0x3b0] sm:$0xff]
        %v608 = vld [vmem:[%s3 + $0x3b8] sm:$0xff]
        %v609 = vld [vmem:[%s4] sm:$0x1f]
        %v611 = vlaneseq
        %v612 = vshrl.u32 %v611, 7
        %v613 = vsub.s32 0, %v612
        %v614 = vrot.slane %v609, %v613
        %v615 = vlaneseq
        %v616 = vshrl.u32 %v615, 7
        %v617 = vsub.s32 1, %v616
        %v618 = vrot.slane %v609, %v617
        %v619 = vlaneseq
        %v620 = vshrl.u32 %v619, 7
        %v621 = vsub.s32 2, %v620
        %v622 = vrot.slane %v609, %v621
        %v623 = vlaneseq
        %v624 = vshrl.u32 %v623, 7
        %v625 = vsub.s32 3, %v624
        %v626 = vrot.slane %v609, %v625
        %v627 = vlaneseq
        %v628 = vshrl.u32 %v627, 7
        %v629 = vsub.s32 4, %v628
        %v630 = vrot.slane %v609, %v629
        %v637 = vsel %vm443, %v488, 0
        %639 = vmatprep.subr.mxu0 %v565
        %640 = vmatpush1.msra.mxu0 %v564
        %641 = vmatprep.subr.mxu0 %v560
        %642 = vmatpush1.msra.mxu0 %v559
        %643 = vmatprep.subr.mxu0 %v555
        %644 = vmatpush1.msra.mxu0 %v554
        %645 = vmatprep.subr.mxu0 %v550
        %646 = vmatpush1.msra.mxu0 %v549
        %647 = vmatprep.subr.mxu0 %v545
        %648 = vmatpush1.msra.mxu0 %v544
        %649 = vmatprep.subr.mxu0 %v540
        %650 = vmatpush1.msra.mxu0 %v539
        %651 = vmatprep.subr.mxu0 %v535
        %652 = vmatpush1.msra.mxu0 %v534
        %653 = vmatprep.subr.mxu0 %v530
        %654 = vmatpush1.msra.mxu0 %v529
        %655 = vmatprep.subr.mxu0 %v525
        %656 = vmatpush1.msra.mxu0 %v524
        %657 = vmatprep.subr.mxu0 %v520
        %658 = vmatpush1.msra.mxu0 %v519
        %659 = vmatprep.subr.mxu0 %v515
        %660 = vmatpush1.msra.mxu0 %v514
        %661 = vmatprep.subr.mxu0 %v510
        %662 = vmatpush1.msra.mxu0 %v509
        %663 = vmatprep.subr.mxu0 %v505
        %664 = vmatpush1.msra.mxu0 %v504
        %665 = vmatprep.subr.mxu0 %v500
        %666 = vmatpush1.msra.mxu0 %v499
        %667 = vmatprep.subr.mxu0 %v495
        %668 = vmatpush1.msra.mxu0 %v494
        %669 = vmatprep.subr.mxu0 %v490
        %670 = vmatpush1.msra.mxu0 %v489
        %671 = vmatprep.subr.mxu0 0.0
        %672 = vmatpush2.msra.mxu0 0.0
        %673 = vmatprep.subr.mxu0 0.0
        %674 = vmatpush2.msra.mxu0 0.0
        %675 = vmatprep.subr.mxu0 0.0
        %676 = vmatpush2.msra.mxu0 0.0
        %677 = vmatprep.subr.mxu0 0.0
        %678 = vmatpush2.msra.mxu0 0.0
        %679 = vmatprep.subr.mxu0 0.0
        %680 = vmatpush2.msra.mxu0 0.0
        %681 = vmatprep.subr.mxu0 0.0
        %682 = vmatpush2.msra.mxu0 0.0
        %683 = vmatprep.subr.mxu0 0.0
        %684 = vmatpush2.msra.mxu0 0.0
        %685 = vmatprep.subr.mxu0 0.0
        %686 = vmatpush2.msra.mxu0 0.0
        %687 = vmatprep.subr.mxu0 %v605
        %688 = vmatpush2.msra.mxu0 %v604
        %689 = vmatprep.subr.mxu0 %v600
        %690 = vmatpush2.msra.mxu0 %v599
        %691 = vmatprep.subr.mxu0 %v595
        %692 = vmatpush2.msra.mxu0 %v594
        %693 = vmatprep.subr.mxu0 %v590
        %694 = vmatpush2.msra.mxu0 %v589
        %695 = vmatprep.subr.mxu0 %v585
        %696 = vmatpush2.msra.mxu0 %v584
        %697 = vmatprep.subr.mxu0 %v580
        %698 = vmatpush2.msra.mxu0 %v579
        %699 = vmatprep.subr.mxu0 %v575
        %700 = vmatpush2.msra.mxu0 %v574
        %701 = vmatprep.subr.mxu0 %v570
        %702 = vmatpush2.msra.mxu0 %v569
        %703 = vmatprep.mubr.f32.mxu0 %v637
        %704 = vmatmul.mubr.f32.gmra.mxu0 %v487
        %v705 = vpop.f32.mrf.mxu0
        %v706 = vadd.f32 %v614, %v705
        %v707 = vpop.f32.mrf.mxu0
        %v708 = vadd.f32 %v618, %v707
        %709 = vdwg.mxu0
        %710 = vmatprep.subr.mxu0 %v567
        %711 = vmatpush1.msra.mxu0 %v566
        %712 = vmatprep.subr.mxu0 %v562
        %713 = vmatpush1.msra.mxu0 %v561
        %714 = vmatprep.subr.mxu0 %v557
        %715 = vmatpush1.msra.mxu0 %v556
        %716 = vmatprep.subr.mxu0 %v552
        %717 = vmatpush1.msra.mxu0 %v551
        %718 = vmatprep.subr.mxu0 %v547
        %719 = vmatpush1.msra.mxu0 %v546
        %720 = vmatprep.subr.mxu0 %v542
        %721 = vmatpush1.msra.mxu0 %v541
        %722 = vmatprep.subr.mxu0 %v537
        %723 = vmatpush1.msra.mxu0 %v536
        %724 = vmatprep.subr.mxu0 %v532
        %725 = vmatpush1.msra.mxu0 %v531
        %726 = vmatprep.subr.mxu0 %v527
        %727 = vmatpush1.msra.mxu0 %v526
        %728 = vmatprep.subr.mxu0 %v522
        %729 = vmatpush1.msra.mxu0 %v521
        %730 = vmatprep.subr.mxu0 %v517
        %731 = vmatpush1.msra.mxu0 %v516
        %732 = vmatprep.subr.mxu0 %v512
        %733 = vmatpush1.msra.mxu0 %v511
        %734 = vmatprep.subr.mxu0 %v507
        %735 = vmatpush1.msra.mxu0 %v506
        %736 = vmatprep.subr.mxu0 %v502
        %737 = vmatpush1.msra.mxu0 %v501
        %738 = vmatprep.subr.mxu0 %v497
        %739 = vmatpush1.msra.mxu0 %v496
        %740 = vmatprep.subr.mxu0 %v492
        %741 = vmatpush1.msra.mxu0 %v491
        %742 = vmatprep.subr.mxu0 0.0
        %743 = vmatpush2.msra.mxu0 0.0
        %744 = vmatprep.subr.mxu0 0.0
        %745 = vmatpush2.msra.mxu0 0.0
        %746 = vmatprep.subr.mxu0 0.0
        %747 = vmatpush2.msra.mxu0 0.0
        %748 = vmatprep.subr.mxu0 0.0
        %749 = vmatpush2.msra.mxu0 0.0
        %750 = vmatprep.subr.mxu0 0.0
        %751 = vmatpush2.msra.mxu0 0.0
        %752 = vmatprep.subr.mxu0 0.0
        %753 = vmatpush2.msra.mxu0 0.0
        %754 = vmatprep.subr.mxu0 0.0
        %755 = vmatpush2.msra.mxu0 0.0
        %756 = vmatprep.subr.mxu0 0.0
        %757 = vmatpush2.msra.mxu0 0.0
        %758 = vmatprep.subr.mxu0 %v607
        %759 = vmatpush2.msra.mxu0 %v606
        %760 = vmatprep.subr.mxu0 %v602
        %761 = vmatpush2.msra.mxu0 %v601
        %762 = vmatprep.subr.mxu0 %v597
        %763 = vmatpush2.msra.mxu0 %v596
        %764 = vmatprep.subr.mxu0 %v592
        %765 = vmatpush2.msra.mxu0 %v591
        %766 = vmatprep.subr.mxu0 %v587
        %767 = vmatpush2.msra.mxu0 %v586
        %768 = vmatprep.subr.mxu0 %v582
        %769 = vmatpush2.msra.mxu0 %v581
        %770 = vmatprep.subr.mxu0 %v577
        %771 = vmatpush2.msra.mxu0 %v576
        %772 = vmatprep.subr.mxu0 %v572
        %773 = vmatpush2.msra.mxu0 %v571
        %774 = vmatprep.mubr.f32.mxu0 %v637
        %775 = vmatmul.mubr.f32.gmra.mxu0 %v487
        %v776 = vpop.f32.mrf.mxu0
        %v777 = vadd.f32 %v622, %v776
        %v778 = vpop.f32.mrf.mxu0
        %v779 = vadd.f32 %v626, %v778
        %780 = vdwg.mxu0
        %781 = vmatprep.subr.mxu0 0.0
        %782 = vmatpush1.msra.mxu0 %v568
        %783 = vmatprep.subr.mxu0 0.0
        %784 = vmatpush1.msra.mxu0 %v563
        %785 = vmatprep.subr.mxu0 0.0
        %786 = vmatpush1.msra.mxu0 %v558
        %787 = vmatprep.subr.mxu0 0.0
        %788 = vmatpush1.msra.mxu0 %v553
        %789 = vmatprep.subr.mxu0 0.0
        %790 = vmatpush1.msra.mxu0 %v548
        %791 = vmatprep.subr.mxu0 0.0
        %792 = vmatpush1.msra.mxu0 %v543
        %793 = vmatprep.subr.mxu0 0.0
        %794 = vmatpush1.msra.mxu0 %v538
        %795 = vmatprep.subr.mxu0 0.0
        %796 = vmatpush1.msra.mxu0 %v533
        %797 = vmatprep.subr.mxu0 0.0
        %798 = vmatpush1.msra.mxu0 %v528
        %799 = vmatprep.subr.mxu0 0.0
        %800 = vmatpush1.msra.mxu0 %v523
        %801 = vmatprep.subr.mxu0 0.0
        %802 = vmatpush1.msra.mxu0 %v518
        %803 = vmatprep.subr.mxu0 0.0
        %804 = vmatpush1.msra.mxu0 %v513
        %805 = vmatprep.subr.mxu0 0.0
        %806 = vmatpush1.msra.mxu0 %v508
        %807 = vmatprep.subr.mxu0 0.0
        %808 = vmatpush1.msra.mxu0 %v503
        %809 = vmatprep.subr.mxu0 0.0
        %810 = vmatpush1.msra.mxu0 %v498
        %811 = vmatprep.subr.mxu0 0.0
        %812 = vmatpush1.msra.mxu0 %v493
        %813 = vmatprep.subr.mxu0 0.0
        %814 = vmatpush2.msra.mxu0 0.0
        %815 = vmatprep.subr.mxu0 0.0
        %816 = vmatpush2.msra.mxu0 0.0
        %817 = vmatprep.subr.mxu0 0.0
        %818 = vmatpush2.msra.mxu0 0.0
        %819 = vmatprep.subr.mxu0 0.0
        %820 = vmatpush2.msra.mxu0 0.0
        %821 = vmatprep.subr.mxu0 0.0
        %822 = vmatpush2.msra.mxu0 0.0
        %823 = vmatprep.subr.mxu0 0.0
        %824 = vmatpush2.msra.mxu0 0.0
        %825 = vmatprep.subr.mxu0 0.0
        %826 = vmatpush2.msra.mxu0 0.0
        %827 = vmatprep.subr.mxu0 0.0
        %828 = vmatpush2.msra.mxu0 0.0
        %829 = vmatprep.subr.mxu0 0.0
        %830 = vmatpush2.msra.mxu0 %v608
        %831 = vmatprep.subr.mxu0 0.0
        %832 = vmatpush2.msra.mxu0 %v603
        %833 = vmatprep.subr.mxu0 0.0
        %834 = vmatpush2.msra.mxu0 %v598
        %835 = vmatprep.subr.mxu0 0.0
        %836 = vmatpush2.msra.mxu0 %v593
        %837 = vmatprep.subr.mxu0 0.0
        %838 = vmatpush2.msra.mxu0 %v588
        %839 = vmatprep.subr.mxu0 0.0
        %840 = vmatpush2.msra.mxu0 %v583
        %841 = vmatprep.subr.mxu0 0.0
        %842 = vmatpush2.msra.mxu0 %v578
        %843 = vmatprep.subr.mxu0 0.0
        %844 = vmatpush2.msra.mxu0 %v573
        %845 = vmatprep.mubr.f32.mxu0 %v637
        %846 = vmatmul.mubr.f32.gmra.mxu0 %v487
        %v847 = vpop.f32.mrf.mxu0
        %v848 = vadd.f32 %v630, %v847
        %v849 = vpop.f32.mrf.mxu0
        %850 = vdwg.mxu0
        %852 = vrot.lane.b32.xlu0 %v706, 80
        %v853 = vpop.permute.xlu0 %852
        %855 = vrot.lane.b32.xlu0 %v706, 32
        %v856 = vpop.permute.xlu0 %855
        %857 = vrot.lane.b32.xlu0 %v708, 32
        %v858 = vpop.permute.xlu0 %857
        %vm859 = vcmask 261120
        %v860 = vsel %vm859, %v856, %v858
        %861 = vrot.lane.b32.xlu0 %v708, 112
        %v862 = vpop.permute.xlu0 %861
        %863 = vrot.lane.b32.xlu0 %v708, 64
        %v864 = vpop.permute.xlu0 %863
        %866 = vrot.lane.b32.xlu0 %v708, 16
        %v867 = vpop.permute.xlu0 %866
        %868 = vrot.lane.b32.xlu0 %v777, 16
        %v869 = vpop.permute.xlu0 %868
        %vm870 = vcmask 130048
        %v871 = vsel %vm870, %v867, %v869
        %872 = vrot.lane.b32.xlu0 %v777, 96
        %v873 = vpop.permute.xlu0 %872
        %874 = vrot.lane.b32.xlu0 %v777, 48
        %v875 = vpop.permute.xlu0 %874
        %877 = vrot.lane.b32.xlu0 %v779, 80
        %v878 = vpop.permute.xlu0 %877
        %880 = vrot.lane.b32.xlu0 %v779, 32
        %v881 = vpop.permute.xlu0 %880
        %882 = vrot.lane.b32.xlu0 %v848, 32
        %v883 = vpop.permute.xlu0 %882
        %v884 = vsel %vm859, %v881, %v883
        %885 = vrot.lane.b32.xlu0 %v848, 112
        %v886 = vpop.permute.xlu0 %885
        %v887 = vlaneseq
        %v888 = vshrl.u32 %v887, 7
        %v889 = vlaneseq
        %v890 = vand.u32 %v889, 127
        %vm891 = vcmp.le.s32.totalorder %v890, %v888
        %v892 = vsel %vm891, 0.0, -1e+09
        %893 = vrot.lane.b32.xlu0 %v706, 112
        %v894 = vpop.permute.xlu0 %893
        %v895 = vsel %vm870, %v706, 0
        %v897 = vsel %vm870, %v894, 0
        %899 = vmatprep.subr.mxu0 0.0
        %900 = vmatpush1.xpose.msra.mxu0 0.0
        %901 = vmatprep.subr.mxu0 0.0
        %902 = vmatpush1.xpose.msra.mxu0 0.0
        %903 = vmatprep.subr.mxu0 0.0
        %904 = vmatpush1.xpose.msra.mxu0 0.0
        %905 = vmatprep.subr.mxu0 0.0
        %906 = vmatpush1.xpose.msra.mxu0 0.0
        %907 = vmatprep.subr.mxu0 0.0
        %908 = vmatpush1.xpose.msra.mxu0 0.0
        %909 = vmatprep.subr.mxu0 0.0
        %910 = vmatpush1.xpose.msra.mxu0 0.0
        %911 = vmatprep.subr.mxu0 0.0
        %912 = vmatpush1.xpose.msra.mxu0 0.0
        %913 = vmatprep.subr.mxu0 0.0
        %914 = vmatpush1.xpose.msra.mxu0 0.0
        %915 = vmatprep.subr.mxu0 0.0
        %916 = vmatpush1.xpose.msra.mxu0 0.0
        %917 = vmatprep.subr.mxu0 0.0
        %918 = vmatpush1.xpose.msra.mxu0 0.0
        %919 = vmatprep.subr.mxu0 0.0
        %920 = vmatpush1.xpose.msra.mxu0 0.0
        %921 = vmatprep.subr.mxu0 0.0
        %922 = vmatpush1.xpose.msra.mxu0 0.0
        %923 = vmatprep.subr.mxu0 0.0
        %924 = vmatpush1.xpose.msra.mxu0 0.0
        %925 = vmatprep.subr.mxu0 0.0
        %926 = vmatpush1.xpose.msra.mxu0 0.0
        %927 = vmatprep.subr.mxu0 0.0
        %928 = vmatpush1.xpose.msra.mxu0 0.0
        %929 = vmatprep.subr.mxu0 0.0
        %930 = vmatpush1.xpose.msra.mxu0 %v897
        %931 = vmatprep.subr.mxu0 0.0
        %932 = vmatpush2.xpose.msra.mxu0 0.0
        %933 = vmatprep.subr.mxu0 0.0
        %934 = vmatpush2.xpose.msra.mxu0 0.0
        %935 = vmatprep.subr.mxu0 0.0
        %936 = vmatpush2.xpose.msra.mxu0 0.0
        %937 = vmatprep.subr.mxu0 0.0
        %938 = vmatpush2.xpose.msra.mxu0 0.0
        %939 = vmatprep.subr.mxu0 0.0
        %940 = vmatpush2.xpose.msra.mxu0 0.0
        %941 = vmatprep.subr.mxu0 0.0
        %942 = vmatpush2.xpose.msra.mxu0 0.0
        %943 = vmatprep.subr.mxu0 0.0
        %944 = vmatpush2.xpose.msra.mxu0 0.0
        %945 = vmatprep.subr.mxu0 0.0
        %946 = vmatpush2.xpose.msra.mxu0 0.0
        %947 = vmatprep.subr.mxu0 0.0
        %948 = vmatpush2.xpose.msra.mxu0 0.0
        %949 = vmatprep.subr.mxu0 0.0
        %950 = vmatpush2.xpose.msra.mxu0 0.0
        %951 = vmatprep.subr.mxu0 0.0
        %952 = vmatpush2.xpose.msra.mxu0 0.0
        %953 = vmatprep.subr.mxu0 0.0
        %954 = vmatpush2.xpose.msra.mxu0 0.0
        %955 = vmatprep.subr.mxu0 0.0
        %956 = vmatpush2.xpose.msra.mxu0 0.0
        %957 = vmatprep.subr.mxu0 0.0
        %958 = vmatpush2.xpose.msra.mxu0 0.0
        %959 = vmatprep.subr.mxu0 0.0
        %960 = vmatpush2.xpose.msra.mxu0 0.0
        %961 = vmatprep.subr.mxu0 0.0
        %962 = vmatpush2.xpose.msra.mxu0 0.0
        %963 = vmatprep.mubr.f32.mxu0 0.0
        %964 = vmatmul.mubr.f32.gmra.mxu0 %v895
        %v965 = vpop.f32.mrf.mxu0
        %v966 = vadd.f32 %v892, %v965
        %v967 = vpop.f32.mrf.mxu0
        %968 = vdwg.mxu0
        %969 = vrot.lane.b32.xlu0 %v853, 112
        %v970 = vpop.permute.xlu0 %969
        %v971 = vsel %vm870, %v853, 0
        %v973 = vsel %vm870, %v970, 0
        %975 = vmatprep.subr.mxu0 0.0
        %976 = vmatpush1.xpose.msra.mxu0 0.0
        %977 = vmatprep.subr.mxu0 0.0
        %978 = vmatpush1.xpose.msra.mxu0 0.0
        %979 = vmatprep.subr.mxu0 0.0
        %980 = vmatpush1.xpose.msra.mxu0 0.0
        %981 = vmatprep.subr.mxu0 0.0
        %982 = vmatpush1.xpose.msra.mxu0 0.0
        %983 = vmatprep.subr.mxu0 0.0
        %984 = vmatpush1.xpose.msra.mxu0 0.0
        %985 = vmatprep.subr.mxu0 0.0
        %986 = vmatpush1.xpose.msra.mxu0 0.0
        %987 = vmatprep.subr.mxu0 0.0
        %988 = vmatpush1.xpose.msra.mxu0 0.0
        %989 = vmatprep.subr.mxu0 0.0
        %990 = vmatpush1.xpose.msra.mxu0 0.0
        %991 = vmatprep.subr.mxu0 0.0
        %992 = vmatpush1.xpose.msra.mxu0 0.0
        %993 = vmatprep.subr.mxu0 0.0
        %994 = vmatpush1.xpose.msra.mxu0 0.0
        %995 = vmatprep.subr.mxu0 0.0
        %996 = vmatpush1.xpose.msra.mxu0 0.0
        %997 = vmatprep.subr.mxu0 0.0
        %998 = vmatpush1.xpose.msra.mxu0 0.0
        %999 = vmatprep.subr.mxu0 0.0
        %1000 = vmatpush1.xpose.msra.mxu0 0.0
        %1001 = vmatprep.subr.mxu0 0.0
        %1002 = vmatpush1.xpose.msra.mxu0 0.0
        %1003 = vmatprep.subr.mxu0 0.0
        %1004 = vmatpush1.xpose.msra.mxu0 0.0
        %1005 = vmatprep.subr.mxu0 0.0
        %1006 = vmatpush1.xpose.msra.mxu0 %v973
        %1007 = vmatprep.subr.mxu0 0.0
        %1008 = vmatpush2.xpose.msra.mxu0 0.0
        %1009 = vmatprep.subr.mxu0 0.0
        %1010 = vmatpush2.xpose.msra.mxu0 0.0
        %1011 = vmatprep.subr.mxu0 0.0
        %1012 = vmatpush2.xpose.msra.mxu0 0.0
        %1013 = vmatprep.subr.mxu0 0.0
        %1014 = vmatpush2.xpose.msra.mxu0 0.0
        %1015 = vmatprep.subr.mxu0 0.0
        %1016 = vmatpush2.xpose.msra.mxu0 0.0
        %1017 = vmatprep.subr.mxu0 0.0
        %1018 = vmatpush2.xpose.msra.mxu0 0.0
        %1019 = vmatprep.subr.mxu0 0.0
        %1020 = vmatpush2.xpose.msra.mxu0 0.0
        %1021 = vmatprep.subr.mxu0 0.0
        %1022 = vmatpush2.xpose.msra.mxu0 0.0
        %1023 = vmatprep.subr.mxu0 0.0
        %1024 = vmatpush2.xpose.msra.mxu0 0.0
        %1025 = vmatprep.subr.mxu0 0.0
        %1026 = vmatpush2.xpose.msra.mxu0 0.0
        %1027 = vmatprep.subr.mxu0 0.0
        %1028 = vmatpush2.xpose.msra.mxu0 0.0
        %1029 = vmatprep.subr.mxu0 0.0
        %1030 = vmatpush2.xpose.msra.mxu0 0.0
        %1031 = vmatprep.subr.mxu0 0.0
        %1032 = vmatpush2.xpose.msra.mxu0 0.0
        %1033 = vmatprep.subr.mxu0 0.0
        %1034 = vmatpush2.xpose.msra.mxu0 0.0
        %1035 = vmatprep.subr.mxu0 0.0
        %1036 = vmatpush2.xpose.msra.mxu0 0.0
        %1037 = vmatprep.subr.mxu0 0.0
        %1038 = vmatpush2.xpose.msra.mxu0 0.0
        %1039 = vmatprep.mubr.f32.mxu0 0.0
        %1040 = vmatmul.mubr.f32.gmra.mxu0 %v971
        %v1041 = vpop.f32.mrf.mxu0
        %v1042 = vadd.f32 %v892, %v1041
        %v1043 = vpop.f32.mrf.mxu0
        %1044 = vdwg.mxu0
        %1045 = vrot.lane.b32.xlu0 %v860, 112
        %v1046 = vpop.permute.xlu0 %1045
        %v1047 = vsel %vm870, %v860, 0
        %v1049 = vsel %vm870, %v1046, 0
        %1051 = vmatprep.subr.mxu0 0.0
        %1052 = vmatpush1.xpose.msra.mxu0 0.0
        %1053 = vmatprep.subr.mxu0 0.0
        %1054 = vmatpush1.xpose.msra.mxu0 0.0
        %1055 = vmatprep.subr.mxu0 0.0
        %1056 = vmatpush1.xpose.msra.mxu0 0.0
        %1057 = vmatprep.subr.mxu0 0.0
        %1058 = vmatpush1.xpose.msra.mxu0 0.0
        %1059 = vmatprep.subr.mxu0 0.0
        %1060 = vmatpush1.xpose.msra.mxu0 0.0
        %1061 = vmatprep.subr.mxu0 0.0
        %1062 = vmatpush1.xpose.msra.mxu0 0.0
        %1063 = vmatprep.subr.mxu0 0.0
        %1064 = vmatpush1.xpose.msra.mxu0 0.0
        %1065 = vmatprep.subr.mxu0 0.0
        %1066 = vmatpush1.xpose.msra.mxu0 0.0
        %1067 = vmatprep.subr.mxu0 0.0
        %1068 = vmatpush1.xpose.msra.mxu0 0.0
        %1069 = vmatprep.subr.mxu0 0.0
        %1070 = vmatpush1.xpose.msra.mxu0 0.0
        %1071 = vmatprep.subr.mxu0 0.0
        %1072 = vmatpush1.xpose.msra.mxu0 0.0
        %1073 = vmatprep.subr.mxu0 0.0
        %1074 = vmatpush1.xpose.msra.mxu0 0.0
        %1075 = vmatprep.subr.mxu0 0.0
        %1076 = vmatpush1.xpose.msra.mxu0 0.0
        %1077 = vmatprep.subr.mxu0 0.0
        %1078 = vmatpush1.xpose.msra.mxu0 0.0
        %1079 = vmatprep.subr.mxu0 0.0
        %1080 = vmatpush1.xpose.msra.mxu0 0.0
        %1081 = vmatprep.subr.mxu0 0.0
        %1082 = vmatpush1.xpose.msra.mxu0 %v1049
        %1083 = vmatprep.subr.mxu0 0.0
        %1084 = vmatpush2.xpose.msra.mxu0 0.0
        %1085 = vmatprep.subr.mxu0 0.0
        %1086 = vmatpush2.xpose.msra.mxu0 0.0
        %1087 = vmatprep.subr.mxu0 0.0
        %1088 = vmatpush2.xpose.msra.mxu0 0.0
        %1089 = vmatprep.subr.mxu0 0.0
        %1090 = vmatpush2.xpose.msra.mxu0 0.0
        %1091 = vmatprep.subr.mxu0 0.0
        %1092 = vmatpush2.xpose.msra.mxu0 0.0
        %1093 = vmatprep.subr.mxu0 0.0
        %1094 = vmatpush2.xpose.msra.mxu0 0.0
        %1095 = vmatprep.subr.mxu0 0.0
        %1096 = vmatpush2.xpose.msra.mxu0 0.0
        %1097 = vmatprep.subr.mxu0 0.0
        %1098 = vmatpush2.xpose.msra.mxu0 0.0
        %1099 = vmatprep.subr.mxu0 0.0
        %1100 = vmatpush2.xpose.msra.mxu0 0.0
        %1101 = vmatprep.subr.mxu0 0.0
        %1102 = vmatpush2.xpose.msra.mxu0 0.0
        %1103 = vmatprep.subr.mxu0 0.0
        %1104 = vmatpush2.xpose.msra.mxu0 0.0
        %1105 = vmatprep.subr.mxu0 0.0
        %1106 = vmatpush2.xpose.msra.mxu0 0.0
        %1107 = vmatprep.subr.mxu0 0.0
        %1108 = vmatpush2.xpose.msra.mxu0 0.0
        %1109 = vmatprep.subr.mxu0 0.0
        %1110 = vmatpush2.xpose.msra.mxu0 0.0
        %1111 = vmatprep.subr.mxu0 0.0
        %1112 = vmatpush2.xpose.msra.mxu0 0.0
        %1113 = vmatprep.subr.mxu0 0.0
        %1114 = vmatpush2.xpose.msra.mxu0 0.0
        %1115 = vmatprep.mubr.f32.mxu0 0.0
        %1116 = vmatmul.mubr.f32.gmra.mxu0 %v1047
        %v1117 = vpop.f32.mrf.mxu0
        %v1118 = vadd.f32 %v892, %v1117
        %v1119 = vpop.f32.mrf.mxu0
        %1120 = vdwg.mxu0
        %1121 = vrot.lane.b32.xlu0 %v862, 112
        %v1122 = vpop.permute.xlu0 %1121
        %v1123 = vsel %vm870, %v862, 0
        %v1125 = vsel %vm870, %v1122, 0
        %1127 = vmatprep.subr.mxu0 0.0
        %1128 = vmatpush1.xpose.msra.mxu0 0.0
        %1129 = vmatprep.subr.mxu0 0.0
        %1130 = vmatpush1.xpose.msra.mxu0 0.0
        %1131 = vmatprep.subr.mxu0 0.0
        %1132 = vmatpush1.xpose.msra.mxu0 0.0
        %1133 = vmatprep.subr.mxu0 0.0
        %1134 = vmatpush1.xpose.msra.mxu0 0.0
        %1135 = vmatprep.subr.mxu0 0.0
        %1136 = vmatpush1.xpose.msra.mxu0 0.0
        %1137 = vmatprep.subr.mxu0 0.0
        %1138 = vmatpush1.xpose.msra.mxu0 0.0
        %1139 = vmatprep.subr.mxu0 0.0
        %1140 = vmatpush1.xpose.msra.mxu0 0.0
        %1141 = vmatprep.subr.mxu0 0.0
        %1142 = vmatpush1.xpose.msra.mxu0 0.0
        %1143 = vmatprep.subr.mxu0 0.0
        %1144 = vmatpush1.xpose.msra.mxu0 0.0
        %1145 = vmatprep.subr.mxu0 0.0
        %1146 = vmatpush1.xpose.msra.mxu0 0.0
        %1147 = vmatprep.subr.mxu0 0.0
        %1148 = vmatpush1.xpose.msra.mxu0 0.0
        %1149 = vmatprep.subr.mxu0 0.0
        %1150 = vmatpush1.xpose.msra.mxu0 0.0
        %1151 = vmatprep.subr.mxu0 0.0
        %1152 = vmatpush1.xpose.msra.mxu0 0.0
        %1153 = vmatprep.subr.mxu0 0.0
        %1154 = vmatpush1.xpose.msra.mxu0 0.0
        %1155 = vmatprep.subr.mxu0 0.0
        %1156 = vmatpush1.xpose.msra.mxu0 0.0
        %1157 = vmatprep.subr.mxu0 0.0
        %1158 = vmatpush1.xpose.msra.mxu0 %v1125
        %1159 = vmatprep.subr.mxu0 0.0
        %1160 = vmatpush2.xpose.msra.mxu0 0.0
        %1161 = vmatprep.subr.mxu0 0.0
        %1162 = vmatpush2.xpose.msra.mxu0 0.0
        %1163 = vmatprep.subr.mxu0 0.0
        %1164 = vmatpush2.xpose.msra.mxu0 0.0
        %1165 = vmatprep.subr.mxu0 0.0
        %1166 = vmatpush2.xpose.msra.mxu0 0.0
        %1167 = vmatprep.subr.mxu0 0.0
        %1168 = vmatpush2.xpose.msra.mxu0 0.0
        %1169 = vmatprep.subr.mxu0 0.0
        %1170 = vmatpush2.xpose.msra.mxu0 0.0
        %1171 = vmatprep.subr.mxu0 0.0
        %1172 = vmatpush2.xpose.msra.mxu0 0.0
        %1173 = vmatprep.subr.mxu0 0.0
        %1174 = vmatpush2.xpose.msra.mxu0 0.0
        %1175 = vmatprep.subr.mxu0 0.0
        %1176 = vmatpush2.xpose.msra.mxu0 0.0
        %1177 = vmatprep.subr.mxu0 0.0
        %1178 = vmatpush2.xpose.msra.mxu0 0.0
        %1179 = vmatprep.subr.mxu0 0.0
        %1180 = vmatpush2.xpose.msra.mxu0 0.0
        %1181 = vmatprep.subr.mxu0 0.0
        %1182 = vmatpush2.xpose.msra.mxu0 0.0
        %1183 = vmatprep.subr.mxu0 0.0
        %1184 = vmatpush2.xpose.msra.mxu0 0.0
        %1185 = vmatprep.subr.mxu0 0.0
        %1186 = vmatpush2.xpose.msra.mxu0 0.0
        %1187 = vmatprep.subr.mxu0 0.0
        %1188 = vmatpush2.xpose.msra.mxu0 0.0
        %1189 = vmatprep.subr.mxu0 0.0
        %1190 = vmatpush2.xpose.msra.mxu0 0.0
        %1191 = vmatprep.mubr.f32.mxu0 0.0
        %1192 = vmatmul.mubr.f32.gmra.mxu0 %v1123
        %v1193 = vpop.f32.mrf.mxu0
        %v1194 = vadd.f32 %v892, %v1193
        %v1195 = vpop.f32.mrf.mxu0
        %1196 = vdwg.mxu0
        %1197 = vrot.lane.b32.xlu0 %v864, 112
        %v1198 = vpop.permute.xlu0 %1197
        %v1199 = vsel %vm870, %v864, 0
        %v1201 = vsel %vm870, %v1198, 0
        %1203 = vmatprep.subr.mxu0 0.0
        %1204 = vmatpush1.xpose.msra.mxu0 0.0
        %1205 = vmatprep.subr.mxu0 0.0
        %1206 = vmatpush1.xpose.msra.mxu0 0.0
        %1207 = vmatprep.subr.mxu0 0.0
        %1208 = vmatpush1.xpose.msra.mxu0 0.0
        %1209 = vmatprep.subr.mxu0 0.0
        %1210 = vmatpush1.xpose.msra.mxu0 0.0
        %1211 = vmatprep.subr.mxu0 0.0
        %1212 = vmatpush1.xpose.msra.mxu0 0.0
        %1213 = vmatprep.subr.mxu0 0.0
        %1214 = vmatpush1.xpose.msra.mxu0 0.0
        %1215 = vmatprep.subr.mxu0 0.0
        %1216 = vmatpush1.xpose.msra.mxu0 0.0
        %1217 = vmatprep.subr.mxu0 0.0
        %1218 = vmatpush1.xpose.msra.mxu0 0.0
        %1219 = vmatprep.subr.mxu0 0.0
        %1220 = vmatpush1.xpose.msra.mxu0 0.0
        %1221 = vmatprep.subr.mxu0 0.0
        %1222 = vmatpush1.xpose.msra.mxu0 0.0
        %1223 = vmatprep.subr.mxu0 0.0
        %1224 = vmatpush1.xpose.msra.mxu0 0.0
        %1225 = vmatprep.subr.mxu0 0.0
        %1226 = vmatpush1.xpose.msra.mxu0 0.0
        %1227 = vmatprep.subr.mxu0 0.0
        %1228 = vmatpush1.xpose.msra.mxu0 0.0
        %1229 = vmatprep.subr.mxu0 0.0
        %1230 = vmatpush1.xpose.msra.mxu0 0.0
        %1231 = vmatprep.subr.mxu0 0.0
        %1232 = vmatpush1.xpose.msra.mxu0 0.0
        %1233 = vmatprep.subr.mxu0 0.0
        %1234 = vmatpush1.xpose.msra.mxu0 %v1201
        %1235 = vmatprep.subr.mxu0 0.0
        %1236 = vmatpush2.xpose.msra.mxu0 0.0
        %1237 = vmatprep.subr.mxu0 0.0
        %1238 = vmatpush2.xpose.msra.mxu0 0.0
        %1239 = vmatprep.subr.mxu0 0.0
        %1240 = vmatpush2.xpose.msra.mxu0 0.0
        %1241 = vmatprep.subr.mxu0 0.0
        %1242 = vmatpush2.xpose.msra.mxu0 0.0
        %1243 = vmatprep.subr.mxu0 0.0
        %1244 = vmatpush2.xpose.msra.mxu0 0.0
        %1245 = vmatprep.subr.mxu0 0.0
        %1246 = vmatpush2.xpose.msra.mxu0 0.0
        %1247 = vmatprep.subr.mxu0 0.0
        %1248 = vmatpush2.xpose.msra.mxu0 0.0
        %1249 = vmatprep.subr.mxu0 0.0
        %1250 = vmatpush2.xpose.msra.mxu0 0.0
        %1251 = vmatprep.subr.mxu0 0.0
        %1252 = vmatpush2.xpose.msra.mxu0 0.0
        %1253 = vmatprep.subr.mxu0 0.0
        %1254 = vmatpush2.xpose.msra.mxu0 0.0
        %1255 = vmatprep.subr.mxu0 0.0
        %1256 = vmatpush2.xpose.msra.mxu0 0.0
        %1257 = vmatprep.subr.mxu0 0.0
        %1258 = vmatpush2.xpose.msra.mxu0 0.0
        %1259 = vmatprep.subr.mxu0 0.0
        %1260 = vmatpush2.xpose.msra.mxu0 0.0
        %1261 = vmatprep.subr.mxu0 0.0
        %1262 = vmatpush2.xpose.msra.mxu0 0.0
        %1263 = vmatprep.subr.mxu0 0.0
        %1264 = vmatpush2.xpose.msra.mxu0 0.0
        %1265 = vmatprep.subr.mxu0 0.0
        %1266 = vmatpush2.xpose.msra.mxu0 0.0
        %1267 = vmatprep.mubr.f32.mxu0 0.0
        %1268 = vmatmul.mubr.f32.gmra.mxu0 %v1199
        %v1269 = vpop.f32.mrf.mxu0
        %v1270 = vadd.f32 %v892, %v1269
        %v1271 = vpop.f32.mrf.mxu0
        %1272 = vdwg.mxu0
        %1273 = vrot.lane.b32.xlu0 %v871, 112
        %v1274 = vpop.permute.xlu0 %1273
        %v1275 = vsel %vm870, %v871, 0
        %v1277 = vsel %vm870, %v1274, 0
        %1279 = vmatprep.subr.mxu0 0.0
        %1280 = vmatpush1.xpose.msra.mxu0 0.0
        %1281 = vmatprep.subr.mxu0 0.0
        %1282 = vmatpush1.xpose.msra.mxu0 0.0
        %1283 = vmatprep.subr.mxu0 0.0
        %1284 = vmatpush1.xpose.msra.mxu0 0.0
        %1285 = vmatprep.subr.mxu0 0.0
        %1286 = vmatpush1.xpose.msra.mxu0 0.0
        %1287 = vmatprep.subr.mxu0 0.0
        %1288 = vmatpush1.xpose.msra.mxu0 0.0
        %1289 = vmatprep.subr.mxu0 0.0
        %1290 = vmatpush1.xpose.msra.mxu0 0.0
        %1291 = vmatprep.subr.mxu0 0.0
        %1292 = vmatpush1.xpose.msra.mxu0 0.0
        %1293 = vmatprep.subr.mxu0 0.0
        %1294 = vmatpush1.xpose.msra.mxu0 0.0
        %1295 = vmatprep.subr.mxu0 0.0
        %1296 = vmatpush1.xpose.msra.mxu0 0.0
        %1297 = vmatprep.subr.mxu0 0.0
        %1298 = vmatpush1.xpose.msra.mxu0 0.0
        %1299 = vmatprep.subr.mxu0 0.0
        %1300 = vmatpush1.xpose.msra.mxu0 0.0
        %1301 = vmatprep.subr.mxu0 0.0
        %1302 = vmatpush1.xpose.msra.mxu0 0.0
        %1303 = vmatprep.subr.mxu0 0.0
        %1304 = vmatpush1.xpose.msra.mxu0 0.0
        %1305 = vmatprep.subr.mxu0 0.0
        %1306 = vmatpush1.xpose.msra.mxu0 0.0
        %1307 = vmatprep.subr.mxu0 0.0
        %1308 = vmatpush1.xpose.msra.mxu0 0.0
        %1309 = vmatprep.subr.mxu0 0.0
        %1310 = vmatpush1.xpose.msra.mxu0 %v1277
        %1311 = vmatprep.subr.mxu0 0.0
        %1312 = vmatpush2.xpose.msra.mxu0 0.0
        %1313 = vmatprep.subr.mxu0 0.0
        %1314 = vmatpush2.xpose.msra.mxu0 0.0
        %1315 = vmatprep.subr.mxu0 0.0
        %1316 = vmatpush2.xpose.msra.mxu0 0.0
        %1317 = vmatprep.subr.mxu0 0.0
        %1318 = vmatpush2.xpose.msra.mxu0 0.0
        %1319 = vmatprep.subr.mxu0 0.0
        %1320 = vmatpush2.xpose.msra.mxu0 0.0
        %1321 = vmatprep.subr.mxu0 0.0
        %1322 = vmatpush2.xpose.msra.mxu0 0.0
        %1323 = vmatprep.subr.mxu0 0.0
        %1324 = vmatpush2.xpose.msra.mxu0 0.0
        %1325 = vmatprep.subr.mxu0 0.0
        %1326 = vmatpush2.xpose.msra.mxu0 0.0
        %1327 = vmatprep.subr.mxu0 0.0
        %1328 = vmatpush2.xpose.msra.mxu0 0.0
        %1329 = vmatprep.subr.mxu0 0.0
        %1330 = vmatpush2.xpose.msra.mxu0 0.0
        %1331 = vmatprep.subr.mxu0 0.0
        %1332 = vmatpush2.xpose.msra.mxu0 0.0
        %1333 = vmatprep.subr.mxu0 0.0
        %1334 = vmatpush2.xpose.msra.mxu0 0.0
        %1335 = vmatprep.subr.mxu0 0.0
        %1336 = vmatpush2.xpose.msra.mxu0 0.0
        %1337 = vmatprep.subr.mxu0 0.0
        %1338 = vmatpush2.xpose.msra.mxu0 0.0
        %1339 = vmatprep.subr.mxu0 0.0
        %1340 = vmatpush2.xpose.msra.mxu0 0.0
        %1341 = vmatprep.subr.mxu0 0.0
        %1342 = vmatpush2.xpose.msra.mxu0 0.0
        %1343 = vmatprep.mubr.f32.mxu0 0.0
        %1344 = vmatmul.mubr.f32.gmra.mxu0 %v1275
        %v1345 = vpop.f32.mrf.mxu0
        %v1346 = vadd.f32 %v892, %v1345
        %v1347 = vpop.f32.mrf.mxu0
        %1348 = vdwg.mxu0
        %1349 = vrot.lane.b32.xlu0 %v873, 112
        %v1350 = vpop.permute.xlu0 %1349
        %v1351 = vsel %vm870, %v873, 0
        %v1353 = vsel %vm870, %v1350, 0
        %1355 = vmatprep.subr.mxu0 0.0
        %1356 = vmatpush1.xpose.msra.mxu0 0.0
        %1357 = vmatprep.subr.mxu0 0.0
        %1358 = vmatpush1.xpose.msra.mxu0 0.0
        %1359 = vmatprep.subr.mxu0 0.0
        %1360 = vmatpush1.xpose.msra.mxu0 0.0
        %1361 = vmatprep.subr.mxu0 0.0
        %1362 = vmatpush1.xpose.msra.mxu0 0.0
        %1363 = vmatprep.subr.mxu0 0.0
        %1364 = vmatpush1.xpose.msra.mxu0 0.0
        %1365 = vmatprep.subr.mxu0 0.0
        %1366 = vmatpush1.xpose.msra.mxu0 0.0
        %1367 = vmatprep.subr.mxu0 0.0
        %1368 = vmatpush1.xpose.msra.mxu0 0.0
        %1369 = vmatprep.subr.mxu0 0.0
        %1370 = vmatpush1.xpose.msra.mxu0 0.0
        %1371 = vmatprep.subr.mxu0 0.0
        %1372 = vmatpush1.xpose.msra.mxu0 0.0
        %1373 = vmatprep.subr.mxu0 0.0
        %1374 = vmatpush1.xpose.msra.mxu0 0.0
        %1375 = vmatprep.subr.mxu0 0.0
        %1376 = vmatpush1.xpose.msra.mxu0 0.0
        %1377 = vmatprep.subr.mxu0 0.0
        %1378 = vmatpush1.xpose.msra.mxu0 0.0
        %1379 = vmatprep.subr.mxu0 0.0
        %1380 = vmatpush1.xpose.msra.mxu0 0.0
        %1381 = vmatprep.subr.mxu0 0.0
        %1382 = vmatpush1.xpose.msra.mxu0 0.0
        %1383 = vmatprep.subr.mxu0 0.0
        %1384 = vmatpush1.xpose.msra.mxu0 0.0
        %1385 = vmatprep.subr.mxu0 0.0
        %1386 = vmatpush1.xpose.msra.mxu0 %v1353
        %1387 = vmatprep.subr.mxu0 0.0
        %1388 = vmatpush2.xpose.msra.mxu0 0.0
        %1389 = vmatprep.subr.mxu0 0.0
        %1390 = vmatpush2.xpose.msra.mxu0 0.0
        %1391 = vmatprep.subr.mxu0 0.0
        %1392 = vmatpush2.xpose.msra.mxu0 0.0
        %1393 = vmatprep.subr.mxu0 0.0
        %1394 = vmatpush2.xpose.msra.mxu0 0.0
        %1395 = vmatprep.subr.mxu0 0.0
        %1396 = vmatpush2.xpose.msra.mxu0 0.0
        %1397 = vmatprep.subr.mxu0 0.0
        %1398 = vmatpush2.xpose.msra.mxu0 0.0
        %1399 = vmatprep.subr.mxu0 0.0
        %1400 = vmatpush2.xpose.msra.mxu0 0.0
        %1401 = vmatprep.subr.mxu0 0.0
        %1402 = vmatpush2.xpose.msra.mxu0 0.0
        %1403 = vmatprep.subr.mxu0 0.0
        %1404 = vmatpush2.xpose.msra.mxu0 0.0
        %1405 = vmatprep.subr.mxu0 0.0
        %1406 = vmatpush2.xpose.msra.mxu0 0.0
        %1407 = vmatprep.subr.mxu0 0.0
        %1408 = vmatpush2.xpose.msra.mxu0 0.0
        %1409 = vmatprep.subr.mxu0 0.0
        %1410 = vmatpush2.xpose.msra.mxu0 0.0
        %1411 = vmatprep.subr.mxu0 0.0
        %1412 = vmatpush2.xpose.msra.mxu0 0.0
        %1413 = vmatprep.subr.mxu0 0.0
        %1414 = vmatpush2.xpose.msra.mxu0 0.0
        %1415 = vmatprep.subr.mxu0 0.0
        %1416 = vmatpush2.xpose.msra.mxu0 0.0
        %1417 = vmatprep.subr.mxu0 0.0
        %1418 = vmatpush2.xpose.msra.mxu0 0.0
        %1419 = vmatprep.mubr.f32.mxu0 0.0
        %1420 = vmatmul.mubr.f32.gmra.mxu0 %v1351
        %v1421 = vpop.f32.mrf.mxu0
        %v1422 = vadd.f32 %v892, %v1421
        %v1423 = vpop.f32.mrf.mxu0
        %1424 = vdwg.mxu0
        %1425 = vrot.lane.b32.xlu0 %v875, 112
        %v1426 = vpop.permute.xlu0 %1425
        %v1427 = vsel %vm870, %v875, 0
        %v1429 = vsel %vm870, %v1426, 0
        %1431 = vmatprep.subr.mxu0 0.0
        %1432 = vmatpush1.xpose.msra.mxu0 0.0
        %1433 = vmatprep.subr.mxu0 0.0
        %1434 = vmatpush1.xpose.msra.mxu0 0.0
        %1435 = vmatprep.subr.mxu0 0.0
        %1436 = vmatpush1.xpose.msra.mxu0 0.0
        %1437 = vmatprep.subr.mxu0 0.0
        %1438 = vmatpush1.xpose.msra.mxu0 0.0
        %1439 = vmatprep.subr.mxu0 0.0
        %1440 = vmatpush1.xpose.msra.mxu0 0.0
        %1441 = vmatprep.subr.mxu0 0.0
        %1442 = vmatpush1.xpose.msra.mxu0 0.0
        %1443 = vmatprep.subr.mxu0 0.0
        %1444 = vmatpush1.xpose.msra.mxu0 0.0
        %1445 = vmatprep.subr.mxu0 0.0
        %1446 = vmatpush1.xpose.msra.mxu0 0.0
        %1447 = vmatprep.subr.mxu0 0.0
        %1448 = vmatpush1.xpose.msra.mxu0 0.0
        %1449 = vmatprep.subr.mxu0 0.0
        %1450 = vmatpush1.xpose.msra.mxu0 0.0
        %1451 = vmatprep.subr.mxu0 0.0
        %1452 = vmatpush1.xpose.msra.mxu0 0.0
        %1453 = vmatprep.subr.mxu0 0.0
        %1454 = vmatpush1.xpose.msra.mxu0 0.0
        %1455 = vmatprep.subr.mxu0 0.0
        %1456 = vmatpush1.xpose.msra.mxu0 0.0
        %1457 = vmatprep.subr.mxu0 0.0
        %1458 = vmatpush1.xpose.msra.mxu0 0.0
        %1459 = vmatprep.subr.mxu0 0.0
        %1460 = vmatpush1.xpose.msra.mxu0 0.0
        %1461 = vmatprep.subr.mxu0 0.0
        %1462 = vmatpush1.xpose.msra.mxu0 %v1429
        %1463 = vmatprep.subr.mxu0 0.0
        %1464 = vmatpush2.xpose.msra.mxu0 0.0
        %1465 = vmatprep.subr.mxu0 0.0
        %1466 = vmatpush2.xpose.msra.mxu0 0.0
        %1467 = vmatprep.subr.mxu0 0.0
        %1468 = vmatpush2.xpose.msra.mxu0 0.0
        %1469 = vmatprep.subr.mxu0 0.0
        %1470 = vmatpush2.xpose.msra.mxu0 0.0
        %1471 = vmatprep.subr.mxu0 0.0
        %1472 = vmatpush2.xpose.msra.mxu0 0.0
        %1473 = vmatprep.subr.mxu0 0.0
        %1474 = vmatpush2.xpose.msra.mxu0 0.0
        %1475 = vmatprep.subr.mxu0 0.0
        %1476 = vmatpush2.xpose.msra.mxu0 0.0
        %1477 = vmatprep.subr.mxu0 0.0
        %1478 = vmatpush2.xpose.msra.mxu0 0.0
        %1479 = vmatprep.subr.mxu0 0.0
        %1480 = vmatpush2.xpose.msra.mxu0 0.0
        %1481 = vmatprep.subr.mxu0 0.0
        %1482 = vmatpush2.xpose.msra.mxu0 0.0
        %1483 = vmatprep.subr.mxu0 0.0
        %1484 = vmatpush2.xpose.msra.mxu0 0.0
        %1485 = vmatprep.subr.mxu0 0.0
        %1486 = vmatpush2.xpose.msra.mxu0 0.0
        %1487 = vmatprep.subr.mxu0 0.0
        %1488 = vmatpush2.xpose.msra.mxu0 0.0
        %1489 = vmatprep.subr.mxu0 0.0
        %1490 = vmatpush2.xpose.msra.mxu0 0.0
        %1491 = vmatprep.subr.mxu0 0.0
        %1492 = vmatpush2.xpose.msra.mxu0 0.0
        %1493 = vmatprep.subr.mxu0 0.0
        %1494 = vmatpush2.xpose.msra.mxu0 0.0
        %1495 = vmatprep.mubr.f32.mxu0 0.0
        %1496 = vmatmul.mubr.f32.gmra.mxu0 %v1427
        %v1497 = vpop.f32.mrf.mxu0
        %v1498 = vadd.f32 %v892, %v1497
        %v1499 = vpop.f32.mrf.mxu0
        %1500 = vdwg.mxu0
        %1501 = vrot.lane.b32.xlu0 %v779, 112
        %v1502 = vpop.permute.xlu0 %1501
        %v1503 = vsel %vm870, %v779, 0
        %v1505 = vsel %vm870, %v1502, 0
        %1507 = vmatprep.subr.mxu0 0.0
        %1508 = vmatpush1.xpose.msra.mxu0 0.0
        %1509 = vmatprep.subr.mxu0 0.0
        %1510 = vmatpush1.xpose.msra.mxu0 0.0
        %1511 = vmatprep.subr.mxu0 0.0
        %1512 = vmatpush1.xpose.msra.mxu0 0.0
        %1513 = vmatprep.subr.mxu0 0.0
        %1514 = vmatpush1.xpose.msra.mxu0 0.0
        %1515 = vmatprep.subr.mxu0 0.0
        %1516 = vmatpush1.xpose.msra.mxu0 0.0
        %1517 = vmatprep.subr.mxu0 0.0
        %1518 = vmatpush1.xpose.msra.mxu0 0.0
        %1519 = vmatprep.subr.mxu0 0.0
        %1520 = vmatpush1.xpose.msra.mxu0 0.0
        %1521 = vmatprep.subr.mxu0 0.0
        %1522 = vmatpush1.xpose.msra.mxu0 0.0
        %1523 = vmatprep.subr.mxu0 0.0
        %1524 = vmatpush1.xpose.msra.mxu0 0.0
        %1525 = vmatprep.subr.mxu0 0.0
        %1526 = vmatpush1.xpose.msra.mxu0 0.0
        %1527 = vmatprep.subr.mxu0 0.0
        %1528 = vmatpush1.xpose.msra.mxu0 0.0
        %1529 = vmatprep.subr.mxu0 0.0
        %1530 = vmatpush1.xpose.msra.mxu0 0.0
        %1531 = vmatprep.subr.mxu0 0.0
        %1532 = vmatpush1.xpose.msra.mxu0 0.0
        %1533 = vmatprep.subr.mxu0 0.0
        %1534 = vmatpush1.xpose.msra.mxu0 0.0
        %1535 = vmatprep.subr.mxu0 0.0
        %1536 = vmatpush1.xpose.msra.mxu0 0.0
        %1537 = vmatprep.subr.mxu0 0.0
        %1538 = vmatpush1.xpose.msra.mxu0 %v1505
        %1539 = vmatprep.subr.mxu0 0.0
        %1540 = vmatpush2.xpose.msra.mxu0 0.0
        %1541 = vmatprep.subr.mxu0 0.0
        %1542 = vmatpush2.xpose.msra.mxu0 0.0
        %1543 = vmatprep.subr.mxu0 0.0
        %1544 = vmatpush2.xpose.msra.mxu0 0.0
        %1545 = vmatprep.subr.mxu0 0.0
        %1546 = vmatpush2.xpose.msra.mxu0 0.0
        %1547 = vmatprep.subr.mxu0 0.0
        %1548 = vmatpush2.xpose.msra.mxu0 0.0
        %1549 = vmatprep.subr.mxu0 0.0
        %1550 = vmatpush2.xpose.msra.mxu0 0.0
        %1551 = vmatprep.subr.mxu0 0.0
        %1552 = vmatpush2.xpose.msra.mxu0 0.0
        %1553 = vmatprep.subr.mxu0 0.0
        %1554 = vmatpush2.xpose.msra.mxu0 0.0
        %1555 = vmatprep.subr.mxu0 0.0
        %1556 = vmatpush2.xpose.msra.mxu0 0.0
        %1557 = vmatprep.subr.mxu0 0.0
        %1558 = vmatpush2.xpose.msra.mxu0 0.0
        %1559 = vmatprep.subr.mxu0 0.0
        %1560 = vmatpush2.xpose.msra.mxu0 0.0
        %1561 = vmatprep.subr.mxu0 0.0
        %1562 = vmatpush2.xpose.msra.mxu0 0.0
        %1563 = vmatprep.subr.mxu0 0.0
        %1564 = vmatpush2.xpose.msra.mxu0 0.0
        %1565 = vmatprep.subr.mxu0 0.0
        %1566 = vmatpush2.xpose.msra.mxu0 0.0
        %1567 = vmatprep.subr.mxu0 0.0
        %1568 = vmatpush2.xpose.msra.mxu0 0.0
        %1569 = vmatprep.subr.mxu0 0.0
        %1570 = vmatpush2.xpose.msra.mxu0 0.0
        %1571 = vmatprep.mubr.f32.mxu0 0.0
        %1572 = vmatmul.mubr.f32.gmra.mxu0 %v1503
        %v1573 = vpop.f32.mrf.mxu0
        %v1574 = vadd.f32 %v892, %v1573
        %v1575 = vpop.f32.mrf.mxu0
        %1576 = vdwg.mxu0
        %1577 = vrot.lane.b32.xlu0 %v878, 112
        %v1578 = vpop.permute.xlu0 %1577
        %v1579 = vsel %vm870, %v878, 0
        %v1581 = vsel %vm870, %v1578, 0
        %1583 = vmatprep.subr.mxu0 0.0
        %1584 = vmatpush1.xpose.msra.mxu0 0.0
        %1585 = vmatprep.subr.mxu0 0.0
        %1586 = vmatpush1.xpose.msra.mxu0 0.0
        %1587 = vmatprep.subr.mxu0 0.0
        %1588 = vmatpush1.xpose.msra.mxu0 0.0
        %1589 = vmatprep.subr.mxu0 0.0
        %1590 = vmatpush1.xpose.msra.mxu0 0.0
        %1591 = vmatprep.subr.mxu0 0.0
        %1592 = vmatpush1.xpose.msra.mxu0 0.0
        %1593 = vmatprep.subr.mxu0 0.0
        %1594 = vmatpush1.xpose.msra.mxu0 0.0
        %1595 = vmatprep.subr.mxu0 0.0
        %1596 = vmatpush1.xpose.msra.mxu0 0.0
        %1597 = vmatprep.subr.mxu0 0.0
        %1598 = vmatpush1.xpose.msra.mxu0 0.0
        %1599 = vmatprep.subr.mxu0 0.0
        %1600 = vmatpush1.xpose.msra.mxu0 0.0
        %1601 = vmatprep.subr.mxu0 0.0
        %1602 = vmatpush1.xpose.msra.mxu0 0.0
        %1603 = vmatprep.subr.mxu0 0.0
        %1604 = vmatpush1.xpose.msra.mxu0 0.0
        %1605 = vmatprep.subr.mxu0 0.0
        %1606 = vmatpush1.xpose.msra.mxu0 0.0
        %1607 = vmatprep.subr.mxu0 0.0
        %1608 = vmatpush1.xpose.msra.mxu0 0.0
        %1609 = vmatprep.subr.mxu0 0.0
        %1610 = vmatpush1.xpose.msra.mxu0 0.0
        %1611 = vmatprep.subr.mxu0 0.0
        %1612 = vmatpush1.xpose.msra.mxu0 0.0
        %1613 = vmatprep.subr.mxu0 0.0
        %1614 = vmatpush1.xpose.msra.mxu0 %v1581
        %1615 = vmatprep.subr.mxu0 0.0
        %1616 = vmatpush2.xpose.msra.mxu0 0.0
        %1617 = vmatprep.subr.mxu0 0.0
        %1618 = vmatpush2.xpose.msra.mxu0 0.0
        %1619 = vmatprep.subr.mxu0 0.0
        %1620 = vmatpush2.xpose.msra.mxu0 0.0
        %1621 = vmatprep.subr.mxu0 0.0
        %1622 = vmatpush2.xpose.msra.mxu0 0.0
        %1623 = vmatprep.subr.mxu0 0.0
        %1624 = vmatpush2.xpose.msra.mxu0 0.0
        %1625 = vmatprep.subr.mxu0 0.0
        %1626 = vmatpush2.xpose.msra.mxu0 0.0
        %1627 = vmatprep.subr.mxu0 0.0
        %1628 = vmatpush2.xpose.msra.mxu0 0.0
        %1629 = vmatprep.subr.mxu0 0.0
        %1630 = vmatpush2.xpose.msra.mxu0 0.0
        %1631 = vmatprep.subr.mxu0 0.0
        %1632 = vmatpush2.xpose.msra.mxu0 0.0
        %1633 = vmatprep.subr.mxu0 0.0
        %1634 = vmatpush2.xpose.msra.mxu0 0.0
        %1635 = vmatprep.subr.mxu0 0.0
        %1636 = vmatpush2.xpose.msra.mxu0 0.0
        %1637 = vmatprep.subr.mxu0 0.0
        %1638 = vmatpush2.xpose.msra.mxu0 0.0
        %1639 = vmatprep.subr.mxu0 0.0
        %1640 = vmatpush2.xpose.msra.mxu0 0.0
        %1641 = vmatprep.subr.mxu0 0.0
        %1642 = vmatpush2.xpose.msra.mxu0 0.0
        %1643 = vmatprep.subr.mxu0 0.0
        %1644 = vmatpush2.xpose.msra.mxu0 0.0
        %1645 = vmatprep.subr.mxu0 0.0
        %1646 = vmatpush2.xpose.msra.mxu0 0.0
        %1647 = vmatprep.mubr.f32.mxu0 0.0
        %1648 = vmatmul.mubr.f32.gmra.mxu0 %v1579
        %v1649 = vpop.f32.mrf.mxu0
        %v1650 = vadd.f32 %v892, %v1649
        %v1651 = vpop.f32.mrf.mxu0
        %1652 = vdwg.mxu0
        %1653 = vrot.lane.b32.xlu0 %v884, 112
        %v1654 = vpop.permute.xlu0 %1653
        %v1655 = vsel %vm870, %v884, 0
        %v1657 = vsel %vm870, %v1654, 0
        %1659 = vmatprep.subr.mxu0 0.0
        %1660 = vmatpush1.xpose.msra.mxu0 0.0
        %1661 = vmatprep.subr.mxu0 0.0
        %1662 = vmatpush1.xpose.msra.mxu0 0.0
        %1663 = vmatprep.subr.mxu0 0.0
        %1664 = vmatpush1.xpose.msra.mxu0 0.0
        %1665 = vmatprep.subr.mxu0 0.0
        %1666 = vmatpush1.xpose.msra.mxu0 0.0
        %1667 = vmatprep.subr.mxu0 0.0
        %1668 = vmatpush1.xpose.msra.mxu0 0.0
        %1669 = vmatprep.subr.mxu0 0.0
        %1670 = vmatpush1.xpose.msra.mxu0 0.0
        %1671 = vmatprep.subr.mxu0 0.0
        %1672 = vmatpush1.xpose.msra.mxu0 0.0
        %1673 = vmatprep.subr.mxu0 0.0
        %1674 = vmatpush1.xpose.msra.mxu0 0.0
        %1675 = vmatprep.subr.mxu0 0.0
        %1676 = vmatpush1.xpose.msra.mxu0 0.0
        %1677 = vmatprep.subr.mxu0 0.0
        %1678 = vmatpush1.xpose.msra.mxu0 0.0
        %1679 = vmatprep.subr.mxu0 0.0
        %1680 = vmatpush1.xpose.msra.mxu0 0.0
        %1681 = vmatprep.subr.mxu0 0.0
        %1682 = vmatpush1.xpose.msra.mxu0 0.0
        %1683 = vmatprep.subr.mxu0 0.0
        %1684 = vmatpush1.xpose.msra.mxu0 0.0
        %1685 = vmatprep.subr.mxu0 0.0
        %1686 = vmatpush1.xpose.msra.mxu0 0.0
        %1687 = vmatprep.subr.mxu0 0.0
        %1688 = vmatpush1.xpose.msra.mxu0 0.0
        %1689 = vmatprep.subr.mxu0 0.0
        %1690 = vmatpush1.xpose.msra.mxu0 %v1657
        %1691 = vmatprep.subr.mxu0 0.0
        %1692 = vmatpush2.xpose.msra.mxu0 0.0
        %1693 = vmatprep.subr.mxu0 0.0
        %1694 = vmatpush2.xpose.msra.mxu0 0.0
        %1695 = vmatprep.subr.mxu0 0.0
        %1696 = vmatpush2.xpose.msra.mxu0 0.0
        %1697 = vmatprep.subr.mxu0 0.0
        %1698 = vmatpush2.xpose.msra.mxu0 0.0
        %1699 = vmatprep.subr.mxu0 0.0
        %1700 = vmatpush2.xpose.msra.mxu0 0.0
        %1701 = vmatprep.subr.mxu0 0.0
        %1702 = vmatpush2.xpose.msra.mxu0 0.0
        %1703 = vmatprep.subr.mxu0 0.0
        %1704 = vmatpush2.xpose.msra.mxu0 0.0
        %1705 = vmatprep.subr.mxu0 0.0
        %1706 = vmatpush2.xpose.msra.mxu0 0.0
        %1707 = vmatprep.subr.mxu0 0.0
        %1708 = vmatpush2.xpose.msra.mxu0 0.0
        %1709 = vmatprep.subr.mxu0 0.0
        %1710 = vmatpush2.xpose.msra.mxu0 0.0
        %1711 = vmatprep.subr.mxu0 0.0
        %1712 = vmatpush2.xpose.msra.mxu0 0.0
        %1713 = vmatprep.subr.mxu0 0.0
        %1714 = vmatpush2.xpose.msra.mxu0 0.0
        %1715 = vmatprep.subr.mxu0 0.0
        %1716 = vmatpush2.xpose.msra.mxu0 0.0
        %1717 = vmatprep.subr.mxu0 0.0
        %1718 = vmatpush2.xpose.msra.mxu0 0.0
        %1719 = vmatprep.subr.mxu0 0.0
        %1720 = vmatpush2.xpose.msra.mxu0 0.0
        %1721 = vmatprep.subr.mxu0 0.0
        %1722 = vmatpush2.xpose.msra.mxu0 0.0
        %1723 = vmatprep.mubr.f32.mxu0 0.0
        %1724 = vmatmul.mubr.f32.gmra.mxu0 %v1655
        %v1725 = vpop.f32.mrf.mxu0
        %v1726 = vadd.f32 %v892, %v1725
        %v1727 = vpop.f32.mrf.mxu0
        %1728 = vdwg.mxu0
        %1729 = vrot.lane.b32.xlu0 %v886, 112
        %v1730 = vpop.permute.xlu0 %1729
        %v1731 = vsel %vm870, %v886, 0
        %v1733 = vsel %vm870, %v1730, 0
        %1735 = vmatprep.subr.mxu0 0.0
        %1736 = vmatpush1.xpose.msra.mxu0 0.0
        %1737 = vmatprep.subr.mxu0 0.0
        %1738 = vmatpush1.xpose.msra.mxu0 0.0
        %1739 = vmatprep.subr.mxu0 0.0
        %1740 = vmatpush1.xpose.msra.mxu0 0.0
        %1741 = vmatprep.subr.mxu0 0.0
        %1742 = vmatpush1.xpose.msra.mxu0 0.0
        %1743 = vmatprep.subr.mxu0 0.0
        %1744 = vmatpush1.xpose.msra.mxu0 0.0
        %1745 = vmatprep.subr.mxu0 0.0
        %1746 = vmatpush1.xpose.msra.mxu0 0.0
        %1747 = vmatprep.subr.mxu0 0.0
        %1748 = vmatpush1.xpose.msra.mxu0 0.0
        %1749 = vmatprep.subr.mxu0 0.0
        %1750 = vmatpush1.xpose.msra.mxu0 0.0
        %1751 = vmatprep.subr.mxu0 0.0
        %1752 = vmatpush1.xpose.msra.mxu0 0.0
        %1753 = vmatprep.subr.mxu0 0.0
        %1754 = vmatpush1.xpose.msra.mxu0 0.0
        %1755 = vmatprep.subr.mxu0 0.0
        %1756 = vmatpush1.xpose.msra.mxu0 0.0
        %1757 = vmatprep.subr.mxu0 0.0
        %1758 = vmatpush1.xpose.msra.mxu0 0.0
        %1759 = vmatprep.subr.mxu0 0.0
        %1760 = vmatpush1.xpose.msra.mxu0 0.0
        %1761 = vmatprep.subr.mxu0 0.0
        %1762 = vmatpush1.xpose.msra.mxu0 0.0
        %1763 = vmatprep.subr.mxu0 0.0
        %1764 = vmatpush1.xpose.msra.mxu0 0.0
        %1765 = vmatprep.subr.mxu0 0.0
        %1766 = vmatpush1.xpose.msra.mxu0 %v1733
        %1767 = vmatprep.subr.mxu0 0.0
        %1768 = vmatpush2.xpose.msra.mxu0 0.0
        %1769 = vmatprep.subr.mxu0 0.0
        %1770 = vmatpush2.xpose.msra.mxu0 0.0
        %1771 = vmatprep.subr.mxu0 0.0
        %1772 = vmatpush2.xpose.msra.mxu0 0.0
        %1773 = vmatprep.subr.mxu0 0.0
        %1774 = vmatpush2.xpose.msra.mxu0 0.0
        %1775 = vmatprep.subr.mxu0 0.0
        %1776 = vmatpush2.xpose.msra.mxu0 0.0
        %1777 = vmatprep.subr.mxu0 0.0
        %1778 = vmatpush2.xpose.msra.mxu0 0.0
        %1779 = vmatprep.subr.mxu0 0.0
        %1780 = vmatpush2.xpose.msra.mxu0 0.0
        %1781 = vmatprep.subr.mxu0 0.0
        %1782 = vmatpush2.xpose.msra.mxu0 0.0
        %1783 = vmatprep.subr.mxu0 0.0
        %1784 = vmatpush2.xpose.msra.mxu0 0.0
        %1785 = vmatprep.subr.mxu0 0.0
        %1786 = vmatpush2.xpose.msra.mxu0 0.0
        %1787 = vmatprep.subr.mxu0 0.0
        %1788 = vmatpush2.xpose.msra.mxu0 0.0
        %1789 = vmatprep.subr.mxu0 0.0
        %1790 = vmatpush2.xpose.msra.mxu0 0.0
        %1791 = vmatprep.subr.mxu0 0.0
        %1792 = vmatpush2.xpose.msra.mxu0 0.0
        %1793 = vmatprep.subr.mxu0 0.0
        %1794 = vmatpush2.xpose.msra.mxu0 0.0
        %1795 = vmatprep.subr.mxu0 0.0
        %1796 = vmatpush2.xpose.msra.mxu0 0.0
        %1797 = vmatprep.subr.mxu0 0.0
        %1798 = vmatpush2.xpose.msra.mxu0 0.0
        %1799 = vmatprep.mubr.f32.mxu0 0.0
        %1800 = vmatmul.mubr.f32.gmra.mxu0 %v1731
        %v1801 = vpop.f32.mrf.mxu0
        %v1802 = vadd.f32 %v892, %v1801
        %v1803 = vpop.f32.mrf.mxu0
        %1804 = vdwg.mxu0
        %vm1805 = vcmask 64512
        %v1806 = vsel %vm1805, %v966, -inf
        %1807 = vmax.xlane.f32.xlu0 %v1806
        %v1808 = vpop.xlane.xlu0 %1807
        %v1809 = vsel %vm1805, %v1042, -inf
        %1810 = vmax.xlane.f32.xlu0 %v1809
        %v1811 = vpop.xlane.xlu0 %1810
        %v1812 = vsel %vm1805, %v1118, -inf
        %1813 = vmax.xlane.f32.xlu0 %v1812
        %v1814 = vpop.xlane.xlu0 %1813
        %v1815 = vsel %vm1805, %v1194, -inf
        %1816 = vmax.xlane.f32.xlu0 %v1815
        %v1817 = vpop.xlane.xlu0 %1816
        %v1818 = vsel %vm1805, %v1270, -inf
        %1819 = vmax.xlane.f32.xlu0 %v1818
        %v1820 = vpop.xlane.xlu0 %1819
        %v1821 = vsel %vm1805, %v1346, -inf
        %1822 = vmax.xlane.f32.xlu0 %v1821
        %v1823 = vpop.xlane.xlu0 %1822
        %v1824 = vsel %vm1805, %v1422, -inf
        %1825 = vmax.xlane.f32.xlu0 %v1824
        %v1826 = vpop.xlane.xlu0 %1825
        %v1827 = vsel %vm1805, %v1498, -inf
        %1828 = vmax.xlane.f32.xlu0 %v1827
        %v1829 = vpop.xlane.xlu0 %1828
        %v1830 = vsel %vm1805, %v1574, -inf
        %1831 = vmax.xlane.f32.xlu0 %v1830
        %v1832 = vpop.xlane.xlu0 %1831
        %v1833 = vsel %vm1805, %v1650, -inf
        %1834 = vmax.xlane.f32.xlu0 %v1833
        %v1835 = vpop.xlane.xlu0 %1834
        %v1836 = vsel %vm1805, %v1726, -inf
        %1837 = vmax.xlane.f32.xlu0 %v1836
        %v1838 = vpop.xlane.xlu0 %1837
        %v1839 = vsel %vm1805, %v1802, -inf
        %1840 = vmax.xlane.f32.xlu0 %v1839
        %v1841 = vpop.xlane.xlu0 %1840
        %v1842 = vsub.f32 %v966, %v1808
        %v1843 = vsub.f32 %v1042, %v1811
        %v1844 = vsub.f32 %v1118, %v1814
        %v1845 = vsub.f32 %v1194, %v1817
        %v1846 = vsub.f32 %v1270, %v1820
        %v1847 = vsub.f32 %v1346, %v1823
        %v1848 = vsub.f32 %v1422, %v1826
        %v1849 = vsub.f32 %v1498, %v1829
        %v1850 = vsub.f32 %v1574, %v1832
        %v1851 = vsub.f32 %v1650, %v1835
        %v1852 = vsub.f32 %v1726, %v1838
        %v1853 = vsub.f32 %v1802, %v1841
        %v1854 = vmul.f32 %v1842, 1.442695
        %v1855 = vpow.pop %v1854
        %v1856 = vmul.f32 %v1843, 1.442695
        %v1857 = vpow.pop %v1856
        %v1858 = vmul.f32 %v1844, 1.442695
        %v1859 = vpow.pop %v1858
        %v1860 = vmul.f32 %v1845, 1.442695
        %v1861 = vpow.pop %v1860
        %v1862 = vmul.f32 %v1846, 1.442695
        %v1863 = vpow.pop %v1862
        %v1864 = vmul.f32 %v1847, 1.442695
        %v1865 = vpow.pop %v1864
        %v1866 = vmul.f32 %v1848, 1.442695
        %v1867 = vpow.pop %v1866
        %v1868 = vmul.f32 %v1849, 1.442695
        %v1869 = vpow.pop %v1868
        %v1870 = vmul.f32 %v1850, 1.442695
        %v1871 = vpow.pop %v1870
        %v1872 = vmul.f32 %v1851, 1.442695
        %v1873 = vpow.pop %v1872
        %v1874 = vmul.f32 %v1852, 1.442695
        %v1875 = vpow.pop %v1874
        %v1876 = vmul.f32 %v1853, 1.442695
        %v1877 = vpow.pop %v1876
        %v1878 = vsel %vm1805, %v1855, 0.0
        %1879 = vadd.xlane.f32.xlu0 %v1878
        %v1880 = vpop.xlane.xlu0 %1879
        %v1881 = vsel %vm1805, %v1857, 0.0
        %1882 = vadd.xlane.f32.xlu0 %v1881
        %v1883 = vpop.xlane.xlu0 %1882
        %v1884 = vsel %vm1805, %v1859, 0.0
        %1885 = vadd.xlane.f32.xlu0 %v1884
        %v1886 = vpop.xlane.xlu0 %1885
        %v1887 = vsel %vm1805, %v1861, 0.0
        %1888 = vadd.xlane.f32.xlu0 %v1887
        %v1889 = vpop.xlane.xlu0 %1888
        %v1890 = vsel %vm1805, %v1863, 0.0
        %1891 = vadd.xlane.f32.xlu0 %v1890
        %v1892 = vpop.xlane.xlu0 %1891
        %v1893 = vsel %vm1805, %v1865, 0.0
        %1894 = vadd.xlane.f32.xlu0 %v1893
        %v1895 = vpop.xlane.xlu0 %1894
        %v1896 = vsel %vm1805, %v1867, 0.0
        %1897 = vadd.xlane.f32.xlu0 %v1896
        %v1898 = vpop.xlane.xlu0 %1897
        %v1899 = vsel %vm1805, %v1869, 0.0
        %1900 = vadd.xlane.f32.xlu0 %v1899
        %v1901 = vpop.xlane.xlu0 %1900
        %v1902 = vsel %vm1805, %v1871, 0.0
        %1903 = vadd.xlane.f32.xlu0 %v1902
        %v1904 = vpop.xlane.xlu0 %1903
        %v1905 = vsel %vm1805, %v1873, 0.0
        %1906 = vadd.xlane.f32.xlu0 %v1905
        %v1907 = vpop.xlane.xlu0 %1906
        %v1908 = vsel %vm1805, %v1875, 0.0
        %1909 = vadd.xlane.f32.xlu0 %v1908
        %v1910 = vpop.xlane.xlu0 %1909
        %v1911 = vsel %vm1805, %v1877, 0.0
        %1912 = vadd.xlane.f32.xlu0 %v1911
        %v1913 = vpop.xlane.xlu0 %1912
        %v1914 = vrcp.pop %v1880
        %v1915 = vrcp.pop %v1883
        %v1916 = vrcp.pop %v1886
        %v1917 = vrcp.pop %v1889
        %v1918 = vrcp.pop %v1892
        %v1919 = vrcp.pop %v1895
        %v1920 = vrcp.pop %v1898
        %v1921 = vrcp.pop %v1901
        %v1922 = vrcp.pop %v1904
        %v1923 = vrcp.pop %v1907
        %v1924 = vrcp.pop %v1910
        %v1925 = vrcp.pop %v1913
        %v1926 = vmul.f32 %v1880, %v1914
        %v1927 = vmul.f32 %v1883, %v1915
        %v1928 = vmul.f32 %v1886, %v1916
        %v1929 = vmul.f32 %v1889, %v1917
        %v1930 = vmul.f32 %v1892, %v1918
        %v1931 = vmul.f32 %v1895, %v1919
        %v1932 = vmul.f32 %v1898, %v1920
        %v1933 = vmul.f32 %v1901, %v1921
        %v1934 = vmul.f32 %v1904, %v1922
        %v1935 = vmul.f32 %v1907, %v1923
        %v1936 = vmul.f32 %v1910, %v1924
        %v1937 = vmul.f32 %v1913, %v1925
        %v1938 = vsub.f32 2.0, %v1926
        %v1939 = vsub.f32 2.0, %v1927
        %v1940 = vsub.f32 2.0, %v1928
        %v1941 = vsub.f32 2.0, %v1929
        %v1942 = vsub.f32 2.0, %v1930
        %v1943 = vsub.f32 2.0, %v1931
        %v1944 = vsub.f32 2.0, %v1932
        %v1945 = vsub.f32 2.0, %v1933
        %v1946 = vsub.f32 2.0, %v1934
        %v1947 = vsub.f32 2.0, %v1935
        %v1948 = vsub.f32 2.0, %v1936
        %v1949 = vsub.f32 2.0, %v1937
        %v1950 = vmul.f32 %v1914, %v1938
        %v1951 = vmul.f32 %v1915, %v1939
        %v1952 = vmul.f32 %v1916, %v1940
        %v1953 = vmul.f32 %v1917, %v1941
        %v1954 = vmul.f32 %v1918, %v1942
        %v1955 = vmul.f32 %v1919, %v1943
        %v1956 = vmul.f32 %v1920, %v1944
        %v1957 = vmul.f32 %v1921, %v1945
        %v1958 = vmul.f32 %v1922, %v1946
        %v1959 = vmul.f32 %v1923, %v1947
        %v1960 = vmul.f32 %v1924, %v1948
        %v1961 = vmul.f32 %v1925, %v1949
        %v1962 = vmul.f32 %v1855, %v1950
        %v1963 = vmul.f32 %v1857, %v1951
        %v1964 = vmul.f32 %v1859, %v1952
        %v1965 = vmul.f32 %v1861, %v1953
        %v1966 = vmul.f32 %v1863, %v1954
        %v1967 = vmul.f32 %v1865, %v1955
        %v1968 = vmul.f32 %v1867, %v1956
        %v1969 = vmul.f32 %v1869, %v1957
        %v1970 = vmul.f32 %v1871, %v1958
        %v1971 = vmul.f32 %v1873, %v1959
        %v1972 = vmul.f32 %v1875, %v1960
        %v1973 = vmul.f32 %v1877, %v1961
        %1974 = vrot.lane.b32.xlu0 %v706, 96
        %v1975 = vpop.permute.xlu0 %1974
        %v1978 = vsel %vm1805, %v1962, 0
        %1980 = vmatprep.subr.mxu0 0.0
        %1981 = vmatpush1.msra.mxu0 0.0
        %1982 = vmatprep.subr.mxu0 0.0
        %1983 = vmatpush1.msra.mxu0 0.0
        %1984 = vmatprep.subr.mxu0 0.0
        %1985 = vmatpush1.msra.mxu0 0.0
        %1986 = vmatprep.subr.mxu0 0.0
        %1987 = vmatpush1.msra.mxu0 0.0
        %1988 = vmatprep.subr.mxu0 0.0
        %1989 = vmatpush1.msra.mxu0 0.0
        %1990 = vmatprep.subr.mxu0 0.0
        %1991 = vmatpush1.msra.mxu0 0.0
        %1992 = vmatprep.subr.mxu0 0.0
        %1993 = vmatpush1.msra.mxu0 0.0
        %1994 = vmatprep.subr.mxu0 0.0
        %1995 = vmatpush1.msra.mxu0 0.0
        %1996 = vmatprep.subr.mxu0 0.0
        %1997 = vmatpush1.msra.mxu0 0.0
        %1998 = vmatprep.subr.mxu0 0.0
        %1999 = vmatpush1.msra.mxu0 0.0
        %2000 = vmatprep.subr.mxu0 0.0
        %2001 = vmatpush1.msra.mxu0 0.0
        %2002 = vmatprep.subr.mxu0 0.0
        %2003 = vmatpush1.msra.mxu0 0.0
        %2004 = vmatprep.subr.mxu0 0.0
        %2005 = vmatpush1.msra.mxu0 0.0
        %2006 = vmatprep.subr.mxu0 0.0
        %2007 = vmatpush1.msra.mxu0 0.0
        %2008 = vmatprep.subr.mxu0 0.0
        %2009 = vmatpush1.msra.mxu0 0.0
        %2010 = vmatprep.subr.mxu0 0.0
        %2011 = vmatpush1.msra.mxu0 %v1975
        %2012 = vmatprep.subr.mxu0 0.0
        %2013 = vmatpush2.msra.mxu0 0.0
        %2014 = vmatprep.subr.mxu0 0.0
        %2015 = vmatpush2.msra.mxu0 0.0
        %2016 = vmatprep.subr.mxu0 0.0
        %2017 = vmatpush2.msra.mxu0 0.0
        %2018 = vmatprep.subr.mxu0 0.0
        %2019 = vmatpush2.msra.mxu0 0.0
        %2020 = vmatprep.subr.mxu0 0.0
        %2021 = vmatpush2.msra.mxu0 0.0
        %2022 = vmatprep.subr.mxu0 0.0
        %2023 = vmatpush2.msra.mxu0 0.0
        %2024 = vmatprep.subr.mxu0 0.0
        %2025 = vmatpush2.msra.mxu0 0.0
        %2026 = vmatprep.subr.mxu0 0.0
        %2027 = vmatpush2.msra.mxu0 0.0
        %2028 = vmatprep.subr.mxu0 0.0
        %2029 = vmatpush2.msra.mxu0 0.0
        %2030 = vmatprep.subr.mxu0 0.0
        %2031 = vmatpush2.msra.mxu0 0.0
        %2032 = vmatprep.subr.mxu0 0.0
        %2033 = vmatpush2.msra.mxu0 0.0
        %2034 = vmatprep.subr.mxu0 0.0
        %2035 = vmatpush2.msra.mxu0 0.0
        %2036 = vmatprep.subr.mxu0 0.0
        %2037 = vmatpush2.msra.mxu0 0.0
        %2038 = vmatprep.subr.mxu0 0.0
        %2039 = vmatpush2.msra.mxu0 0.0
        %2040 = vmatprep.subr.mxu0 0.0
        %2041 = vmatpush2.msra.mxu0 0.0
        %2042 = vmatprep.subr.mxu0 0.0
        %2043 = vmatpush2.msra.mxu0 0.0
        %2044 = vmatprep.mubr.f32.mxu0 0.0
        %2045 = vmatmul.mubr.f32.gmra.mxu0 %v1978
        %v2046 = vpop.f32.mrf.mxu0
        %v2047 = vadd.f32 0.0, %v2046
        %v2048 = vpop.f32.mrf.mxu0
        %2049 = vdwg.mxu0
        %2050 = vrot.lane.b32.xlu0 %v853, 96
        %v2051 = vpop.permute.xlu0 %2050
        %v2054 = vsel %vm1805, %v1963, 0
        %2056 = vmatprep.subr.mxu0 0.0
        %2057 = vmatpush1.msra.mxu0 0.0
        %2058 = vmatprep.subr.mxu0 0.0
        %2059 = vmatpush1.msra.mxu0 0.0
        %2060 = vmatprep.subr.mxu0 0.0
        %2061 = vmatpush1.msra.mxu0 0.0
        %2062 = vmatprep.subr.mxu0 0.0
        %2063 = vmatpush1.msra.mxu0 0.0
        %2064 = vmatprep.subr.mxu0 0.0
        %2065 = vmatpush1.msra.mxu0 0.0
        %2066 = vmatprep.subr.mxu0 0.0
        %2067 = vmatpush1.msra.mxu0 0.0
        %2068 = vmatprep.subr.mxu0 0.0
        %2069 = vmatpush1.msra.mxu0 0.0
        %2070 = vmatprep.subr.mxu0 0.0
        %2071 = vmatpush1.msra.mxu0 0.0
        %2072 = vmatprep.subr.mxu0 0.0
        %2073 = vmatpush1.msra.mxu0 0.0
        %2074 = vmatprep.subr.mxu0 0.0
        %2075 = vmatpush1.msra.mxu0 0.0
        %2076 = vmatprep.subr.mxu0 0.0
        %2077 = vmatpush1.msra.mxu0 0.0
        %2078 = vmatprep.subr.mxu0 0.0
        %2079 = vmatpush1.msra.mxu0 0.0
        %2080 = vmatprep.subr.mxu0 0.0
        %2081 = vmatpush1.msra.mxu0 0.0
        %2082 = vmatprep.subr.mxu0 0.0
        %2083 = vmatpush1.msra.mxu0 0.0
        %2084 = vmatprep.subr.mxu0 0.0
        %2085 = vmatpush1.msra.mxu0 0.0
        %2086 = vmatprep.subr.mxu0 0.0
        %2087 = vmatpush1.msra.mxu0 %v2051
        %2088 = vmatprep.subr.mxu0 0.0
        %2089 = vmatpush2.msra.mxu0 0.0
        %2090 = vmatprep.subr.mxu0 0.0
        %2091 = vmatpush2.msra.mxu0 0.0
        %2092 = vmatprep.subr.mxu0 0.0
        %2093 = vmatpush2.msra.mxu0 0.0
        %2094 = vmatprep.subr.mxu0 0.0
        %2095 = vmatpush2.msra.mxu0 0.0
        %2096 = vmatprep.subr.mxu0 0.0
        %2097 = vmatpush2.msra.mxu0 0.0
        %2098 = vmatprep.subr.mxu0 0.0
        %2099 = vmatpush2.msra.mxu0 0.0
        %2100 = vmatprep.subr.mxu0 0.0
        %2101 = vmatpush2.msra.mxu0 0.0
        %2102 = vmatprep.subr.mxu0 0.0
        %2103 = vmatpush2.msra.mxu0 0.0
        %2104 = vmatprep.subr.mxu0 0.0
        %2105 = vmatpush2.msra.mxu0 0.0
        %2106 = vmatprep.subr.mxu0 0.0
        %2107 = vmatpush2.msra.mxu0 0.0
        %2108 = vmatprep.subr.mxu0 0.0
        %2109 = vmatpush2.msra.mxu0 0.0
        %2110 = vmatprep.subr.mxu0 0.0
        %2111 = vmatpush2.msra.mxu0 0.0
        %2112 = vmatprep.subr.mxu0 0.0
        %2113 = vmatpush2.msra.mxu0 0.0
        %2114 = vmatprep.subr.mxu0 0.0
        %2115 = vmatpush2.msra.mxu0 0.0
        %2116 = vmatprep.subr.mxu0 0.0
        %2117 = vmatpush2.msra.mxu0 0.0
        %2118 = vmatprep.subr.mxu0 0.0
        %2119 = vmatpush2.msra.mxu0 0.0
        %2120 = vmatprep.mubr.f32.mxu0 0.0
        %2121 = vmatmul.mubr.f32.gmra.mxu0 %v2054
        %v2122 = vpop.f32.mrf.mxu0
        %v2123 = vadd.f32 0.0, %v2122
        %v2124 = vpop.f32.mrf.mxu0
        %2125 = vdwg.mxu0
        %2126 = vrot.lane.b32.xlu0 %v860, 96
        %v2127 = vpop.permute.xlu0 %2126
        %v2130 = vsel %vm1805, %v1964, 0
        %2132 = vmatprep.subr.mxu0 0.0
        %2133 = vmatpush1.msra.mxu0 0.0
        %2134 = vmatprep.subr.mxu0 0.0
        %2135 = vmatpush1.msra.mxu0 0.0
        %2136 = vmatprep.subr.mxu0 0.0
        %2137 = vmatpush1.msra.mxu0 0.0
        %2138 = vmatprep.subr.mxu0 0.0
        %2139 = vmatpush1.msra.mxu0 0.0
        %2140 = vmatprep.subr.mxu0 0.0
        %2141 = vmatpush1.msra.mxu0 0.0
        %2142 = vmatprep.subr.mxu0 0.0
        %2143 = vmatpush1.msra.mxu0 0.0
        %2144 = vmatprep.subr.mxu0 0.0
        %2145 = vmatpush1.msra.mxu0 0.0
        %2146 = vmatprep.subr.mxu0 0.0
        %2147 = vmatpush1.msra.mxu0 0.0
        %2148 = vmatprep.subr.mxu0 0.0
        %2149 = vmatpush1.msra.mxu0 0.0
        %2150 = vmatprep.subr.mxu0 0.0
        %2151 = vmatpush1.msra.mxu0 0.0
        %2152 = vmatprep.subr.mxu0 0.0
        %2153 = vmatpush1.msra.mxu0 0.0
        %2154 = vmatprep.subr.mxu0 0.0
        %2155 = vmatpush1.msra.mxu0 0.0
        %2156 = vmatprep.subr.mxu0 0.0
        %2157 = vmatpush1.msra.mxu0 0.0
        %2158 = vmatprep.subr.mxu0 0.0
        %2159 = vmatpush1.msra.mxu0 0.0
        %2160 = vmatprep.subr.mxu0 0.0
        %2161 = vmatpush1.msra.mxu0 0.0
        %2162 = vmatprep.subr.mxu0 0.0
        %2163 = vmatpush1.msra.mxu0 %v2127
        %2164 = vmatprep.subr.mxu0 0.0
        %2165 = vmatpush2.msra.mxu0 0.0
        %2166 = vmatprep.subr.mxu0 0.0
        %2167 = vmatpush2.msra.mxu0 0.0
        %2168 = vmatprep.subr.mxu0 0.0
        %2169 = vmatpush2.msra.mxu0 0.0
        %2170 = vmatprep.subr.mxu0 0.0
        %2171 = vmatpush2.msra.mxu0 0.0
        %2172 = vmatprep.subr.mxu0 0.0
        %2173 = vmatpush2.msra.mxu0 0.0
        %2174 = vmatprep.subr.mxu0 0.0
        %2175 = vmatpush2.msra.mxu0 0.0
        %2176 = vmatprep.subr.mxu0 0.0
        %2177 = vmatpush2.msra.mxu0 0.0
        %2178 = vmatprep.subr.mxu0 0.0
        %2179 = vmatpush2.msra.mxu0 0.0
        %2180 = vmatprep.subr.mxu0 0.0
        %2181 = vmatpush2.msra.mxu0 0.0
        %2182 = vmatprep.subr.mxu0 0.0
        %2183 = vmatpush2.msra.mxu0 0.0
        %2184 = vmatprep.subr.mxu0 0.0
        %2185 = vmatpush2.msra.mxu0 0.0
        %2186 = vmatprep.subr.mxu0 0.0
        %2187 = vmatpush2.msra.mxu0 0.0
        %2188 = vmatprep.subr.mxu0 0.0
        %2189 = vmatpush2.msra.mxu0 0.0
        %2190 = vmatprep.subr.mxu0 0.0
        %2191 = vmatpush2.msra.mxu0 0.0
        %2192 = vmatprep.subr.mxu0 0.0
        %2193 = vmatpush2.msra.mxu0 0.0
        %2194 = vmatprep.subr.mxu0 0.0
        %2195 = vmatpush2.msra.mxu0 0.0
        %2196 = vmatprep.mubr.f32.mxu0 0.0
        %2197 = vmatmul.mubr.f32.gmra.mxu0 %v2130
        %v2198 = vpop.f32.mrf.mxu0
        %v2199 = vadd.f32 0.0, %v2198
        %v2200 = vpop.f32.mrf.mxu0
        %2201 = vdwg.mxu0
        %2202 = vrot.lane.b32.xlu0 %v862, 96
        %v2203 = vpop.permute.xlu0 %2202
        %v2206 = vsel %vm1805, %v1965, 0
        %2208 = vmatprep.subr.mxu0 0.0
        %2209 = vmatpush1.msra.mxu0 0.0
        %2210 = vmatprep.subr.mxu0 0.0
        %2211 = vmatpush1.msra.mxu0 0.0
        %2212 = vmatprep.subr.mxu0 0.0
        %2213 = vmatpush1.msra.mxu0 0.0
        %2214 = vmatprep.subr.mxu0 0.0
        %2215 = vmatpush1.msra.mxu0 0.0
        %2216 = vmatprep.subr.mxu0 0.0
        %2217 = vmatpush1.msra.mxu0 0.0
        %2218 = vmatprep.subr.mxu0 0.0
        %2219 = vmatpush1.msra.mxu0 0.0
        %2220 = vmatprep.subr.mxu0 0.0
        %2221 = vmatpush1.msra.mxu0 0.0
        %2222 = vmatprep.subr.mxu0 0.0
        %2223 = vmatpush1.msra.mxu0 0.0
        %2224 = vmatprep.subr.mxu0 0.0
        %2225 = vmatpush1.msra.mxu0 0.0
        %2226 = vmatprep.subr.mxu0 0.0
        %2227 = vmatpush1.msra.mxu0 0.0
        %2228 = vmatprep.subr.mxu0 0.0
        %2229 = vmatpush1.msra.mxu0 0.0
        %2230 = vmatprep.subr.mxu0 0.0
        %2231 = vmatpush1.msra.mxu0 0.0
        %2232 = vmatprep.subr.mxu0 0.0
        %2233 = vmatpush1.msra.mxu0 0.0
        %2234 = vmatprep.subr.mxu0 0.0
        %2235 = vmatpush1.msra.mxu0 0.0
        %2236 = vmatprep.subr.mxu0 0.0
        %2237 = vmatpush1.msra.mxu0 0.0
        %2238 = vmatprep.subr.mxu0 0.0
        %2239 = vmatpush1.msra.mxu0 %v2203
        %2240 = vmatprep.subr.mxu0 0.0
        %2241 = vmatpush2.msra.mxu0 0.0
        %2242 = vmatprep.subr.mxu0 0.0
        %2243 = vmatpush2.msra.mxu0 0.0
        %2244 = vmatprep.subr.mxu0 0.0
        %2245 = vmatpush2.msra.mxu0 0.0
        %2246 = vmatprep.subr.mxu0 0.0
        %2247 = vmatpush2.msra.mxu0 0.0
        %2248 = vmatprep.subr.mxu0 0.0
        %2249 = vmatpush2.msra.mxu0 0.0
        %2250 = vmatprep.subr.mxu0 0.0
        %2251 = vmatpush2.msra.mxu0 0.0
        %2252 = vmatprep.subr.mxu0 0.0
        %2253 = vmatpush2.msra.mxu0 0.0
        %2254 = vmatprep.subr.mxu0 0.0
        %2255 = vmatpush2.msra.mxu0 0.0
        %2256 = vmatprep.subr.mxu0 0.0
        %2257 = vmatpush2.msra.mxu0 0.0
        %2258 = vmatprep.subr.mxu0 0.0
        %2259 = vmatpush2.msra.mxu0 0.0
        %2260 = vmatprep.subr.mxu0 0.0
        %2261 = vmatpush2.msra.mxu0 0.0
        %2262 = vmatprep.subr.mxu0 0.0
        %2263 = vmatpush2.msra.mxu0 0.0
        %2264 = vmatprep.subr.mxu0 0.0
        %2265 = vmatpush2.msra.mxu0 0.0
        %2266 = vmatprep.subr.mxu0 0.0
        %2267 = vmatpush2.msra.mxu0 0.0
        %2268 = vmatprep.subr.mxu0 0.0
        %2269 = vmatpush2.msra.mxu0 0.0
        %2270 = vmatprep.subr.mxu0 0.0
        %2271 = vmatpush2.msra.mxu0 0.0
        %2272 = vmatprep.mubr.f32.mxu0 0.0
        %2273 = vmatmul.mubr.f32.gmra.mxu0 %v2206
        %v2274 = vpop.f32.mrf.mxu0
        %v2275 = vadd.f32 0.0, %v2274
        %v2276 = vpop.f32.mrf.mxu0
        %2277 = vdwg.mxu0
        %2278 = vrot.lane.b32.xlu0 %v864, 96
        %v2279 = vpop.permute.xlu0 %2278
        %v2282 = vsel %vm1805, %v1966, 0
        %2284 = vmatprep.subr.mxu0 0.0
        %2285 = vmatpush1.msra.mxu0 0.0
        %2286 = vmatprep.subr.mxu0 0.0
        %2287 = vmatpush1.msra.mxu0 0.0
        %2288 = vmatprep.subr.mxu0 0.0
        %2289 = vmatpush1.msra.mxu0 0.0
        %2290 = vmatprep.subr.mxu0 0.0
        %2291 = vmatpush1.msra.mxu0 0.0
        %2292 = vmatprep.subr.mxu0 0.0
        %2293 = vmatpush1.msra.mxu0 0.0
        %2294 = vmatprep.subr.mxu0 0.0
        %2295 = vmatpush1.msra.mxu0 0.0
        %2296 = vmatprep.subr.mxu0 0.0
        %2297 = vmatpush1.msra.mxu0 0.0
        %2298 = vmatprep.subr.mxu0 0.0
        %2299 = vmatpush1.msra.mxu0 0.0
        %2300 = vmatprep.subr.mxu0 0.0
        %2301 = vmatpush1.msra.mxu0 0.0
        %2302 = vmatprep.subr.mxu0 0.0
        %2303 = vmatpush1.msra.mxu0 0.0
        %2304 = vmatprep.subr.mxu0 0.0
        %2305 = vmatpush1.msra.mxu0 0.0
        %2306 = vmatprep.subr.mxu0 0.0
        %2307 = vmatpush1.msra.mxu0 0.0
        %2308 = vmatprep.subr.mxu0 0.0
        %2309 = vmatpush1.msra.mxu0 0.0
        %2310 = vmatprep.subr.mxu0 0.0
        %2311 = vmatpush1.msra.mxu0 0.0
        %2312 = vmatprep.subr.mxu0 0.0
        %2313 = vmatpush1.msra.mxu0 0.0
        %2314 = vmatprep.subr.mxu0 0.0
        %2315 = vmatpush1.msra.mxu0 %v2279
        %2316 = vmatprep.subr.mxu0 0.0
        %2317 = vmatpush2.msra.mxu0 0.0
        %2318 = vmatprep.subr.mxu0 0.0
        %2319 = vmatpush2.msra.mxu0 0.0
        %2320 = vmatprep.subr.mxu0 0.0
        %2321 = vmatpush2.msra.mxu0 0.0
        %2322 = vmatprep.subr.mxu0 0.0
        %2323 = vmatpush2.msra.mxu0 0.0
        %2324 = vmatprep.subr.mxu0 0.0
        %2325 = vmatpush2.msra.mxu0 0.0
        %2326 = vmatprep.subr.mxu0 0.0
        %2327 = vmatpush2.msra.mxu0 0.0
        %2328 = vmatprep.subr.mxu0 0.0
        %2329 = vmatpush2.msra.mxu0 0.0
        %2330 = vmatprep.subr.mxu0 0.0
        %2331 = vmatpush2.msra.mxu0 0.0
        %2332 = vmatprep.subr.mxu0 0.0
        %2333 = vmatpush2.msra.mxu0 0.0
        %2334 = vmatprep.subr.mxu0 0.0
        %2335 = vmatpush2.msra.mxu0 0.0
        %2336 = vmatprep.subr.mxu0 0.0
        %2337 = vmatpush2.msra.mxu0 0.0
        %2338 = vmatprep.subr.mxu0 0.0
        %2339 = vmatpush2.msra.mxu0 0.0
        %2340 = vmatprep.subr.mxu0 0.0
        %2341 = vmatpush2.msra.mxu0 0.0
        %2342 = vmatprep.subr.mxu0 0.0
        %2343 = vmatpush2.msra.mxu0 0.0
        %2344 = vmatprep.subr.mxu0 0.0
        %2345 = vmatpush2.msra.mxu0 0.0
        %2346 = vmatprep.subr.mxu0 0.0
        %2347 = vmatpush2.msra.mxu0 0.0
        %2348 = vmatprep.mubr.f32.mxu0 0.0
        %2349 = vmatmul.mubr.f32.gmra.mxu0 %v2282
        %v2350 = vpop.f32.mrf.mxu0
        %v2351 = vadd.f32 0.0, %v2350
        %v2352 = vpop.f32.mrf.mxu0
        %2353 = vdwg.mxu0
        %2354 = vrot.lane.b32.xlu0 %v871, 96
        %v2355 = vpop.permute.xlu0 %2354
        %v2358 = vsel %vm1805, %v1967, 0
        %2360 = vmatprep.subr.mxu0 0.0
        %2361 = vmatpush1.msra.mxu0 0.0
        %2362 = vmatprep.subr.mxu0 0.0
        %2363 = vmatpush1.msra.mxu0 0.0
        %2364 = vmatprep.subr.mxu0 0.0
        %2365 = vmatpush1.msra.mxu0 0.0
        %2366 = vmatprep.subr.mxu0 0.0
        %2367 = vmatpush1.msra.mxu0 0.0
        %2368 = vmatprep.subr.mxu0 0.0
        %2369 = vmatpush1.msra.mxu0 0.0
        %2370 = vmatprep.subr.mxu0 0.0
        %2371 = vmatpush1.msra.mxu0 0.0
        %2372 = vmatprep.subr.mxu0 0.0
        %2373 = vmatpush1.msra.mxu0 0.0
        %2374 = vmatprep.subr.mxu0 0.0
        %2375 = vmatpush1.msra.mxu0 0.0
        %2376 = vmatprep.subr.mxu0 0.0
        %2377 = vmatpush1.msra.mxu0 0.0
        %2378 = vmatprep.subr.mxu0 0.0
        %2379 = vmatpush1.msra.mxu0 0.0
        %2380 = vmatprep.subr.mxu0 0.0
        %2381 = vmatpush1.msra.mxu0 0.0
        %2382 = vmatprep.subr.mxu0 0.0
        %2383 = vmatpush1.msra.mxu0 0.0
        %2384 = vmatprep.subr.mxu0 0.0
        %2385 = vmatpush1.msra.mxu0 0.0
        %2386 = vmatprep.subr.mxu0 0.0
        %2387 = vmatpush1.msra.mxu0 0.0
        %2388 = vmatprep.subr.mxu0 0.0
        %2389 = vmatpush1.msra.mxu0 0.0
        %2390 = vmatprep.subr.mxu0 0.0
        %2391 = vmatpush1.msra.mxu0 %v2355
        %2392 = vmatprep.subr.mxu0 0.0
        %2393 = vmatpush2.msra.mxu0 0.0
        %2394 = vmatprep.subr.mxu0 0.0
        %2395 = vmatpush2.msra.mxu0 0.0
        %2396 = vmatprep.subr.mxu0 0.0
        %2397 = vmatpush2.msra.mxu0 0.0
        %2398 = vmatprep.subr.mxu0 0.0
        %2399 = vmatpush2.msra.mxu0 0.0
        %2400 = vmatprep.subr.mxu0 0.0
        %2401 = vmatpush2.msra.mxu0 0.0
        %2402 = vmatprep.subr.mxu0 0.0
        %2403 = vmatpush2.msra.mxu0 0.0
        %2404 = vmatprep.subr.mxu0 0.0
        %2405 = vmatpush2.msra.mxu0 0.0
        %2406 = vmatprep.subr.mxu0 0.0
        %2407 = vmatpush2.msra.mxu0 0.0
        %2408 = vmatprep.subr.mxu0 0.0
        %2409 = vmatpush2.msra.mxu0 0.0
        %2410 = vmatprep.subr.mxu0 0.0
        %2411 = vmatpush2.msra.mxu0 0.0
        %2412 = vmatprep.subr.mxu0 0.0
        %2413 = vmatpush2.msra.mxu0 0.0
        %2414 = vmatprep.subr.mxu0 0.0
        %2415 = vmatpush2.msra.mxu0 0.0
        %2416 = vmatprep.subr.mxu0 0.0
        %2417 = vmatpush2.msra.mxu0 0.0
        %2418 = vmatprep.subr.mxu0 0.0
        %2419 = vmatpush2.msra.mxu0 0.0
        %2420 = vmatprep.subr.mxu0 0.0
        %2421 = vmatpush2.msra.mxu0 0.0
        %2422 = vmatprep.subr.mxu0 0.0
        %2423 = vmatpush2.msra.mxu0 0.0
        %2424 = vmatprep.mubr.f32.mxu0 0.0
        %2425 = vmatmul.mubr.f32.gmra.mxu0 %v2358
        %v2426 = vpop.f32.mrf.mxu0
        %v2427 = vadd.f32 0.0, %v2426
        %v2428 = vpop.f32.mrf.mxu0
        %2429 = vdwg.mxu0
        %2430 = vrot.lane.b32.xlu0 %v873, 96
        %v2431 = vpop.permute.xlu0 %2430
        %v2434 = vsel %vm1805, %v1968, 0
        %2436 = vmatprep.subr.mxu0 0.0
        %2437 = vmatpush1.msra.mxu0 0.0
        %2438 = vmatprep.subr.mxu0 0.0
        %2439 = vmatpush1.msra.mxu0 0.0
        %2440 = vmatprep.subr.mxu0 0.0
        %2441 = vmatpush1.msra.mxu0 0.0
        %2442 = vmatprep.subr.mxu0 0.0
        %2443 = vmatpush1.msra.mxu0 0.0
        %2444 = vmatprep.subr.mxu0 0.0
        %2445 = vmatpush1.msra.mxu0 0.0
        %2446 = vmatprep.subr.mxu0 0.0
        %2447 = vmatpush1.msra.mxu0 0.0
        %2448 = vmatprep.subr.mxu0 0.0
        %2449 = vmatpush1.msra.mxu0 0.0
        %2450 = vmatprep.subr.mxu0 0.0
        %2451 = vmatpush1.msra.mxu0 0.0
        %2452 = vmatprep.subr.mxu0 0.0
        %2453 = vmatpush1.msra.mxu0 0.0
        %2454 = vmatprep.subr.mxu0 0.0
        %2455 = vmatpush1.msra.mxu0 0.0
        %2456 = vmatprep.subr.mxu0 0.0
        %2457 = vmatpush1.msra.mxu0 0.0
        %2458 = vmatprep.subr.mxu0 0.0
        %2459 = vmatpush1.msra.mxu0 0.0
        %2460 = vmatprep.subr.mxu0 0.0
        %2461 = vmatpush1.msra.mxu0 0.0
        %2462 = vmatprep.subr.mxu0 0.0
        %2463 = vmatpush1.msra.mxu0 0.0
        %2464 = vmatprep.subr.mxu0 0.0
        %2465 = vmatpush1.msra.mxu0 0.0
        %2466 = vmatprep.subr.mxu0 0.0
        %2467 = vmatpush1.msra.mxu0 %v2431
        %2468 = vmatprep.subr.mxu0 0.0
        %2469 = vmatpush2.msra.mxu0 0.0
        %2470 = vmatprep.subr.mxu0 0.0
        %2471 = vmatpush2.msra.mxu0 0.0
        %2472 = vmatprep.subr.mxu0 0.0
        %2473 = vmatpush2.msra.mxu0 0.0
        %2474 = vmatprep.subr.mxu0 0.0
        %2475 = vmatpush2.msra.mxu0 0.0
        %2476 = vmatprep.subr.mxu0 0.0
        %2477 = vmatpush2.msra.mxu0 0.0
        %2478 = vmatprep.subr.mxu0 0.0
        %2479 = vmatpush2.msra.mxu0 0.0
        %2480 = vmatprep.subr.mxu0 0.0
        %2481 = vmatpush2.msra.mxu0 0.0
        %2482 = vmatprep.subr.mxu0 0.0
        %2483 = vmatpush2.msra.mxu0 0.0
        %2484 = vmatprep.subr.mxu0 0.0
        %2485 = vmatpush2.msra.mxu0 0.0
        %2486 = vmatprep.subr.mxu0 0.0
        %2487 = vmatpush2.msra.mxu0 0.0
        %2488 = vmatprep.subr.mxu0 0.0
        %2489 = vmatpush2.msra.mxu0 0.0
        %2490 = vmatprep.subr.mxu0 0.0
        %2491 = vmatpush2.msra.mxu0 0.0
        %2492 = vmatprep.subr.mxu0 0.0
        %2493 = vmatpush2.msra.mxu0 0.0
        %2494 = vmatprep.subr.mxu0 0.0
        %2495 = vmatpush2.msra.mxu0 0.0
        %2496 = vmatprep.subr.mxu0 0.0
        %2497 = vmatpush2.msra.mxu0 0.0
        %2498 = vmatprep.subr.mxu0 0.0
        %2499 = vmatpush2.msra.mxu0 0.0
        %2500 = vmatprep.mubr.f32.mxu0 0.0
        %2501 = vmatmul.mubr.f32.gmra.mxu0 %v2434
        %v2502 = vpop.f32.mrf.mxu0
        %v2503 = vadd.f32 0.0, %v2502
        %v2504 = vpop.f32.mrf.mxu0
        %2505 = vdwg.mxu0
        %2506 = vrot.lane.b32.xlu0 %v875, 96
        %v2507 = vpop.permute.xlu0 %2506
        %v2510 = vsel %vm1805, %v1969, 0
        %2512 = vmatprep.subr.mxu0 0.0
        %2513 = vmatpush1.msra.mxu0 0.0
        %2514 = vmatprep.subr.mxu0 0.0
        %2515 = vmatpush1.msra.mxu0 0.0
        %2516 = vmatprep.subr.mxu0 0.0
        %2517 = vmatpush1.msra.mxu0 0.0
        %2518 = vmatprep.subr.mxu0 0.0
        %2519 = vmatpush1.msra.mxu0 0.0
        %2520 = vmatprep.subr.mxu0 0.0
        %2521 = vmatpush1.msra.mxu0 0.0
        %2522 = vmatprep.subr.mxu0 0.0
        %2523 = vmatpush1.msra.mxu0 0.0
        %2524 = vmatprep.subr.mxu0 0.0
        %2525 = vmatpush1.msra.mxu0 0.0
        %2526 = vmatprep.subr.mxu0 0.0
        %2527 = vmatpush1.msra.mxu0 0.0
        %2528 = vmatprep.subr.mxu0 0.0
        %2529 = vmatpush1.msra.mxu0 0.0
        %2530 = vmatprep.subr.mxu0 0.0
        %2531 = vmatpush1.msra.mxu0 0.0
        %2532 = vmatprep.subr.mxu0 0.0
        %2533 = vmatpush1.msra.mxu0 0.0
        %2534 = vmatprep.subr.mxu0 0.0
        %2535 = vmatpush1.msra.mxu0 0.0
        %2536 = vmatprep.subr.mxu0 0.0
        %2537 = vmatpush1.msra.mxu0 0.0
        %2538 = vmatprep.subr.mxu0 0.0
        %2539 = vmatpush1.msra.mxu0 0.0
        %2540 = vmatprep.subr.mxu0 0.0
        %2541 = vmatpush1.msra.mxu0 0.0
        %2542 = vmatprep.subr.mxu0 0.0
        %2543 = vmatpush1.msra.mxu0 %v2507
        %2544 = vmatprep.subr.mxu0 0.0
        %2545 = vmatpush2.msra.mxu0 0.0
        %2546 = vmatprep.subr.mxu0 0.0
        %2547 = vmatpush2.msra.mxu0 0.0
        %2548 = vmatprep.subr.mxu0 0.0
        %2549 = vmatpush2.msra.mxu0 0.0
        %2550 = vmatprep.subr.mxu0 0.0
        %2551 = vmatpush2.msra.mxu0 0.0
        %2552 = vmatprep.subr.mxu0 0.0
        %2553 = vmatpush2.msra.mxu0 0.0
        %2554 = vmatprep.subr.mxu0 0.0
        %2555 = vmatpush2.msra.mxu0 0.0
        %2556 = vmatprep.subr.mxu0 0.0
        %2557 = vmatpush2.msra.mxu0 0.0
        %2558 = vmatprep.subr.mxu0 0.0
        %2559 = vmatpush2.msra.mxu0 0.0
        %2560 = vmatprep.subr.mxu0 0.0
        %2561 = vmatpush2.msra.mxu0 0.0
        %2562 = vmatprep.subr.mxu0 0.0
        %2563 = vmatpush2.msra.mxu0 0.0
        %2564 = vmatprep.subr.mxu0 0.0
        %2565 = vmatpush2.msra.mxu0 0.0
        %2566 = vmatprep.subr.mxu0 0.0
        %2567 = vmatpush2.msra.mxu0 0.0
        %2568 = vmatprep.subr.mxu0 0.0
        %2569 = vmatpush2.msra.mxu0 0.0
        %2570 = vmatprep.subr.mxu0 0.0
        %2571 = vmatpush2.msra.mxu0 0.0
        %2572 = vmatprep.subr.mxu0 0.0
        %2573 = vmatpush2.msra.mxu0 0.0
        %2574 = vmatprep.subr.mxu0 0.0
        %2575 = vmatpush2.msra.mxu0 0.0
        %2576 = vmatprep.mubr.f32.mxu0 0.0
        %2577 = vmatmul.mubr.f32.gmra.mxu0 %v2510
        %v2578 = vpop.f32.mrf.mxu0
        %v2579 = vadd.f32 0.0, %v2578
        %v2580 = vpop.f32.mrf.mxu0
        %2581 = vdwg.mxu0
        %2582 = vrot.lane.b32.xlu0 %v779, 96
        %v2583 = vpop.permute.xlu0 %2582
        %v2586 = vsel %vm1805, %v1970, 0
        %2588 = vmatprep.subr.mxu0 0.0
        %2589 = vmatpush1.msra.mxu0 0.0
        %2590 = vmatprep.subr.mxu0 0.0
        %2591 = vmatpush1.msra.mxu0 0.0
        %2592 = vmatprep.subr.mxu0 0.0
        %2593 = vmatpush1.msra.mxu0 0.0
        %2594 = vmatprep.subr.mxu0 0.0
        %2595 = vmatpush1.msra.mxu0 0.0
        %2596 = vmatprep.subr.mxu0 0.0
        %2597 = vmatpush1.msra.mxu0 0.0
        %2598 = vmatprep.subr.mxu0 0.0
        %2599 = vmatpush1.msra.mxu0 0.0
        %2600 = vmatprep.subr.mxu0 0.0
        %2601 = vmatpush1.msra.mxu0 0.0
        %2602 = vmatprep.subr.mxu0 0.0
        %2603 = vmatpush1.msra.mxu0 0.0
        %2604 = vmatprep.subr.mxu0 0.0
        %2605 = vmatpush1.msra.mxu0 0.0
        %2606 = vmatprep.subr.mxu0 0.0
        %2607 = vmatpush1.msra.mxu0 0.0
        %2608 = vmatprep.subr.mxu0 0.0
        %2609 = vmatpush1.msra.mxu0 0.0
        %2610 = vmatprep.subr.mxu0 0.0
        %2611 = vmatpush1.msra.mxu0 0.0
        %2612 = vmatprep.subr.mxu0 0.0
        %2613 = vmatpush1.msra.mxu0 0.0
        %2614 = vmatprep.subr.mxu0 0.0
        %2615 = vmatpush1.msra.mxu0 0.0
        %2616 = vmatprep.subr.mxu0 0.0
        %2617 = vmatpush1.msra.mxu0 0.0
        %2618 = vmatprep.subr.mxu0 0.0
        %2619 = vmatpush1.msra.mxu0 %v2583
        %2620 = vmatprep.subr.mxu0 0.0
        %2621 = vmatpush2.msra.mxu0 0.0
        %2622 = vmatprep.subr.mxu0 0.0
        %2623 = vmatpush2.msra.mxu0 0.0
        %2624 = vmatprep.subr.mxu0 0.0
        %2625 = vmatpush2.msra.mxu0 0.0
        %2626 = vmatprep.subr.mxu0 0.0
        %2627 = vmatpush2.msra.mxu0 0.0
        %2628 = vmatprep.subr.mxu0 0.0
        %2629 = vmatpush2.msra.mxu0 0.0
        %2630 = vmatprep.subr.mxu0 0.0
        %2631 = vmatpush2.msra.mxu0 0.0
        %2632 = vmatprep.subr.mxu0 0.0
        %2633 = vmatpush2.msra.mxu0 0.0
        %2634 = vmatprep.subr.mxu0 0.0
        %2635 = vmatpush2.msra.mxu0 0.0
        %2636 = vmatprep.subr.mxu0 0.0
        %2637 = vmatpush2.msra.mxu0 0.0
        %2638 = vmatprep.subr.mxu0 0.0
        %2639 = vmatpush2.msra.mxu0 0.0
        %2640 = vmatprep.subr.mxu0 0.0
        %2641 = vmatpush2.msra.mxu0 0.0
        %2642 = vmatprep.subr.mxu0 0.0
        %2643 = vmatpush2.msra.mxu0 0.0
        %2644 = vmatprep.subr.mxu0 0.0
        %2645 = vmatpush2.msra.mxu0 0.0
        %2646 = vmatprep.subr.mxu0 0.0
        %2647 = vmatpush2.msra.mxu0 0.0
        %2648 = vmatprep.subr.mxu0 0.0
        %2649 = vmatpush2.msra.mxu0 0.0
        %2650 = vmatprep.subr.mxu0 0.0
        %2651 = vmatpush2.msra.mxu0 0.0
        %2652 = vmatprep.mubr.f32.mxu0 0.0
        %2653 = vmatmul.mubr.f32.gmra.mxu0 %v2586
        %v2654 = vpop.f32.mrf.mxu0
        %v2655 = vadd.f32 0.0, %v2654
        %v2656 = vpop.f32.mrf.mxu0
        %2657 = vdwg.mxu0
        %2658 = vrot.lane.b32.xlu0 %v878, 96
        %v2659 = vpop.permute.xlu0 %2658
        %v2662 = vsel %vm1805, %v1971, 0
        %2664 = vmatprep.subr.mxu0 0.0
        %2665 = vmatpush1.msra.mxu0 0.0
        %2666 = vmatprep.subr.mxu0 0.0
        %2667 = vmatpush1.msra.mxu0 0.0
        %2668 = vmatprep.subr.mxu0 0.0
        %2669 = vmatpush1.msra.mxu0 0.0
        %2670 = vmatprep.subr.mxu0 0.0
        %2671 = vmatpush1.msra.mxu0 0.0
        %2672 = vmatprep.subr.mxu0 0.0
        %2673 = vmatpush1.msra.mxu0 0.0
        %2674 = vmatprep.subr.mxu0 0.0
        %2675 = vmatpush1.msra.mxu0 0.0
        %2676 = vmatprep.subr.mxu0 0.0
        %2677 = vmatpush1.msra.mxu0 0.0
        %2678 = vmatprep.subr.mxu0 0.0
        %2679 = vmatpush1.msra.mxu0 0.0
        %2680 = vmatprep.subr.mxu0 0.0
        %2681 = vmatpush1.msra.mxu0 0.0
        %2682 = vmatprep.subr.mxu0 0.0
        %2683 = vmatpush1.msra.mxu0 0.0
        %2684 = vmatprep.subr.mxu0 0.0
        %2685 = vmatpush1.msra.mxu0 0.0
        %2686 = vmatprep.subr.mxu0 0.0
        %2687 = vmatpush1.msra.mxu0 0.0
        %2688 = vmatprep.subr.mxu0 0.0
        %2689 = vmatpush1.msra.mxu0 0.0
        %2690 = vmatprep.subr.mxu0 0.0
        %2691 = vmatpush1.msra.mxu0 0.0
        %2692 = vmatprep.subr.mxu0 0.0
        %2693 = vmatpush1.msra.mxu0 0.0
        %2694 = vmatprep.subr.mxu0 0.0
        %2695 = vmatpush1.msra.mxu0 %v2659
        %2696 = vmatprep.subr.mxu0 0.0
        %2697 = vmatpush2.msra.mxu0 0.0
        %2698 = vmatprep.subr.mxu0 0.0
        %2699 = vmatpush2.msra.mxu0 0.0
        %2700 = vmatprep.subr.mxu0 0.0
        %2701 = vmatpush2.msra.mxu0 0.0
        %2702 = vmatprep.subr.mxu0 0.0
        %2703 = vmatpush2.msra.mxu0 0.0
        %2704 = vmatprep.subr.mxu0 0.0
        %2705 = vmatpush2.msra.mxu0 0.0
        %2706 = vmatprep.subr.mxu0 0.0
        %2707 = vmatpush2.msra.mxu0 0.0
        %2708 = vmatprep.subr.mxu0 0.0
        %2709 = vmatpush2.msra.mxu0 0.0
        %2710 = vmatprep.subr.mxu0 0.0
        %2711 = vmatpush2.msra.mxu0 0.0
        %2712 = vmatprep.subr.mxu0 0.0
        %2713 = vmatpush2.msra.mxu0 0.0
        %2714 = vmatprep.subr.mxu0 0.0
        %2715 = vmatpush2.msra.mxu0 0.0
        %2716 = vmatprep.subr.mxu0 0.0
        %2717 = vmatpush2.msra.mxu0 0.0
        %2718 = vmatprep.subr.mxu0 0.0
        %2719 = vmatpush2.msra.mxu0 0.0
        %2720 = vmatprep.subr.mxu0 0.0
        %2721 = vmatpush2.msra.mxu0 0.0
        %2722 = vmatprep.subr.mxu0 0.0
        %2723 = vmatpush2.msra.mxu0 0.0
        %2724 = vmatprep.subr.mxu0 0.0
        %2725 = vmatpush2.msra.mxu0 0.0
        %2726 = vmatprep.subr.mxu0 0.0
        %2727 = vmatpush2.msra.mxu0 0.0
        %2728 = vmatprep.mubr.f32.mxu0 0.0
        %2729 = vmatmul.mubr.f32.gmra.mxu0 %v2662
        %v2730 = vpop.f32.mrf.mxu0
        %v2731 = vadd.f32 0.0, %v2730
        %v2732 = vpop.f32.mrf.mxu0
        %2733 = vdwg.mxu0
        %2734 = vrot.lane.b32.xlu0 %v884, 96
        %v2735 = vpop.permute.xlu0 %2734
        %v2738 = vsel %vm1805, %v1972, 0
        %2740 = vmatprep.subr.mxu0 0.0
        %2741 = vmatpush1.msra.mxu0 0.0
        %2742 = vmatprep.subr.mxu0 0.0
        %2743 = vmatpush1.msra.mxu0 0.0
        %2744 = vmatprep.subr.mxu0 0.0
        %2745 = vmatpush1.msra.mxu0 0.0
        %2746 = vmatprep.subr.mxu0 0.0
        %2747 = vmatpush1.msra.mxu0 0.0
        %2748 = vmatprep.subr.mxu0 0.0
        %2749 = vmatpush1.msra.mxu0 0.0
        %2750 = vmatprep.subr.mxu0 0.0
        %2751 = vmatpush1.msra.mxu0 0.0
        %2752 = vmatprep.subr.mxu0 0.0
        %2753 = vmatpush1.msra.mxu0 0.0
        %2754 = vmatprep.subr.mxu0 0.0
        %2755 = vmatpush1.msra.mxu0 0.0
        %2756 = vmatprep.subr.mxu0 0.0
        %2757 = vmatpush1.msra.mxu0 0.0
        %2758 = vmatprep.subr.mxu0 0.0
        %2759 = vmatpush1.msra.mxu0 0.0
        %2760 = vmatprep.subr.mxu0 0.0
        %2761 = vmatpush1.msra.mxu0 0.0
        %2762 = vmatprep.subr.mxu0 0.0
        %2763 = vmatpush1.msra.mxu0 0.0
        %2764 = vmatprep.subr.mxu0 0.0
        %2765 = vmatpush1.msra.mxu0 0.0
        %2766 = vmatprep.subr.mxu0 0.0
        %2767 = vmatpush1.msra.mxu0 0.0
        %2768 = vmatprep.subr.mxu0 0.0
        %2769 = vmatpush1.msra.mxu0 0.0
        %2770 = vmatprep.subr.mxu0 0.0
        %2771 = vmatpush1.msra.mxu0 %v2735
        %2772 = vmatprep.subr.mxu0 0.0
        %2773 = vmatpush2.msra.mxu0 0.0
        %2774 = vmatprep.subr.mxu0 0.0
        %2775 = vmatpush2.msra.mxu0 0.0
        %2776 = vmatprep.subr.mxu0 0.0
        %2777 = vmatpush2.msra.mxu0 0.0
        %2778 = vmatprep.subr.mxu0 0.0
        %2779 = vmatpush2.msra.mxu0 0.0
        %2780 = vmatprep.subr.mxu0 0.0
        %2781 = vmatpush2.msra.mxu0 0.0
        %2782 = vmatprep.subr.mxu0 0.0
        %2783 = vmatpush2.msra.mxu0 0.0
        %2784 = vmatprep.subr.mxu0 0.0
        %2785 = vmatpush2.msra.mxu0 0.0
        %2786 = vmatprep.subr.mxu0 0.0
        %2787 = vmatpush2.msra.mxu0 0.0
        %2788 = vmatprep.subr.mxu0 0.0
        %2789 = vmatpush2.msra.mxu0 0.0
        %2790 = vmatprep.subr.mxu0 0.0
        %2791 = vmatpush2.msra.mxu0 0.0
        %2792 = vmatprep.subr.mxu0 0.0
        %2793 = vmatpush2.msra.mxu0 0.0
        %2794 = vmatprep.subr.mxu0 0.0
        %2795 = vmatpush2.msra.mxu0 0.0
        %2796 = vmatprep.subr.mxu0 0.0
        %2797 = vmatpush2.msra.mxu0 0.0
        %2798 = vmatprep.subr.mxu0 0.0
        %2799 = vmatpush2.msra.mxu0 0.0
        %2800 = vmatprep.subr.mxu0 0.0
        %2801 = vmatpush2.msra.mxu0 0.0
        %2802 = vmatprep.subr.mxu0 0.0
        %2803 = vmatpush2.msra.mxu0 0.0
        %2804 = vmatprep.mubr.f32.mxu0 0.0
        %2805 = vmatmul.mubr.f32.gmra.mxu0 %v2738
        %v2806 = vpop.f32.mrf.mxu0
        %v2807 = vadd.f32 0.0, %v2806
        %v2808 = vpop.f32.mrf.mxu0
        %2809 = vdwg.mxu0
        %2810 = vrot.lane.b32.xlu0 %v886, 96
        %v2811 = vpop.permute.xlu0 %2810
        %v2814 = vsel %vm1805, %v1973, 0
        %2816 = vmatprep.subr.mxu0 0.0
        %2817 = vmatpush1.msra.mxu0 0.0
        %2818 = vmatprep.subr.mxu0 0.0
        %2819 = vmatpush1.msra.mxu0 0.0
        %2820 = vmatprep.subr.mxu0 0.0
        %2821 = vmatpush1.msra.mxu0 0.0
        %2822 = vmatprep.subr.mxu0 0.0
        %2823 = vmatpush1.msra.mxu0 0.0
        %2824 = vmatprep.subr.mxu0 0.0
        %2825 = vmatpush1.msra.mxu0 0.0
        %2826 = vmatprep.subr.mxu0 0.0
        %2827 = vmatpush1.msra.mxu0 0.0
        %2828 = vmatprep.subr.mxu0 0.0
        %2829 = vmatpush1.msra.mxu0 0.0
        %2830 = vmatprep.subr.mxu0 0.0
        %2831 = vmatpush1.msra.mxu0 0.0
        %2832 = vmatprep.subr.mxu0 0.0
        %2833 = vmatpush1.msra.mxu0 0.0
        %2834 = vmatprep.subr.mxu0 0.0
        %2835 = vmatpush1.msra.mxu0 0.0
        %2836 = vmatprep.subr.mxu0 0.0
        %2837 = vmatpush1.msra.mxu0 0.0
        %2838 = vmatprep.subr.mxu0 0.0
        %2839 = vmatpush1.msra.mxu0 0.0
        %2840 = vmatprep.subr.mxu0 0.0
        %2841 = vmatpush1.msra.mxu0 0.0
        %2842 = vmatprep.subr.mxu0 0.0
        %2843 = vmatpush1.msra.mxu0 0.0
        %2844 = vmatprep.subr.mxu0 0.0
        %2845 = vmatpush1.msra.mxu0 0.0
        %2846 = vmatprep.subr.mxu0 0.0
        %2847 = vmatpush1.msra.mxu0 %v2811
        %2848 = vmatprep.subr.mxu0 0.0
        %2849 = vmatpush2.msra.mxu0 0.0
        %2850 = vmatprep.subr.mxu0 0.0
        %2851 = vmatpush2.msra.mxu0 0.0
        %2852 = vmatprep.subr.mxu0 0.0
        %2853 = vmatpush2.msra.mxu0 0.0
        %2854 = vmatprep.subr.mxu0 0.0
        %2855 = vmatpush2.msra.mxu0 0.0
        %2856 = vmatprep.subr.mxu0 0.0
        %2857 = vmatpush2.msra.mxu0 0.0
        %2858 = vmatprep.subr.mxu0 0.0
        %2859 = vmatpush2.msra.mxu0 0.0
        %2860 = vmatprep.subr.mxu0 0.0
        %2861 = vmatpush2.msra.mxu0 0.0
        %2862 = vmatprep.subr.mxu0 0.0
        %2863 = vmatpush2.msra.mxu0 0.0
        %2864 = vmatprep.subr.mxu0 0.0
        %2865 = vmatpush2.msra.mxu0 0.0
        %2866 = vmatprep.subr.mxu0 0.0
        %2867 = vmatpush2.msra.mxu0 0.0
        %2868 = vmatprep.subr.mxu0 0.0
        %2869 = vmatpush2.msra.mxu0 0.0
        %2870 = vmatprep.subr.mxu0 0.0
        %2871 = vmatpush2.msra.mxu0 0.0
        %2872 = vmatprep.subr.mxu0 0.0
        %2873 = vmatpush2.msra.mxu0 0.0
        %2874 = vmatprep.subr.mxu0 0.0
        %2875 = vmatpush2.msra.mxu0 0.0
        %2876 = vmatprep.subr.mxu0 0.0
        %2877 = vmatpush2.msra.mxu0 0.0
        %2878 = vmatprep.subr.mxu0 0.0
        %2879 = vmatpush2.msra.mxu0 0.0
        %2880 = vmatprep.mubr.f32.mxu0 0.0
        %2881 = vmatmul.mubr.f32.gmra.mxu0 %v2814
        %v2882 = vpop.f32.mrf.mxu0
        %v2883 = vadd.f32 0.0, %v2882
        %v2884 = vpop.f32.mrf.mxu0
        %2885 = vdwg.mxu0
        %2887 = vrot.lane.b32.xlu0 %v2123, 16
        %v2888 = vpop.permute.xlu0 %2887
        %2891 = vrot.lane.b32.xlu0 %v2199, 32
        %v2892 = vpop.permute.xlu0 %2891
        %2895 = vrot.lane.b32.xlu0 %v2275, 48
        %v2896 = vpop.permute.xlu0 %2895
        %2899 = vrot.lane.b32.xlu0 %v2351, 64
        %v2900 = vpop.permute.xlu0 %2899
        %2903 = vrot.lane.b32.xlu0 %v2427, 80
        %v2904 = vpop.permute.xlu0 %2903
        %2907 = vrot.lane.b32.xlu0 %v2503, 96
        %v2908 = vpop.permute.xlu0 %2907
        %2911 = vrot.lane.b32.xlu0 %v2579, 112
        %v2912 = vpop.permute.xlu0 %2911
        %2915 = vrot.lane.b32.xlu0 %v2731, 16
        %v2916 = vpop.permute.xlu0 %2915
        %2919 = vrot.lane.b32.xlu0 %v2807, 32
        %v2920 = vpop.permute.xlu0 %2919
        %2923 = vrot.lane.b32.xlu0 %v2883, 48
        %v2924 = vpop.permute.xlu0 %2923
        %v2926 = vsel %vm870, %v2047, %v2888
        %v2927 = vsel %vm859, %v2926, %v2892
        %vm2928 = vcmask 392192
        %v2929 = vsel %vm2928, %v2927, %v2896
        %v2930 = vsel %vm443, %v2929, %v2900
        %vm2931 = vcmask 654336
        %v2932 = vsel %vm2931, %v2930, %v2904
        %vm2933 = vcmask 785408
        %v2934 = vsel %vm2933, %v2932, %v2908
        %vm2935 = vcmask 916480
        %v2936 = vsel %vm2935, %v2934, %v2912
        %v2937 = vsel %vm870, %v2655, %v2916
        %v2938 = vsel %vm859, %v2937, %v2920
        %v2939 = vsel %vm2928, %v2938, %v2924
        %v2940 = vld [vmem:[%s5] sm:$0xff]
        %v2941 = vld [vmem:[%s5 + $0x8] sm:$0xff]
        %v2942 = vld [vmem:[%s5 + $0x10] sm:$0xff]
        %v2943 = vld [vmem:[%s5 + $0x18] sm:$0xff]
        %v2944 = vld [vmem:[%s5 + $0x20] sm:$0xff]
        %v2945 = vld [vmem:[%s5 + $0x28] sm:$0xff]
        %v2946 = vld [vmem:[%s5 + $0x30] sm:$0xff]
        %v2947 = vld [vmem:[%s5 + $0x38] sm:$0xff]
        %v2948 = vld [vmem:[%s5 + $0x40] sm:$0xff]
        %v2949 = vld [vmem:[%s5 + $0x48] sm:$0xff]
        %v2950 = vld [vmem:[%s5 + $0x50] sm:$0xff]
        %v2951 = vld [vmem:[%s5 + $0x58] sm:$0xff]
        %v2952 = vld [vmem:[%s5 + $0x60] sm:$0xff]
        %v2953 = vld [vmem:[%s5 + $0x68] sm:$0xff]
        %v2954 = vld [vmem:[%s5 + $0x70] sm:$0xff]
        %v2955 = vld [vmem:[%s5 + $0x78] sm:$0xff]
        %v2956 = vld [vmem:[%s5 + $0x80] sm:$0xff]
        %v2957 = vld [vmem:[%s5 + $0x88] sm:$0xff]
        %v2958 = vld [vmem:[%s5 + $0x90] sm:$0xff]
        %v2959 = vld [vmem:[%s5 + $0x98] sm:$0xff]
        %v2960 = vld [vmem:[%s5 + $0xa0] sm:$0xff]
        %v2961 = vld [vmem:[%s5 + $0xa8] sm:$0xff]
        %v2962 = vld [vmem:[%s5 + $0xb0] sm:$0xff]
        %v2963 = vld [vmem:[%s5 + $0xb8] sm:$0xff]
        %v2964 = vld [vmem:[%s5 + $0xc0] sm:$0xff]
        %v2965 = vld [vmem:[%s5 + $0xc8] sm:$0xff]
        %v2966 = vld [vmem:[%s5 + $0xd0] sm:$0xff]
        %v2967 = vld [vmem:[%s5 + $0xd8] sm:$0xff]
        %v2968 = vld [vmem:[%s5 + $0xe0] sm:$0xff]
        %v2969 = vld [vmem:[%s5 + $0xe8] sm:$0xff]
        %v2970 = vld [vmem:[%s5 + $0xf0] sm:$0xff]
        %v2971 = vld [vmem:[%s5 + $0xf8] sm:$0xff]
        %v2972 = vld [vmem:[%s5 + $0x100] sm:$0xff]
        %v2973 = vld [vmem:[%s5 + $0x108] sm:$0xff]
        %v2974 = vld [vmem:[%s5 + $0x110] sm:$0xff]
        %v2975 = vld [vmem:[%s5 + $0x118] sm:$0xff]
        %v2976 = vld [vmem:[%s5 + $0x120] sm:$0xff]
        %v2977 = vld [vmem:[%s5 + $0x128] sm:$0xff]
        %v2978 = vld [vmem:[%s5 + $0x130] sm:$0xff]
        %v2979 = vld [vmem:[%s5 + $0x138] sm:$0xff]
        %v2980 = vld [vmem:[%s5 + $0x140] sm:$0xff]
        %v2981 = vld [vmem:[%s5 + $0x148] sm:$0xff]
        %v2982 = vld [vmem:[%s5 + $0x150] sm:$0xff]
        %v2983 = vld [vmem:[%s5 + $0x158] sm:$0xff]
        %v2984 = vld [vmem:[%s5 + $0x160] sm:$0xff]
        %v2985 = vld [vmem:[%s5 + $0x168] sm:$0xff]
        %v2986 = vld [vmem:[%s5 + $0x170] sm:$0xff]
        %v2987 = vld [vmem:[%s5 + $0x178] sm:$0xff]
        %v2989 = vsel %vm443, %v2939, 0
        %2991 = vmatprep.subr.mxu0 %v2971
        %2992 = vmatpush1.msra.mxu0 %v2970
        %2993 = vmatprep.subr.mxu0 %v2969
        %2994 = vmatpush1.msra.mxu0 %v2968
        %2995 = vmatprep.subr.mxu0 %v2967
        %2996 = vmatpush1.msra.mxu0 %v2966
        %2997 = vmatprep.subr.mxu0 %v2965
        %2998 = vmatpush1.msra.mxu0 %v2964
        %2999 = vmatprep.subr.mxu0 %v2963
        %3000 = vmatpush1.msra.mxu0 %v2962
        %3001 = vmatprep.subr.mxu0 %v2961
        %3002 = vmatpush1.msra.mxu0 %v2960
        %3003 = vmatprep.subr.mxu0 %v2959
        %3004 = vmatpush1.msra.mxu0 %v2958
        %3005 = vmatprep.subr.mxu0 %v2957
        %3006 = vmatpush1.msra.mxu0 %v2956
        %3007 = vmatprep.subr.mxu0 %v2955
        %3008 = vmatpush1.msra.mxu0 %v2954
        %3009 = vmatprep.subr.mxu0 %v2953
        %3010 = vmatpush1.msra.mxu0 %v2952
        %3011 = vmatprep.subr.mxu0 %v2951
        %3012 = vmatpush1.msra.mxu0 %v2950
        %3013 = vmatprep.subr.mxu0 %v2949
        %3014 = vmatpush1.msra.mxu0 %v2948
        %3015 = vmatprep.subr.mxu0 %v2947
        %3016 = vmatpush1.msra.mxu0 %v2946
        %3017 = vmatprep.subr.mxu0 %v2945
        %3018 = vmatpush1.msra.mxu0 %v2944
        %3019 = vmatprep.subr.mxu0 %v2943
        %3020 = vmatpush1.msra.mxu0 %v2942
        %3021 = vmatprep.subr.mxu0 %v2941
        %3022 = vmatpush1.msra.mxu0 %v2940
        %3023 = vmatprep.subr.mxu0 0.0
        %3024 = vmatpush2.msra.mxu0 0.0
        %3025 = vmatprep.subr.mxu0 0.0
        %3026 = vmatpush2.msra.mxu0 0.0
        %3027 = vmatprep.subr.mxu0 0.0
        %3028 = vmatpush2.msra.mxu0 0.0
        %3029 = vmatprep.subr.mxu0 0.0
        %3030 = vmatpush2.msra.mxu0 0.0
        %3031 = vmatprep.subr.mxu0 0.0
        %3032 = vmatpush2.msra.mxu0 0.0
        %3033 = vmatprep.subr.mxu0 0.0
        %3034 = vmatpush2.msra.mxu0 0.0
        %3035 = vmatprep.subr.mxu0 0.0
        %3036 = vmatpush2.msra.mxu0 0.0
        %3037 = vmatprep.subr.mxu0 0.0
        %3038 = vmatpush2.msra.mxu0 0.0
        %3039 = vmatprep.subr.mxu0 %v2987
        %3040 = vmatpush2.msra.mxu0 %v2986
        %3041 = vmatprep.subr.mxu0 %v2985
        %3042 = vmatpush2.msra.mxu0 %v2984
        %3043 = vmatprep.subr.mxu0 %v2983
        %3044 = vmatpush2.msra.mxu0 %v2982
        %3045 = vmatprep.subr.mxu0 %v2981
        %3046 = vmatpush2.msra.mxu0 %v2980
        %3047 = vmatprep.subr.mxu0 %v2979
        %3048 = vmatpush2.msra.mxu0 %v2978
        %3049 = vmatprep.subr.mxu0 %v2977
        %3050 = vmatpush2.msra.mxu0 %v2976
        %3051 = vmatprep.subr.mxu0 %v2975
        %3052 = vmatpush2.msra.mxu0 %v2974
        %3053 = vmatprep.subr.mxu0 %v2973
        %3054 = vmatpush2.msra.mxu0 %v2972
        %3055 = vmatprep.mubr.f32.mxu0 %v2989
        %3056 = vmatmul.mubr.f32.gmra.mxu0 %v2936
        %v3057 = vpop.f32.mrf.mxu0
        %v3058 = vadd.f32 0.0, %v3057
        %v3059 = vpop.f32.mrf.mxu0
        %v3060 = vadd.f32 0.0, %v3059
        %3061 = vdwg.mxu0
        %v3062 = vadd.f32 %v439, %v3058
        %v3063 = vadd.f32 %v440, %v3060
        %v3064 = vld [vmem:[%s6] sm:$0x3]
        %v3066 = vlaneseq
        %v3067 = vshrl.u32 %v3066, 7
        %v3068 = vsub.s32 0, %v3067
        %v3069 = vrot.slane %v3064, %v3068
        %v3070 = vlaneseq
        %v3071 = vshrl.u32 %v3070, 7
        %v3072 = vsub.s32 1, %v3071
        %v3073 = vrot.slane %v3064, %v3072
        %v3076 = vadd.f32 %v3062, %v3069
        %v3077 = vadd.f32 %v3063, %v3073
        %v3078 = vld [vmem:[%s7] sm:$0x3]
        %v3079 = vld [vmem:[%s8] sm:$0x3]
        %v3080 = vsel %vm443, %v3077, 0.0
        %v3081 = vadd.f32 %v3076, %v3080
        %3082 = vadd.xlane.f32.xlu0 %v3081
        %v3083 = vpop.xlane.xlu0 %3082
        %v3084 = vmul.f32 %v3083, %v448
        %v3085 = vsub.f32 %v3076, %v3084
        %v3086 = vsub.f32 %v3077, %v3084
        %v3087 = vmul.f32 %v3085, %v3085
        %v3088 = vmul.f32 %v3086, %v3086
        %v3089 = vsel %vm443, %v3088, 0.0
        %v3090 = vadd.f32 %v3087, %v3089
        %3091 = vadd.xlane.f32.xlu0 %v3090
        %v3092 = vpop.xlane.xlu0 %3091
        %v3093 = vmul.f32 %v3092, %v448
        %v3094 = vadd.f32 %v3093, 1e-05
        %v3095 = vrsqrt.pop %v3094
        %v3096 = vmul.f32 %v3085, %v3095
        %v3097 = vmul.f32 %v3086, %v3095
        %v3099 = vlaneseq
        %v3100 = vshrl.u32 %v3099, 7
        %v3101 = vsub.s32 0, %v3100
        %v3102 = vrot.slane %v3078, %v3101
        %v3103 = vlaneseq
        %v3104 = vshrl.u32 %v3103, 7
        %v3105 = vsub.s32 1, %v3104
        %v3106 = vrot.slane %v3078, %v3105
        %v3109 = vmul.f32 %v3096, %v3102
        %v3110 = vmul.f32 %v3097, %v3106
        %v3112 = vlaneseq
        %v3113 = vshrl.u32 %v3112, 7
        %v3114 = vsub.s32 0, %v3113
        %v3115 = vrot.slane %v3079, %v3114
        %v3116 = vlaneseq
        %v3117 = vshrl.u32 %v3116, 7
        %v3118 = vsub.s32 1, %v3117
        %v3119 = vrot.slane %v3079, %v3118
        %v3122 = vadd.f32 %v3109, %v3115
        %v3123 = vadd.f32 %v3110, %v3119
        %v3124 = vld [vmem:[%s9] sm:$0xff]
        %v3125 = vld [vmem:[%s9 + $0x8] sm:$0xff]
        %v3126 = vld [vmem:[%s9 + $0x10] sm:$0xff]
        %v3127 = vld [vmem:[%s9 + $0x18] sm:$0xff]
        %v3128 = vld [vmem:[%s9 + $0x20] sm:$0xff]
        %v3129 = vld [vmem:[%s9 + $0x28] sm:$0xff]
        %v3130 = vld [vmem:[%s9 + $0x30] sm:$0xff]
        %v3131 = vld [vmem:[%s9 + $0x38] sm:$0xff]
        %v3132 = vld [vmem:[%s9 + $0x40] sm:$0xff]
        %v3133 = vld [vmem:[%s9 + $0x48] sm:$0xff]
        %v3134 = vld [vmem:[%s9 + $0x50] sm:$0xff]
        %v3135 = vld [vmem:[%s9 + $0x58] sm:$0xff]
        %v3136 = vld [vmem:[%s9 + $0x60] sm:$0xff]
        %v3137 = vld [vmem:[%s9 + $0x68] sm:$0xff]
        %v3138 = vld [vmem:[%s9 + $0x70] sm:$0xff]
        %v3139 = vld [vmem:[%s9 + $0x78] sm:$0xff]
        %v3140 = vld [vmem:[%s9 + $0x80] sm:$0xff]
        %v3141 = vld [vmem:[%s9 + $0x88] sm:$0xff]
        %v3142 = vld [vmem:[%s9 + $0x90] sm:$0xff]
        %v3143 = vld [vmem:[%s9 + $0x98] sm:$0xff]
        %v3144 = vld [vmem:[%s9 + $0xa0] sm:$0xff]
        %v3145 = vld [vmem:[%s9 + $0xa8] sm:$0xff]
        %v3146 = vld [vmem:[%s9 + $0xb0] sm:$0xff]
        %v3147 = vld [vmem:[%s9 + $0xb8] sm:$0xff]
        %v3148 = vld [vmem:[%s9 + $0xc0] sm:$0xff]
        %v3149 = vld [vmem:[%s9 + $0xc8] sm:$0xff]
        %v3150 = vld [vmem:[%s9 + $0xd0] sm:$0xff]
        %v3151 = vld [vmem:[%s9 + $0xd8] sm:$0xff]
        %v3152 = vld [vmem:[%s9 + $0xe0] sm:$0xff]
        %v3153 = vld [vmem:[%s9 + $0xe8] sm:$0xff]
        %v3154 = vld [vmem:[%s9 + $0xf0] sm:$0xff]
        %v3155 = vld [vmem:[%s9 + $0xf8] sm:$0xff]
        %v3156 = vld [vmem:[%s9 + $0x100] sm:$0xff]
        %v3157 = vld [vmem:[%s9 + $0x108] sm:$0xff]
        %v3158 = vld [vmem:[%s9 + $0x110] sm:$0xff]
        %v3159 = vld [vmem:[%s9 + $0x118] sm:$0xff]
        %v3160 = vld [vmem:[%s9 + $0x120] sm:$0xff]
        %v3161 = vld [vmem:[%s9 + $0x128] sm:$0xff]
        %v3162 = vld [vmem:[%s9 + $0x130] sm:$0xff]
        %v3163 = vld [vmem:[%s9 + $0x138] sm:$0xff]
        %v3164 = vld [vmem:[%s9 + $0x140] sm:$0xff]
        %v3165 = vld [vmem:[%s9 + $0x148] sm:$0xff]
        %v3166 = vld [vmem:[%s9 + $0x150] sm:$0xff]
        %v3167 = vld [vmem:[%s9 + $0x158] sm:$0xff]
        %v3168 = vld [vmem:[%s9 + $0x160] sm:$0xff]
        %v3169 = vld [vmem:[%s9 + $0x168] sm:$0xff]
        %v3170 = vld [vmem:[%s9 + $0x170] sm:$0xff]
        %v3171 = vld [vmem:[%s9 + $0x178] sm:$0xff]
        %v3172 = vld [vmem:[%s9 + $0x180] sm:$0xff]
        %v3173 = vld [vmem:[%s9 + $0x188] sm:$0xff]
        %v3174 = vld [vmem:[%s9 + $0x190] sm:$0xff]
        %v3175 = vld [vmem:[%s9 + $0x198] sm:$0xff]
        %v3176 = vld [vmem:[%s9 + $0x1a0] sm:$0xff]
        %v3177 = vld [vmem:[%s9 + $0x1a8] sm:$0xff]
        %v3178 = vld [vmem:[%s9 + $0x1b0] sm:$0xff]
        %v3179 = vld [vmem:[%s9 + $0x1b8] sm:$0xff]
        %v3180 = vld [vmem:[%s9 + $0x1c0] sm:$0xff]
        %v3181 = vld [vmem:[%s9 + $0x1c8] sm:$0xff]
        %v3182 = vld [vmem:[%s9 + $0x1d0] sm:$0xff]
        %v3183 = vld [vmem:[%s9 + $0x1d8] sm:$0xff]
        %v3184 = vld [vmem:[%s9 + $0x1e0] sm:$0xff]
        %v3185 = vld [vmem:[%s9 + $0x1e8] sm:$0xff]
        %v3186 = vld [vmem:[%s9 + $0x1f0] sm:$0xff]
        %v3187 = vld [vmem:[%s9 + $0x1f8] sm:$0xff]
        %v3188 = vld [vmem:[%s9 + $0x200] sm:$0xff]
        %v3189 = vld [vmem:[%s9 + $0x208] sm:$0xff]
        %v3190 = vld [vmem:[%s9 + $0x210] sm:$0xff]
        %v3191 = vld [vmem:[%s9 + $0x218] sm:$0xff]
        %v3192 = vld [vmem:[%s9 + $0x220] sm:$0xff]
        %v3193 = vld [vmem:[%s9 + $0x228] sm:$0xff]
        %v3194 = vld [vmem:[%s9 + $0x230] sm:$0xff]
        %v3195 = vld [vmem:[%s9 + $0x238] sm:$0xff]
        %v3196 = vld [vmem:[%s9 + $0x240] sm:$0xff]
        %v3197 = vld [vmem:[%s9 + $0x248] sm:$0xff]
        %v3198 = vld [vmem:[%s9 + $0x250] sm:$0xff]
        %v3199 = vld [vmem:[%s9 + $0x258] sm:$0xff]
        %v3200 = vld [vmem:[%s9 + $0x260] sm:$0xff]
        %v3201 = vld [vmem:[%s9 + $0x268] sm:$0xff]
        %v3202 = vld [vmem:[%s9 + $0x270] sm:$0xff]
        %v3203 = vld [vmem:[%s9 + $0x278] sm:$0xff]
        %v3204 = vld [vmem:[%s9 + $0x280] sm:$0xff]
        %v3205 = vld [vmem:[%s9 + $0x288] sm:$0xff]
        %v3206 = vld [vmem:[%s9 + $0x290] sm:$0xff]
        %v3207 = vld [vmem:[%s9 + $0x298] sm:$0xff]
        %v3208 = vld [vmem:[%s9 + $0x2a0] sm:$0xff]
        %v3209 = vld [vmem:[%s9 + $0x2a8] sm:$0xff]
        %v3210 = vld [vmem:[%s9 + $0x2b0] sm:$0xff]
        %v3211 = vld [vmem:[%s9 + $0x2b8] sm:$0xff]
        %v3212 = vld [vmem:[%s9 + $0x2c0] sm:$0xff]
        %v3213 = vld [vmem:[%s9 + $0x2c8] sm:$0xff]
        %v3214 = vld [vmem:[%s9 + $0x2d0] sm:$0xff]
        %v3215 = vld [vmem:[%s9 + $0x2d8] sm:$0xff]
        %v3216 = vld [vmem:[%s9 + $0x2e0] sm:$0xff]
        %v3217 = vld [vmem:[%s9 + $0x2e8] sm:$0xff]
        %v3218 = vld [vmem:[%s9 + $0x2f0] sm:$0xff]
        %v3219 = vld [vmem:[%s9 + $0x2f8] sm:$0xff]
        %v3220 = vld [vmem:[%s9 + $0x300] sm:$0xff]
        %v3221 = vld [vmem:[%s9 + $0x308] sm:$0xff]
        %v3222 = vld [vmem:[%s9 + $0x310] sm:$0xff]
        %v3223 = vld [vmem:[%s9 + $0x318] sm:$0xff]
        %v3224 = vld [vmem:[%s9 + $0x320] sm:$0xff]
        %v3225 = vld [vmem:[%s9 + $0x328] sm:$0xff]
        %v3226 = vld [vmem:[%s9 + $0x330] sm:$0xff]
        %v3227 = vld [vmem:[%s9 + $0x338] sm:$0xff]
        %v3228 = vld [vmem:[%s9 + $0x340] sm:$0xff]
        %v3229 = vld [vmem:[%s9 + $0x348] sm:$0xff]
        %v3230 = vld [vmem:[%s9 + $0x350] sm:$0xff]
        %v3231 = vld [vmem:[%s9 + $0x358] sm:$0xff]
        %v3232 = vld [vmem:[%s9 + $0x360] sm:$0xff]
        %v3233 = vld [vmem:[%s9 + $0x368] sm:$0xff]
        %v3234 = vld [vmem:[%s9 + $0x370] sm:$0xff]
        %v3235 = vld [vmem:[%s9 + $0x378] sm:$0xff]
        %v3236 = vld [vmem:[%s9 + $0x380] sm:$0xff]
        %v3237 = vld [vmem:[%s9 + $0x388] sm:$0xff]
        %v3238 = vld [vmem:[%s9 + $0x390] sm:$0xff]
        %v3239 = vld [vmem:[%s9 + $0x398] sm:$0xff]
        %v3240 = vld [vmem:[%s9 + $0x3a0] sm:$0xff]
        %v3241 = vld [vmem:[%s9 + $0x3a8] sm:$0xff]
        %v3242 = vld [vmem:[%s9 + $0x3b0] sm:$0xff]
        %v3243 = vld [vmem:[%s9 + $0x3b8] sm:$0xff]
        %v3244 = vld [vmem:[%s9 + $0x3c0] sm:$0xff]
        %v3245 = vld [vmem:[%s9 + $0x3c8] sm:$0xff]
        %v3246 = vld [vmem:[%s9 + $0x3d0] sm:$0xff]
        %v3247 = vld [vmem:[%s9 + $0x3d8] sm:$0xff]
        %v3248 = vld [vmem:[%s9 + $0x3e0] sm:$0xff]
        %v3249 = vld [vmem:[%s9 + $0x3e8] sm:$0xff]
        %v3250 = vld [vmem:[%s9 + $0x3f0] sm:$0xff]
        %v3251 = vld [vmem:[%s9 + $0x3f8] sm:$0xff]
        %v3252 = vld [vmem:[%s9 + $0x400] sm:$0xff]
        %v3253 = vld [vmem:[%s9 + $0x408] sm:$0xff]
        %v3254 = vld [vmem:[%s9 + $0x410] sm:$0xff]
        %v3255 = vld [vmem:[%s9 + $0x418] sm:$0xff]
        %v3256 = vld [vmem:[%s9 + $0x420] sm:$0xff]
        %v3257 = vld [vmem:[%s9 + $0x428] sm:$0xff]
        %v3258 = vld [vmem:[%s9 + $0x430] sm:$0xff]
        %v3259 = vld [vmem:[%s9 + $0x438] sm:$0xff]
        %v3260 = vld [vmem:[%s9 + $0x440] sm:$0xff]
        %v3261 = vld [vmem:[%s9 + $0x448] sm:$0xff]
        %v3262 = vld [vmem:[%s9 + $0x450] sm:$0xff]
        %v3263 = vld [vmem:[%s9 + $0x458] sm:$0xff]
        %v3264 = vld [vmem:[%s9 + $0x460] sm:$0xff]
        %v3265 = vld [vmem:[%s9 + $0x468] sm:$0xff]
        %v3266 = vld [vmem:[%s9 + $0x470] sm:$0xff]
        %v3267 = vld [vmem:[%s9 + $0x478] sm:$0xff]
        %v3268 = vld [vmem:[%s10] sm:$0x3f]
        %v3270 = vlaneseq
        %v3271 = vshrl.u32 %v3270, 7
        %v3272 = vsub.s32 0, %v3271
        %v3273 = vrot.slane %v3268, %v3272
        %v3274 = vlaneseq
        %v3275 = vshrl.u32 %v3274, 7
        %v3276 = vsub.s32 1, %v3275
        %v3277 = vrot.slane %v3268, %v3276
        %v3278 = vlaneseq
        %v3279 = vshrl.u32 %v3278, 7
        %v3280 = vsub.s32 2, %v3279
        %v3281 = vrot.slane %v3268, %v3280
        %v3282 = vlaneseq
        %v3283 = vshrl.u32 %v3282, 7
        %v3284 = vsub.s32 3, %v3283
        %v3285 = vrot.slane %v3268, %v3284
        %v3286 = vlaneseq
        %v3287 = vshrl.u32 %v3286, 7
        %v3288 = vsub.s32 4, %v3287
        %v3289 = vrot.slane %v3268, %v3288
        %v3290 = vlaneseq
        %v3291 = vshrl.u32 %v3290, 7
        %v3292 = vsub.s32 5, %v3291
        %v3293 = vrot.slane %v3268, %v3292
        %v3301 = vsel %vm443, %v3123, 0
        %3303 = vmatprep.subr.mxu0 %v3215
        %3304 = vmatpush1.msra.mxu0 %v3214
        %3305 = vmatprep.subr.mxu0 %v3209
        %3306 = vmatpush1.msra.mxu0 %v3208
        %3307 = vmatprep.subr.mxu0 %v3203
        %3308 = vmatpush1.msra.mxu0 %v3202
        %3309 = vmatprep.subr.mxu0 %v3197
        %3310 = vmatpush1.msra.mxu0 %v3196
        %3311 = vmatprep.subr.mxu0 %v3191
        %3312 = vmatpush1.msra.mxu0 %v3190
        %3313 = vmatprep.subr.mxu0 %v3185
        %3314 = vmatpush1.msra.mxu0 %v3184
        %3315 = vmatprep.subr.mxu0 %v3179
        %3316 = vmatpush1.msra.mxu0 %v3178
        %3317 = vmatprep.subr.mxu0 %v3173
        %3318 = vmatpush1.msra.mxu0 %v3172
        %3319 = vmatprep.subr.mxu0 %v3167
        %3320 = vmatpush1.msra.mxu0 %v3166
        %3321 = vmatprep.subr.mxu0 %v3161
        %3322 = vmatpush1.msra.mxu0 %v3160
        %3323 = vmatprep.subr.mxu0 %v3155
        %3324 = vmatpush1.msra.mxu0 %v3154
        %3325 = vmatprep.subr.mxu0 %v3149
        %3326 = vmatpush1.msra.mxu0 %v3148
        %3327 = vmatprep.subr.mxu0 %v3143
        %3328 = vmatpush1.msra.mxu0 %v3142
        %3329 = vmatprep.subr.mxu0 %v3137
        %3330 = vmatpush1.msra.mxu0 %v3136
        %3331 = vmatprep.subr.mxu0 %v3131
        %3332 = vmatpush1.msra.mxu0 %v3130
        %3333 = vmatprep.subr.mxu0 %v3125
        %3334 = vmatpush1.msra.mxu0 %v3124
        %3335 = vmatprep.subr.mxu0 0.0
        %3336 = vmatpush2.msra.mxu0 0.0
        %3337 = vmatprep.subr.mxu0 0.0
        %3338 = vmatpush2.msra.mxu0 0.0
        %3339 = vmatprep.subr.mxu0 0.0
        %3340 = vmatpush2.msra.mxu0 0.0
        %3341 = vmatprep.subr.mxu0 0.0
        %3342 = vmatpush2.msra.mxu0 0.0
        %3343 = vmatprep.subr.mxu0 0.0
        %3344 = vmatpush2.msra.mxu0 0.0
        %3345 = vmatprep.subr.mxu0 0.0
        %3346 = vmatpush2.msra.mxu0 0.0
        %3347 = vmatprep.subr.mxu0 0.0
        %3348 = vmatpush2.msra.mxu0 0.0
        %3349 = vmatprep.subr.mxu0 0.0
        %3350 = vmatpush2.msra.mxu0 0.0
        %3351 = vmatprep.subr.mxu0 %v3263
        %3352 = vmatpush2.msra.mxu0 %v3262
        %3353 = vmatprep.subr.mxu0 %v3257
        %3354 = vmatpush2.msra.mxu0 %v3256
        %3355 = vmatprep.subr.mxu0 %v3251
        %3356 = vmatpush2.msra.mxu0 %v3250
        %3357 = vmatprep.subr.mxu0 %v3245
        %3358 = vmatpush2.msra.mxu0 %v3244
        %3359 = vmatprep.subr.mxu0 %v3239
        %3360 = vmatpush2.msra.mxu0 %v3238
        %3361 = vmatprep.subr.mxu0 %v3233
        %3362 = vmatpush2.msra.mxu0 %v3232
        %3363 = vmatprep.subr.mxu0 %v3227
        %3364 = vmatpush2.msra.mxu0 %v3226
        %3365 = vmatprep.subr.mxu0 %v3221
        %3366 = vmatpush2.msra.mxu0 %v3220
        %3367 = vmatprep.mubr.f32.mxu0 %v3301
        %3368 = vmatmul.mubr.f32.gmra.mxu0 %v3122
        %v3369 = vpop.f32.mrf.mxu0
        %v3370 = vadd.f32 %v3273, %v3369
        %v3371 = vpop.f32.mrf.mxu0
        %v3372 = vadd.f32 %v3277, %v3371
        %3373 = vdwg.mxu0
        %3374 = vmatprep.subr.mxu0 %v3217
        %3375 = vmatpush1.msra.mxu0 %v3216
        %3376 = vmatprep.subr.mxu0 %v3211
        %3377 = vmatpush1.msra.mxu0 %v3210
        %3378 = vmatprep.subr.mxu0 %v3205
        %3379 = vmatpush1.msra.mxu0 %v3204
        %3380 = vmatprep.subr.mxu0 %v3199
        %3381 = vmatpush1.msra.mxu0 %v3198
        %3382 = vmatprep.subr.mxu0 %v3193
        %3383 = vmatpush1.msra.mxu0 %v3192
        %3384 = vmatprep.subr.mxu0 %v3187
        %3385 = vmatpush1.msra.mxu0 %v3186
        %3386 = vmatprep.subr.mxu0 %v3181
        %3387 = vmatpush1.msra.mxu0 %v3180
        %3388 = vmatprep.subr.mxu0 %v3175
        %3389 = vmatpush1.msra.mxu0 %v3174
        %3390 = vmatprep.subr.mxu0 %v3169
        %3391 = vmatpush1.msra.mxu0 %v3168
        %3392 = vmatprep.subr.mxu0 %v3163
        %3393 = vmatpush1.msra.mxu0 %v3162
        %3394 = vmatprep.subr.mxu0 %v3157
        %3395 = vmatpush1.msra.mxu0 %v3156
        %3396 = vmatprep.subr.mxu0 %v3151
        %3397 = vmatpush1.msra.mxu0 %v3150
        %3398 = vmatprep.subr.mxu0 %v3145
        %3399 = vmatpush1.msra.mxu0 %v3144
        %3400 = vmatprep.subr.mxu0 %v3139
        %3401 = vmatpush1.msra.mxu0 %v3138
        %3402 = vmatprep.subr.mxu0 %v3133
        %3403 = vmatpush1.msra.mxu0 %v3132
        %3404 = vmatprep.subr.mxu0 %v3127
        %3405 = vmatpush1.msra.mxu0 %v3126
        %3406 = vmatprep.subr.mxu0 0.0
        %3407 = vmatpush2.msra.mxu0 0.0
        %3408 = vmatprep.subr.mxu0 0.0
        %3409 = vmatpush2.msra.mxu0 0.0
        %3410 = vmatprep.subr.mxu0 0.0
        %3411 = vmatpush2.msra.mxu0 0.0
        %3412 = vmatprep.subr.mxu0 0.0
        %3413 = vmatpush2.msra.mxu0 0.0
        %3414 = vmatprep.subr.mxu0 0.0
        %3415 = vmatpush2.msra.mxu0 0.0
        %3416 = vmatprep.subr.mxu0 0.0
        %3417 = vmatpush2.msra.mxu0 0.0
        %3418 = vmatprep.subr.mxu0 0.0
        %3419 = vmatpush2.msra.mxu0 0.0
        %3420 = vmatprep.subr.mxu0 0.0
        %3421 = vmatpush2.msra.mxu0 0.0
        %3422 = vmatprep.subr.mxu0 %v3265
        %3423 = vmatpush2.msra.mxu0 %v3264
        %3424 = vmatprep.subr.mxu0 %v3259
        %3425 = vmatpush2.msra.mxu0 %v3258
        %3426 = vmatprep.subr.mxu0 %v3253
        %3427 = vmatpush2.msra.mxu0 %v3252
        %3428 = vmatprep.subr.mxu0 %v3247
        %3429 = vmatpush2.msra.mxu0 %v3246
        %3430 = vmatprep.subr.mxu0 %v3241
        %3431 = vmatpush2.msra.mxu0 %v3240
        %3432 = vmatprep.subr.mxu0 %v3235
        %3433 = vmatpush2.msra.mxu0 %v3234
        %3434 = vmatprep.subr.mxu0 %v3229
        %3435 = vmatpush2.msra.mxu0 %v3228
        %3436 = vmatprep.subr.mxu0 %v3223
        %3437 = vmatpush2.msra.mxu0 %v3222
        %3438 = vmatprep.mubr.f32.mxu0 %v3301
        %3439 = vmatmul.mubr.f32.gmra.mxu0 %v3122
        %v3440 = vpop.f32.mrf.mxu0
        %v3441 = vadd.f32 %v3281, %v3440
        %v3442 = vpop.f32.mrf.mxu0
        %v3443 = vadd.f32 %v3285, %v3442
        %3444 = vdwg.mxu0
        %3445 = vmatprep.subr.mxu0 %v3219
        %3446 = vmatpush1.msra.mxu0 %v3218
        %3447 = vmatprep.subr.mxu0 %v3213
        %3448 = vmatpush1.msra.mxu0 %v3212
        %3449 = vmatprep.subr.mxu0 %v3207
        %3450 = vmatpush1.msra.mxu0 %v3206
        %3451 = vmatprep.subr.mxu0 %v3201
        %3452 = vmatpush1.msra.mxu0 %v3200
        %3453 = vmatprep.subr.mxu0 %v3195
        %3454 = vmatpush1.msra.mxu0 %v3194
        %3455 = vmatprep.subr.mxu0 %v3189
        %3456 = vmatpush1.msra.mxu0 %v3188
        %3457 = vmatprep.subr.mxu0 %v3183
        %3458 = vmatpush1.msra.mxu0 %v3182
        %3459 = vmatprep.subr.mxu0 %v3177
        %3460 = vmatpush1.msra.mxu0 %v3176
        %3461 = vmatprep.subr.mxu0 %v3171
        %3462 = vmatpush1.msra.mxu0 %v3170
        %3463 = vmatprep.subr.mxu0 %v3165
        %3464 = vmatpush1.msra.mxu0 %v3164
        %3465 = vmatprep.subr.mxu0 %v3159
        %3466 = vmatpush1.msra.mxu0 %v3158
        %3467 = vmatprep.subr.mxu0 %v3153
        %3468 = vmatpush1.msra.mxu0 %v3152
        %3469 = vmatprep.subr.mxu0 %v3147
        %3470 = vmatpush1.msra.mxu0 %v3146
        %3471 = vmatprep.subr.mxu0 %v3141
        %3472 = vmatpush1.msra.mxu0 %v3140
        %3473 = vmatprep.subr.mxu0 %v3135
        %3474 = vmatpush1.msra.mxu0 %v3134
        %3475 = vmatprep.subr.mxu0 %v3129
        %3476 = vmatpush1.msra.mxu0 %v3128
        %3477 = vmatprep.subr.mxu0 0.0
        %3478 = vmatpush2.msra.mxu0 0.0
        %3479 = vmatprep.subr.mxu0 0.0
        %3480 = vmatpush2.msra.mxu0 0.0
        %3481 = vmatprep.subr.mxu0 0.0
        %3482 = vmatpush2.msra.mxu0 0.0
        %3483 = vmatprep.subr.mxu0 0.0
        %3484 = vmatpush2.msra.mxu0 0.0
        %3485 = vmatprep.subr.mxu0 0.0
        %3486 = vmatpush2.msra.mxu0 0.0
        %3487 = vmatprep.subr.mxu0 0.0
        %3488 = vmatpush2.msra.mxu0 0.0
        %3489 = vmatprep.subr.mxu0 0.0
        %3490 = vmatpush2.msra.mxu0 0.0
        %3491 = vmatprep.subr.mxu0 0.0
        %3492 = vmatpush2.msra.mxu0 0.0
        %3493 = vmatprep.subr.mxu0 %v3267
        %3494 = vmatpush2.msra.mxu0 %v3266
        %3495 = vmatprep.subr.mxu0 %v3261
        %3496 = vmatpush2.msra.mxu0 %v3260
        %3497 = vmatprep.subr.mxu0 %v3255
        %3498 = vmatpush2.msra.mxu0 %v3254
        %3499 = vmatprep.subr.mxu0 %v3249
        %3500 = vmatpush2.msra.mxu0 %v3248
        %3501 = vmatprep.subr.mxu0 %v3243
        %3502 = vmatpush2.msra.mxu0 %v3242
        %3503 = vmatprep.subr.mxu0 %v3237
        %3504 = vmatpush2.msra.mxu0 %v3236
        %3505 = vmatprep.subr.mxu0 %v3231
        %3506 = vmatpush2.msra.mxu0 %v3230
        %3507 = vmatprep.subr.mxu0 %v3225
        %3508 = vmatpush2.msra.mxu0 %v3224
        %3509 = vmatprep.mubr.f32.mxu0 %v3301
        %3510 = vmatmul.mubr.f32.gmra.mxu0 %v3122
        %v3511 = vpop.f32.mrf.mxu0
        %v3512 = vadd.f32 %v3289, %v3511
        %v3513 = vpop.f32.mrf.mxu0
        %v3514 = vadd.f32 %v3293, %v3513
        %3515 = vdwg.mxu0
        %v3516 = vmax.f32 %v3370, 0.0
        %v3517 = vmax.f32 %v3372, 0.0
        %v3518 = vmax.f32 %v3441, 0.0
        %v3519 = vmax.f32 %v3443, 0.0
        %v3520 = vmax.f32 %v3512, 0.0
        %v3521 = vmax.f32 %v3514, 0.0
        %v3522 = vld [vmem:[%s11] sm:$0xff]
        %v3523 = vld [vmem:[%s11 + $0x8] sm:$0xff]
        %v3524 = vld [vmem:[%s11 + $0x10] sm:$0xff]
        %v3525 = vld [vmem:[%s11 + $0x18] sm:$0xff]
        %v3526 = vld [vmem:[%s11 + $0x20] sm:$0xff]
        %v3527 = vld [vmem:[%s11 + $0x28] sm:$0xff]
        %v3528 = vld [vmem:[%s11 + $0x30] sm:$0xff]
        %v3529 = vld [vmem:[%s11 + $0x38] sm:$0xff]
        %v3530 = vld [vmem:[%s11 + $0x40] sm:$0xff]
        %v3531 = vld [vmem:[%s11 + $0x48] sm:$0xff]
        %v3532 = vld [vmem:[%s11 + $0x50] sm:$0xff]
        %v3533 = vld [vmem:[%s11 + $0x58] sm:$0xff]
        %v3534 = vld [vmem:[%s11 + $0x60] sm:$0xff]
        %v3535 = vld [vmem:[%s11 + $0x68] sm:$0xff]
        %v3536 = vld [vmem:[%s11 + $0x70] sm:$0xff]
        %v3537 = vld [vmem:[%s11 + $0x78] sm:$0xff]
        %v3538 = vld [vmem:[%s11 + $0x80] sm:$0xff]
        %v3539 = vld [vmem:[%s11 + $0x88] sm:$0xff]
        %v3540 = vld [vmem:[%s11 + $0x90] sm:$0xff]
        %v3541 = vld [vmem:[%s11 + $0x98] sm:$0xff]
        %v3542 = vld [vmem:[%s11 + $0xa0] sm:$0xff]
        %v3543 = vld [vmem:[%s11 + $0xa8] sm:$0xff]
        %v3544 = vld [vmem:[%s11 + $0xb0] sm:$0xff]
        %v3545 = vld [vmem:[%s11 + $0xb8] sm:$0xff]
        %v3546 = vld [vmem:[%s11 + $0xc0] sm:$0xff]
        %v3547 = vld [vmem:[%s11 + $0xc8] sm:$0xff]
        %v3548 = vld [vmem:[%s11 + $0xd0] sm:$0xff]
        %v3549 = vld [vmem:[%s11 + $0xd8] sm:$0xff]
        %v3550 = vld [vmem:[%s11 + $0xe0] sm:$0xff]
        %v3551 = vld [vmem:[%s11 + $0xe8] sm:$0xff]
        %v3552 = vld [vmem:[%s11 + $0xf0] sm:$0xff]
        %v3553 = vld [vmem:[%s11 + $0xf8] sm:$0xff]
        %v3554 = vld [vmem:[%s11 + $0x100] sm:$0xff]
        %v3555 = vld [vmem:[%s11 + $0x108] sm:$0xff]
        %v3556 = vld [vmem:[%s11 + $0x110] sm:$0xff]
        %v3557 = vld [vmem:[%s11 + $0x118] sm:$0xff]
        %v3558 = vld [vmem:[%s11 + $0x120] sm:$0xff]
        %v3559 = vld [vmem:[%s11 + $0x128] sm:$0xff]
        %v3560 = vld [vmem:[%s11 + $0x130] sm:$0xff]
        %v3561 = vld [vmem:[%s11 + $0x138] sm:$0xff]
        %v3562 = vld [vmem:[%s11 + $0x140] sm:$0xff]
        %v3563 = vld [vmem:[%s11 + $0x148] sm:$0xff]
        %v3564 = vld [vmem:[%s11 + $0x150] sm:$0xff]
        %v3565 = vld [vmem:[%s11 + $0x158] sm:$0xff]
        %v3566 = vld [vmem:[%s11 + $0x160] sm:$0xff]
        %v3567 = vld [vmem:[%s11 + $0x168] sm:$0xff]
        %v3568 = vld [vmem:[%s11 + $0x170] sm:$0xff]
        %v3569 = vld [vmem:[%s11 + $0x178] sm:$0xff]
        %v3570 = vld [vmem:[%s11 + $0x180] sm:$0xff]
        %v3571 = vld [vmem:[%s11 + $0x188] sm:$0xff]
        %v3572 = vld [vmem:[%s11 + $0x190] sm:$0xff]
        %v3573 = vld [vmem:[%s11 + $0x198] sm:$0xff]
        %v3574 = vld [vmem:[%s11 + $0x1a0] sm:$0xff]
        %v3575 = vld [vmem:[%s11 + $0x1a8] sm:$0xff]
        %v3576 = vld [vmem:[%s11 + $0x1b0] sm:$0xff]
        %v3577 = vld [vmem:[%s11 + $0x1b8] sm:$0xff]
        %v3578 = vld [vmem:[%s11 + $0x1c0] sm:$0xff]
        %v3579 = vld [vmem:[%s11 + $0x1c8] sm:$0xff]
        %v3580 = vld [vmem:[%s11 + $0x1d0] sm:$0xff]
        %v3581 = vld [vmem:[%s11 + $0x1d8] sm:$0xff]
        %v3582 = vld [vmem:[%s11 + $0x1e0] sm:$0xff]
        %v3583 = vld [vmem:[%s11 + $0x1e8] sm:$0xff]
        %v3584 = vld [vmem:[%s11 + $0x1f0] sm:$0xff]
        %v3585 = vld [vmem:[%s11 + $0x1f8] sm:$0xff]
        %v3586 = vld [vmem:[%s11 + $0x200] sm:$0xff]
        %v3587 = vld [vmem:[%s11 + $0x208] sm:$0xff]
        %v3588 = vld [vmem:[%s11 + $0x210] sm:$0xff]
        %v3589 = vld [vmem:[%s11 + $0x218] sm:$0xff]
        %v3590 = vld [vmem:[%s11 + $0x220] sm:$0xff]
        %v3591 = vld [vmem:[%s11 + $0x228] sm:$0xff]
        %v3592 = vld [vmem:[%s11 + $0x230] sm:$0xff]
        %v3593 = vld [vmem:[%s11 + $0x238] sm:$0xff]
        %v3594 = vld [vmem:[%s11 + $0x240] sm:$0xff]
        %v3595 = vld [vmem:[%s11 + $0x248] sm:$0xff]
        %v3596 = vld [vmem:[%s11 + $0x250] sm:$0xff]
        %v3597 = vld [vmem:[%s11 + $0x258] sm:$0xff]
        %v3598 = vld [vmem:[%s11 + $0x260] sm:$0xff]
        %v3599 = vld [vmem:[%s11 + $0x268] sm:$0xff]
        %v3600 = vld [vmem:[%s11 + $0x270] sm:$0xff]
        %v3601 = vld [vmem:[%s11 + $0x278] sm:$0xff]
        %v3602 = vld [vmem:[%s11 + $0x280] sm:$0xff]
        %v3603 = vld [vmem:[%s11 + $0x288] sm:$0xff]
        %v3604 = vld [vmem:[%s11 + $0x290] sm:$0xff]
        %v3605 = vld [vmem:[%s11 + $0x298] sm:$0xff]
        %v3606 = vld [vmem:[%s11 + $0x2a0] sm:$0xff]
        %v3607 = vld [vmem:[%s11 + $0x2a8] sm:$0xff]
        %v3608 = vld [vmem:[%s11 + $0x2b0] sm:$0xff]
        %v3609 = vld [vmem:[%s11 + $0x2b8] sm:$0xff]
        %v3610 = vld [vmem:[%s11 + $0x2c0] sm:$0xff]
        %v3611 = vld [vmem:[%s11 + $0x2c8] sm:$0xff]
        %v3612 = vld [vmem:[%s11 + $0x2d0] sm:$0xff]
        %v3613 = vld [vmem:[%s11 + $0x2d8] sm:$0xff]
        %v3614 = vld [vmem:[%s11 + $0x2e0] sm:$0xff]
        %v3615 = vld [vmem:[%s11 + $0x2e8] sm:$0xff]
        %v3616 = vld [vmem:[%s11 + $0x2f0] sm:$0xff]
        %v3617 = vld [vmem:[%s11 + $0x2f8] sm:$0xff]
        %v3618 = vld [vmem:[%s11 + $0x300] sm:$0xff]
        %v3619 = vld [vmem:[%s11 + $0x308] sm:$0xff]
        %v3620 = vld [vmem:[%s11 + $0x310] sm:$0xff]
        %v3621 = vld [vmem:[%s11 + $0x318] sm:$0xff]
        %v3622 = vld [vmem:[%s11 + $0x320] sm:$0xff]
        %v3623 = vld [vmem:[%s11 + $0x328] sm:$0xff]
        %v3624 = vld [vmem:[%s11 + $0x330] sm:$0xff]
        %v3625 = vld [vmem:[%s11 + $0x338] sm:$0xff]
        %v3626 = vld [vmem:[%s11 + $0x340] sm:$0xff]
        %v3627 = vld [vmem:[%s11 + $0x348] sm:$0xff]
        %v3628 = vld [vmem:[%s11 + $0x350] sm:$0xff]
        %v3629 = vld [vmem:[%s11 + $0x358] sm:$0xff]
        %v3630 = vld [vmem:[%s11 + $0x360] sm:$0xff]
        %v3631 = vld [vmem:[%s11 + $0x368] sm:$0xff]
        %v3632 = vld [vmem:[%s11 + $0x370] sm:$0xff]
        %v3633 = vld [vmem:[%s11 + $0x378] sm:$0xff]
        %v3634 = vld [vmem:[%s11 + $0x380] sm:$0xff]
        %v3635 = vld [vmem:[%s11 + $0x388] sm:$0xff]
        %v3636 = vld [vmem:[%s11 + $0x390] sm:$0xff]
        %v3637 = vld [vmem:[%s11 + $0x398] sm:$0xff]
        %v3638 = vld [vmem:[%s11 + $0x3a0] sm:$0xff]
        %v3639 = vld [vmem:[%s11 + $0x3a8] sm:$0xff]
        %v3640 = vld [vmem:[%s11 + $0x3b0] sm:$0xff]
        %v3641 = vld [vmem:[%s11 + $0x3b8] sm:$0xff]
        %v3642 = vld [vmem:[%s11 + $0x3c0] sm:$0xff]
        %v3643 = vld [vmem:[%s11 + $0x3c8] sm:$0xff]
        %v3644 = vld [vmem:[%s11 + $0x3d0] sm:$0xff]
        %v3645 = vld [vmem:[%s11 + $0x3d8] sm:$0xff]
        %v3646 = vld [vmem:[%s11 + $0x3e0] sm:$0xff]
        %v3647 = vld [vmem:[%s11 + $0x3e8] sm:$0xff]
        %v3648 = vld [vmem:[%s11 + $0x3f0] sm:$0xff]
        %v3649 = vld [vmem:[%s11 + $0x3f8] sm:$0xff]
        %v3650 = vld [vmem:[%s11 + $0x400] sm:$0xff]
        %v3651 = vld [vmem:[%s11 + $0x408] sm:$0xff]
        %v3652 = vld [vmem:[%s11 + $0x410] sm:$0xff]
        %v3653 = vld [vmem:[%s11 + $0x418] sm:$0xff]
        %v3654 = vld [vmem:[%s11 + $0x420] sm:$0xff]
        %v3655 = vld [vmem:[%s11 + $0x428] sm:$0xff]
        %v3656 = vld [vmem:[%s11 + $0x430] sm:$0xff]
        %v3657 = vld [vmem:[%s11 + $0x438] sm:$0xff]
        %v3658 = vld [vmem:[%s11 + $0x440] sm:$0xff]
        %v3659 = vld [vmem:[%s11 + $0x448] sm:$0xff]
        %v3660 = vld [vmem:[%s11 + $0x450] sm:$0xff]
        %v3661 = vld [vmem:[%s11 + $0x458] sm:$0xff]
        %v3662 = vld [vmem:[%s11 + $0x460] sm:$0xff]
        %v3663 = vld [vmem:[%s11 + $0x468] sm:$0xff]
        %v3664 = vld [vmem:[%s11 + $0x470] sm:$0xff]
        %v3665 = vld [vmem:[%s11 + $0x478] sm:$0xff]
        %v3666 = vld [vmem:[%s11 + $0x480] sm:$0xff]
        %v3667 = vld [vmem:[%s11 + $0x488] sm:$0xff]
        %v3668 = vld [vmem:[%s11 + $0x490] sm:$0xff]
        %v3669 = vld [vmem:[%s11 + $0x498] sm:$0xff]
        %v3670 = vld [vmem:[%s11 + $0x4a0] sm:$0xff]
        %v3671 = vld [vmem:[%s11 + $0x4a8] sm:$0xff]
        %v3672 = vld [vmem:[%s11 + $0x4b0] sm:$0xff]
        %v3673 = vld [vmem:[%s11 + $0x4b8] sm:$0xff]
        %v3674 = vld [vmem:[%s11 + $0x4c0] sm:$0xff]
        %v3675 = vld [vmem:[%s11 + $0x4c8] sm:$0xff]
        %v3676 = vld [vmem:[%s11 + $0x4d0] sm:$0xff]
        %v3677 = vld [vmem:[%s11 + $0x4d8] sm:$0xff]
        %v3678 = vld [vmem:[%s11 + $0x4e0] sm:$0xff]
        %v3679 = vld [vmem:[%s11 + $0x4e8] sm:$0xff]
        %v3680 = vld [vmem:[%s11 + $0x4f0] sm:$0xff]
        %v3681 = vld [vmem:[%s11 + $0x4f8] sm:$0xff]
        %v3682 = vld [vmem:[%s11 + $0x500] sm:$0xff]
        %v3683 = vld [vmem:[%s11 + $0x508] sm:$0xff]
        %v3684 = vld [vmem:[%s11 + $0x510] sm:$0xff]
        %v3685 = vld [vmem:[%s11 + $0x518] sm:$0xff]
        %v3686 = vld [vmem:[%s11 + $0x520] sm:$0xff]
        %v3687 = vld [vmem:[%s11 + $0x528] sm:$0xff]
        %v3688 = vld [vmem:[%s11 + $0x530] sm:$0xff]
        %v3689 = vld [vmem:[%s11 + $0x538] sm:$0xff]
        %v3690 = vld [vmem:[%s11 + $0x540] sm:$0xff]
        %v3691 = vld [vmem:[%s11 + $0x548] sm:$0xff]
        %v3692 = vld [vmem:[%s11 + $0x550] sm:$0xff]
        %v3693 = vld [vmem:[%s11 + $0x558] sm:$0xff]
        %v3694 = vld [vmem:[%s11 + $0x560] sm:$0xff]
        %v3695 = vld [vmem:[%s11 + $0x568] sm:$0xff]
        %v3696 = vld [vmem:[%s11 + $0x570] sm:$0xff]
        %v3697 = vld [vmem:[%s11 + $0x578] sm:$0xff]
        %v3698 = vld [vmem:[%s11 + $0x580] sm:$0xff]
        %v3699 = vld [vmem:[%s11 + $0x588] sm:$0xff]
        %v3700 = vld [vmem:[%s11 + $0x590] sm:$0xff]
        %v3701 = vld [vmem:[%s11 + $0x598] sm:$0xff]
        %v3702 = vld [vmem:[%s11 + $0x5a0] sm:$0xff]
        %v3703 = vld [vmem:[%s11 + $0x5a8] sm:$0xff]
        %v3704 = vld [vmem:[%s11 + $0x5b0] sm:$0xff]
        %v3705 = vld [vmem:[%s11 + $0x5b8] sm:$0xff]
        %v3706 = vld [vmem:[%s11 + $0x5c0] sm:$0xff]
        %v3707 = vld [vmem:[%s11 + $0x5c8] sm:$0xff]
        %v3708 = vld [vmem:[%s11 + $0x5d0] sm:$0xff]
        %v3709 = vld [vmem:[%s11 + $0x5d8] sm:$0xff]
        %v3710 = vld [vmem:[%s11 + $0x5e0] sm:$0xff]
        %v3711 = vld [vmem:[%s11 + $0x5e8] sm:$0xff]
        %v3712 = vld [vmem:[%s11 + $0x5f0] sm:$0xff]
        %v3713 = vld [vmem:[%s11 + $0x5f8] sm:$0xff]
        %v3714 = vld [vmem:[%s12] sm:$0x3]
        %v3716 = vlaneseq
        %v3717 = vshrl.u32 %v3716, 7
        %v3718 = vsub.s32 0, %v3717
        %v3719 = vrot.slane %v3714, %v3718
        %v3720 = vlaneseq
        %v3721 = vshrl.u32 %v3720, 7
        %v3722 = vsub.s32 1, %v3721
        %v3723 = vrot.slane %v3714, %v3722
        %3726 = vmatprep.subr.mxu0 %v3553
        %3727 = vmatpush1.msra.mxu0 %v3552
        %3728 = vmatprep.subr.mxu0 %v3551
        %3729 = vmatpush1.msra.mxu0 %v3550
        %3730 = vmatprep.subr.mxu0 %v3549
        %3731 = vmatpush1.msra.mxu0 %v3548
        %3732 = vmatprep.subr.mxu0 %v3547
        %3733 = vmatpush1.msra.mxu0 %v3546
        %3734 = vmatprep.subr.mxu0 %v3545
        %3735 = vmatpush1.msra.mxu0 %v3544
        %3736 = vmatprep.subr.mxu0 %v3543
        %3737 = vmatpush1.msra.mxu0 %v3542
        %3738 = vmatprep.subr.mxu0 %v3541
        %3739 = vmatpush1.msra.mxu0 %v3540
        %3740 = vmatprep.subr.mxu0 %v3539
        %3741 = vmatpush1.msra.mxu0 %v3538
        %3742 = vmatprep.subr.mxu0 %v3537
        %3743 = vmatpush1.msra.mxu0 %v3536
        %3744 = vmatprep.subr.mxu0 %v3535
        %3745 = vmatpush1.msra.mxu0 %v3534
        %3746 = vmatprep.subr.mxu0 %v3533
        %3747 = vmatpush1.msra.mxu0 %v3532
        %3748 = vmatprep.subr.mxu0 %v3531
        %3749 = vmatpush1.msra.mxu0 %v3530
        %3750 = vmatprep.subr.mxu0 %v3529
        %3751 = vmatpush1.msra.mxu0 %v3528
        %3752 = vmatprep.subr.mxu0 %v3527
        %3753 = vmatpush1.msra.mxu0 %v3526
        %3754 = vmatprep.subr.mxu0 %v3525
        %3755 = vmatpush1.msra.mxu0 %v3524
        %3756 = vmatprep.subr.mxu0 %v3523
        %3757 = vmatpush1.msra.mxu0 %v3522
        %3758 = vmatprep.subr.mxu0 %v3585
        %3759 = vmatpush2.msra.mxu0 %v3584
        %3760 = vmatprep.subr.mxu0 %v3583
        %3761 = vmatpush2.msra.mxu0 %v3582
        %3762 = vmatprep.subr.mxu0 %v3581
        %3763 = vmatpush2.msra.mxu0 %v3580
        %3764 = vmatprep.subr.mxu0 %v3579
        %3765 = vmatpush2.msra.mxu0 %v3578
        %3766 = vmatprep.subr.mxu0 %v3577
        %3767 = vmatpush2.msra.mxu0 %v3576
        %3768 = vmatprep.subr.mxu0 %v3575
        %3769 = vmatpush2.msra.mxu0 %v3574
        %3770 = vmatprep.subr.mxu0 %v3573
        %3771 = vmatpush2.msra.mxu0 %v3572
        %3772 = vmatprep.subr.mxu0 %v3571
        %3773 = vmatpush2.msra.mxu0 %v3570
        %3774 = vmatprep.subr.mxu0 %v3569
        %3775 = vmatpush2.msra.mxu0 %v3568
        %3776 = vmatprep.subr.mxu0 %v3567
        %3777 = vmatpush2.msra.mxu0 %v3566
        %3778 = vmatprep.subr.mxu0 %v3565
        %3779 = vmatpush2.msra.mxu0 %v3564
        %3780 = vmatprep.subr.mxu0 %v3563
        %3781 = vmatpush2.msra.mxu0 %v3562
        %3782 = vmatprep.subr.mxu0 %v3561
        %3783 = vmatpush2.msra.mxu0 %v3560
        %3784 = vmatprep.subr.mxu0 %v3559
        %3785 = vmatpush2.msra.mxu0 %v3558
        %3786 = vmatprep.subr.mxu0 %v3557
        %3787 = vmatpush2.msra.mxu0 %v3556
        %3788 = vmatprep.subr.mxu0 %v3555
        %3789 = vmatpush2.msra.mxu0 %v3554
        %3790 = vmatprep.mubr.f32.mxu0 %v3517
        %3791 = vmatmul.mubr.f32.gmra.mxu0 %v3516
        %v3792 = vpop.f32.mrf.mxu0
        %v3793 = vadd.f32 %v3719, %v3792
        %v3794 = vpop.f32.mrf.mxu0
        %v3795 = vadd.f32 %v3723, %v3794
        %3796 = vdwg.mxu0
        %3797 = vmatprep.subr.mxu0 %v3617
        %3798 = vmatpush1.msra.mxu0 %v3616
        %3799 = vmatprep.subr.mxu0 %v3615
        %3800 = vmatpush1.msra.mxu0 %v3614
        %3801 = vmatprep.subr.mxu0 %v3613
        %3802 = vmatpush1.msra.mxu0 %v3612
        %3803 = vmatprep.subr.mxu0 %v3611
        %3804 = vmatpush1.msra.mxu0 %v3610
        %3805 = vmatprep.subr.mxu0 %v3609
        %3806 = vmatpush1.msra.mxu0 %v3608
        %3807 = vmatprep.subr.mxu0 %v3607
        %3808 = vmatpush1.msra.mxu0 %v3606
        %3809 = vmatprep.subr.mxu0 %v3605
        %3810 = vmatpush1.msra.mxu0 %v3604
        %3811 = vmatprep.subr.mxu0 %v3603
        %3812 = vmatpush1.msra.mxu0 %v3602
        %3813 = vmatprep.subr.mxu0 %v3601
        %3814 = vmatpush1.msra.mxu0 %v3600
        %3815 = vmatprep.subr.mxu0 %v3599
        %3816 = vmatpush1.msra.mxu0 %v3598
        %3817 = vmatprep.subr.mxu0 %v3597
        %3818 = vmatpush1.msra.mxu0 %v3596
        %3819 = vmatprep.subr.mxu0 %v3595
        %3820 = vmatpush1.msra.mxu0 %v3594
        %3821 = vmatprep.subr.mxu0 %v3593
        %3822 = vmatpush1.msra.mxu0 %v3592
        %3823 = vmatprep.subr.mxu0 %v3591
        %3824 = vmatpush1.msra.mxu0 %v3590
        %3825 = vmatprep.subr.mxu0 %v3589
        %3826 = vmatpush1.msra.mxu0 %v3588
        %3827 = vmatprep.subr.mxu0 %v3587
        %3828 = vmatpush1.msra.mxu0 %v3586
        %3829 = vmatprep.subr.mxu0 %v3649
        %3830 = vmatpush2.msra.mxu0 %v3648
        %3831 = vmatprep.subr.mxu0 %v3647
        %3832 = vmatpush2.msra.mxu0 %v3646
        %3833 = vmatprep.subr.mxu0 %v3645
        %3834 = vmatpush2.msra.mxu0 %v3644
        %3835 = vmatprep.subr.mxu0 %v3643
        %3836 = vmatpush2.msra.mxu0 %v3642
        %3837 = vmatprep.subr.mxu0 %v3641
        %3838 = vmatpush2.msra.mxu0 %v3640
        %3839 = vmatprep.subr.mxu0 %v3639
        %3840 = vmatpush2.msra.mxu0 %v3638
        %3841 = vmatprep.subr.mxu0 %v3637
        %3842 = vmatpush2.msra.mxu0 %v3636
        %3843 = vmatprep.subr.mxu0 %v3635
        %3844 = vmatpush2.msra.mxu0 %v3634
        %3845 = vmatprep.subr.mxu0 %v3633
        %3846 = vmatpush2.msra.mxu0 %v3632
        %3847 = vmatprep.subr.mxu0 %v3631
        %3848 = vmatpush2.msra.mxu0 %v3630
        %3849 = vmatprep.subr.mxu0 %v3629
        %3850 = vmatpush2.msra.mxu0 %v3628
        %3851 = vmatprep.subr.mxu0 %v3627
        %3852 = vmatpush2.msra.mxu0 %v3626
        %3853 = vmatprep.subr.mxu0 %v3625
        %3854 = vmatpush2.msra.mxu0 %v3624
        %3855 = vmatprep.subr.mxu0 %v3623
        %3856 = vmatpush2.msra.mxu0 %v3622
        %3857 = vmatprep.subr.mxu0 %v3621
        %3858 = vmatpush2.msra.mxu0 %v3620
        %3859 = vmatprep.subr.mxu0 %v3619
        %3860 = vmatpush2.msra.mxu0 %v3618
        %3861 = vmatprep.mubr.f32.mxu0 %v3519
        %3862 = vmatmul.mubr.f32.gmra.mxu0 %v3518
        %v3863 = vpop.f32.mrf.mxu0
        %v3864 = vadd.f32 %v3793, %v3863
        %v3865 = vpop.f32.mrf.mxu0
        %v3866 = vadd.f32 %v3795, %v3865
        %3867 = vdwg.mxu0
        %3868 = vmatprep.subr.mxu0 %v3681
        %3869 = vmatpush1.msra.mxu0 %v3680
        %3870 = vmatprep.subr.mxu0 %v3679
        %3871 = vmatpush1.msra.mxu0 %v3678
        %3872 = vmatprep.subr.mxu0 %v3677
        %3873 = vmatpush1.msra.mxu0 %v3676
        %3874 = vmatprep.subr.mxu0 %v3675
        %3875 = vmatpush1.msra.mxu0 %v3674
        %3876 = vmatprep.subr.mxu0 %v3673
        %3877 = vmatpush1.msra.mxu0 %v3672
        %3878 = vmatprep.subr.mxu0 %v3671
        %3879 = vmatpush1.msra.mxu0 %v3670
        %3880 = vmatprep.subr.mxu0 %v3669
        %3881 = vmatpush1.msra.mxu0 %v3668
        %3882 = vmatprep.subr.mxu0 %v3667
        %3883 = vmatpush1.msra.mxu0 %v3666
        %3884 = vmatprep.subr.mxu0 %v3665
        %3885 = vmatpush1.msra.mxu0 %v3664
        %3886 = vmatprep.subr.mxu0 %v3663
        %3887 = vmatpush1.msra.mxu0 %v3662
        %3888 = vmatprep.subr.mxu0 %v3661
        %3889 = vmatpush1.msra.mxu0 %v3660
        %3890 = vmatprep.subr.mxu0 %v3659
        %3891 = vmatpush1.msra.mxu0 %v3658
        %3892 = vmatprep.subr.mxu0 %v3657
        %3893 = vmatpush1.msra.mxu0 %v3656
        %3894 = vmatprep.subr.mxu0 %v3655
        %3895 = vmatpush1.msra.mxu0 %v3654
        %3896 = vmatprep.subr.mxu0 %v3653
        %3897 = vmatpush1.msra.mxu0 %v3652
        %3898 = vmatprep.subr.mxu0 %v3651
        %3899 = vmatpush1.msra.mxu0 %v3650
        %3900 = vmatprep.subr.mxu0 %v3713
        %3901 = vmatpush2.msra.mxu0 %v3712
        %3902 = vmatprep.subr.mxu0 %v3711
        %3903 = vmatpush2.msra.mxu0 %v3710
        %3904 = vmatprep.subr.mxu0 %v3709
        %3905 = vmatpush2.msra.mxu0 %v3708
        %3906 = vmatprep.subr.mxu0 %v3707
        %3907 = vmatpush2.msra.mxu0 %v3706
        %3908 = vmatprep.subr.mxu0 %v3705
        %3909 = vmatpush2.msra.mxu0 %v3704
        %3910 = vmatprep.subr.mxu0 %v3703
        %3911 = vmatpush2.msra.mxu0 %v3702
        %3912 = vmatprep.subr.mxu0 %v3701
        %3913 = vmatpush2.msra.mxu0 %v3700
        %3914 = vmatprep.subr.mxu0 %v3699
        %3915 = vmatpush2.msra.mxu0 %v3698
        %3916 = vmatprep.subr.mxu0 %v3697
        %3917 = vmatpush2.msra.mxu0 %v3696
        %3918 = vmatprep.subr.mxu0 %v3695
        %3919 = vmatpush2.msra.mxu0 %v3694
        %3920 = vmatprep.subr.mxu0 %v3693
        %3921 = vmatpush2.msra.mxu0 %v3692
        %3922 = vmatprep.subr.mxu0 %v3691
        %3923 = vmatpush2.msra.mxu0 %v3690
        %3924 = vmatprep.subr.mxu0 %v3689
        %3925 = vmatpush2.msra.mxu0 %v3688
        %3926 = vmatprep.subr.mxu0 %v3687
        %3927 = vmatpush2.msra.mxu0 %v3686
        %3928 = vmatprep.subr.mxu0 %v3685
        %3929 = vmatpush2.msra.mxu0 %v3684
        %3930 = vmatprep.subr.mxu0 %v3683
        %3931 = vmatpush2.msra.mxu0 %v3682
        %3932 = vmatprep.mubr.f32.mxu0 %v3521
        %3933 = vmatmul.mubr.f32.gmra.mxu0 %v3520
        %v3934 = vpop.f32.mrf.mxu0
        %v3935 = vadd.f32 %v3864, %v3934
        %v3936 = vpop.f32.mrf.mxu0
        %v3937 = vadd.f32 %v3866, %v3936
        %3938 = vdwg.mxu0
        %v3939 = vadd.f32 %v3076, %v3935
        %v3940 = vadd.f32 %v3077, %v3937
        %3941 = vst [vmem:[%s433] sm:$0xff] %v3939
        %3942 = vst.msk [vmem:[%s433 + $0x8] sm:$0xff] %vm443, %v3940
        %s3943 = sand.u32 %s313, 1
        %s3944 = scalar_lea.sflag [#allocation3], %s3943
        %s3945 = sand.u32 %s313, 1
        %s3946 = smul.addr %s3945, 16
        %s3947 = scalar_lea.vmem [#allocation2], %s3946
        // Predicated region
        $region73: #{transformer_block.1} parent=71 // pred_check
          %p3948 = pneg %p323
        $region74: #{transformer_block.1} parent=71 // pred_check_branch
          %3950 = sbr.rel (%p3948) target = $region76
        $region75: #{transformer_block.1} parent=71 // pred_region
          %s3952 = ssub.s32 256, 256
          %3953 = vsyncadd %s3944, %s3952
          %s3954 = smul.addr %s27, 2
          %s3955 = smul.addr %s3954, 128
          %s3956 = scalar_lea.hbm %s13, %s3955
          %s3958 = sshll.u32 %s3947, 4
          %s3959 = int_to_ptr.vmem [resolvable:$true] %s3958
          %3961 = dma.vmem_to_hbm [thread:$0]  %s3959, 256, %s3956, %s3944
        $region76: #{transformer_block.1} parent=71 // pred_fallthru
          _
      $region72: #{transformer_block.1} parent=5 // pred_fallthru
        _
      %p3962 = scmp.le.s32.totalorder 2, %s22
      // Predicated region
      $region77: #{transformer_block.1} parent=5 // pred_check
        %p3963 = pneg %p3962
      $region78: #{transformer_block.1} parent=5 // pred_check_branch
        %3965 = sbr.rel (%p3963) target = $region80
      $region79: #{transformer_block.1} parent=5 // pred_region
        %s3966 = ssub.s32 %s22, 2
        // Predicated region
        $region81: #{transformer_block.1} parent=79 // pred_check
          %p3967 = pneg %p329
        $region82: #{transformer_block.1} parent=79 // pred_check_branch
          %3969 = sbr.rel (%p3967) target = $region84
        $region83: #{transformer_block.1} parent=79 // pred_region
          %s3970 = sand.u32 %s314, 1
          %s3971 = scalar_lea.sflag [#allocation3], %s3970
          %s3972 = sand.u32 %s314, 1
          %s3973 = smul.addr %s3972, 16
          %s3974 = scalar_lea.vmem [#allocation2], %s3973
          %3975 = dma.done %s3971, 256
        $region84: #{transformer_block.1} parent=79 // pred_fallthru
          _
      $region80: #{transformer_block.1} parent=5 // pred_fallthru
        _
    $region6: #{transformer_block.1} parent=1 // loop_footer
      %s26 = sadd.s32 1, %s22
    $region7: #{transformer_block.1} parent=1 // loop_footer_branch
      %21 = sbr.rel target = $region3
    $region8: #{transformer_block.1} parent=1 // loop_exit
      _
    %3976 = vsyncpa [#allocation3], 1
    %s3977 = scalar_lea.sflag [#allocation3], 1
    %3978 = vsyncpa %s3977, 1

</llo_original>
